<compile_context>
chip_gen: v7x
topology: tpu7x:2x2x1
jax: 0.10.0
libtpu: 0.0.40
codegen_flags: <defaults>
</compile_context>

<pallas_src>
import math

import jax
import jax.numpy as jnp
from jax.experimental import pallas as pl
from jax.experimental.pallas import tpu as pltpu

NUM_STOCKS = 4
NUM_FEATURES = 4
HIDDEN = 32
NUM_LAYERS = 2        # the skewed kernel below hardcodes the 2-layer structure
NUM_HEADS = 4
HEAD_DIM = HIDDEN // NUM_HEADS
SEQ = 8
BATCH = 2
BATCH_PAD = 8         # sublane-padded batch processed by the kernel
OUT_PAD = 128         # lane-padded output width (wrapper slices back to NUM_STOCKS)


def _lstm_attn_kernel(x_ref,
                      wih0_ref, b0_ref,
                      w0cat_ref, whh1_ref, b1_ref,
                      wqkv_ref, bqkv_ref, wo_ref, bo_ref,
                      seg_ref, segT_ref,
                      fc1w_ref, fc1b_ref, fc2w_ref, fc2b_ref,
                      out_ref):
    """Whole forward pass for one (small) padded batch; everything in VMEM/vregs."""
    T, B, D = x_ref.shape
    H = whh1_ref.shape[0]
    G = 4 * H
    nh = seg_ref.shape[1]
    hd = H // nh
    f32 = jnp.float32
    bf16 = jnp.bfloat16

    # LSTM cell with the tanh-only gate trick: i/f/o weight columns & biases were
    # pre-scaled by 0.5 in the wrapper, so sigmoid(z) == 0.5*(1 + tanh(z/2)) comes
    # out of a single full-128-lane tanh (one EUP pass) + cheap VPU affine; the
    # 32-lane gate segments are then extracted from the full-vreg result.
    def cell(z, c):
        t = jnp.tanh(z)                              # (B, 4H) one EUP pass
        i = 0.5 + 0.5 * t[:, 0 * H:1 * H]
        f = 0.5 + 0.5 * t[:, 1 * H:2 * H]
        g = t[:, 2 * H:3 * H]
        o = 0.5 + 0.5 * t[:, 3 * H:4 * H]
        c_new = f * c + i * g
        h_new = o * jnp.tanh(c_new)
        return h_new, c_new

    # Hoisted layer-0 input projection over all T*B rows (off the serial chain, f32).
    x_flat = x_ref[...].reshape(T * B, D)
    xp0 = (jnp.dot(x_flat, wih0_ref[...], preferred_element_type=f32)
           + b0_ref[...]).reshape(T, B, G)

    w0cat = w0cat_ref[...]                           # (H, 8H) bf16: [whh0 | wih1]
    whh1 = whh1_ref[...]                             # (H, 4H) bf16
    b1 = jnp.broadcast_to(b1_ref[...], (B, G))       # hoist broadcast out of the loop

    # ------------------- skewed 2-layer recurrence (T+1 stages) -------------------
    # Step s computes layer 0 at time s and layer 1 at time s-1.  Both consume
    # h0_{s-1}, so one shared bf16 (B,H)@(H,8H) push yields the layer-0 recurrent
    # term (first 4H lanes) and the layer-1 input term (last 4H lanes).
    h0 = jnp.zeros((B, H), f32)
    c0 = jnp.zeros((B, H), f32)
    h1 = jnp.zeros((B, H), f32)
    c1 = jnp.zeros((B, H), f32)
    outs1 = []
    for s in range(T + 1):                           # static unroll (T small)
        h0_prev = h0                                 # = h0_{s-1}
        if s == 0:
            h0, c0 = cell(xp0[0], c0)                # h0_{-1} == 0: no recurrent term
            continue
        z_sh = jnp.dot(h0_prev.astype(bf16), w0cat,
                       preferred_element_type=f32)   # (B, 8H)
        if s < T:                                    # layer 0 @ time s
            h0, c0 = cell(xp0[s] + z_sh[:, :G], c0)
        # layer 1 @ time s-1 (h1 currently holds h1_{s-2}); eval-mode inter-layer
        # dropout is identity.
        z1 = b1 + z_sh[:, G:] + jnp.dot(h1.astype(bf16), whh1,
                                        preferred_element_type=f32)
        h1, c1 = cell(z1, c1)
        outs1.append(h1)                             # register-resident

    seq1 = jnp.stack(outs1, axis=0)                  # (T, B, H) top-layer outputs

    # ---------------- multi-head self attention (last query only) ----------------
    scale = 1.0 / math.sqrt(hd)
    qkv = (jnp.dot(seq1.reshape(T * B, H), wqkv_ref[...], preferred_element_type=f32)
           + bqkv_ref[...]).reshape(T, B, 3 * H)
    q_last = qkv[T - 1, :, 0:H]                      # (B, H)
    k = qkv[:, :, H:2 * H]                           # (T, B, H)
    v = qkv[:, :, 2 * H:3 * H]                       # (T, B, H)

    # per-head scores via a segment-sum matmul: s[t,b,n] = sum_{d in head n} q*k
    prod = (q_last[None, :, :] * k).reshape(T * B, H)
    s_scores = (jnp.dot(prod, seg_ref[...], preferred_element_type=f32) * scale
                ).reshape(T, B, nh)

    # softmax over time (leading axis => plain cross-vreg VPU max/add, no XLU)
    m = jnp.max(s_scores, axis=0, keepdims=True)
    p = jnp.exp(s_scores - m)
    p = p / jnp.sum(p, axis=0, keepdims=True)        # exact normalize (off chain)

    # broadcast head weights across each head's hd lanes via segment matmul, then
    # a weighted sum over time gives the per-head context, already concatenated.
    p_full = jnp.dot(p.reshape(T * B, nh), segT_ref[...],
                     preferred_element_type=f32).reshape(T, B, H)
    ctx = jnp.sum(p_full * v, axis=0)                # (B, H)
    attn_out = jnp.dot(ctx, wo_ref[...], preferred_element_type=f32) + bo_ref[...]

    # --------------- head: dropout (eval identity), fc1, relu, fc2 ---------------
    h_fc = jnp.maximum(
        jnp.dot(attn_out, fc1w_ref[...], preferred_element_type=f32) + fc1b_ref[...],
        0.0)
    # fc2 weights/bias zero-padded to 128 lanes; B padded to 8 sublanes ->
    # full (8,128) unmasked tile store.
    out_ref[...] = jnp.dot(h_fc, fc2w_ref[...], preferred_element_type=f32) + fc2b_ref[...]


def stock_lstm_attention_forward(x, params):
    """Wrapper: reshape / pad / param re-layout (glue only); compute is in the kernel."""
    B, T, S, F = x.shape
    D = S * F
    H = HIDDEN
    nh, hd = NUM_HEADS, HEAD_DIM
    G = 4 * H
    BP = max(BATCH_PAD, ((B + 7) // 8) * 8)

    # time-major activations, batch zero-padded to a full sublane tile: (T, BP, D)
    xr = x.reshape(B, T, D).transpose(1, 0, 2).astype(jnp.float32)
    xr = jnp.pad(xr, ((0, 0), (0, BP - B), (0, 0)))

    # tanh-only gate trick: pre-scale the i/f/o column groups by 0.5
    # (PyTorch gate row order is [i, f, g, o]; transposed -> column chunks [i|f|g|o])
    gate_scale = jnp.concatenate([
        jnp.full((H,), 0.5), jnp.full((H,), 0.5),
        jnp.ones((H,)), jnp.full((H,), 0.5)]).astype(jnp.float32)

    def fuse_lstm(w_ih, w_hh, b_ih, b_hh):
        wih = w_ih.T.astype(jnp.float32) * gate_scale              # (in, 4H)
        whh = w_hh.T.astype(jnp.float32) * gate_scale              # (H, 4H)
        b = ((b_ih + b_hh).astype(jnp.float32) * gate_scale).reshape(1, G)
        return wih, whh, b

    wih0, whh0, b0 = fuse_lstm(params['w_ih_l0'], params['w_hh_l0'],
                               params['b_ih_l0'], params['b_hh_l0'])
    wih1, whh1, b1 = fuse_lstm(params['w_ih_l1'], params['w_hh_l1'],
                               params['b_ih_l1'], params['b_hh_l1'])

    # recurrent-chain weights in bf16 (single-pass MXU); accumulation stays f32
    w0cat = jnp.concatenate([whh0, wih1], axis=1).astype(jnp.bfloat16)   # (H, 8H)
    whh1_b = whh1.astype(jnp.bfloat16)                                   # (H, 4H)

    # fused attention in-projection: columns ordered [q | k | v], heads contiguous
    wqkv = params['in_proj_weight'].T.astype(jnp.float32)                # (H, 3H)
    bqkv = params['in_proj_bias'].reshape(1, 3 * H).astype(jnp.float32)
    wo = params['out_proj_weight'].T.astype(jnp.float32)                 # (H, H)
    bo = params['out_proj_bias'].reshape(1, H).astype(jnp.float32)

    # head-segment matrices: (H, nh) segment-sum and (nh, H) segment-broadcast
    lane = jnp.arange(H)[:, None]
    head = jnp.arange(nh)[None, :]
    seg = (lane // hd == head).astype(jnp.float32)                       # (H, nh)
    segT = seg.T                                                         # (nh, H)

    fc1w = params['fc1_w'].T.astype(jnp.float32)                         # (H, H//2)
    fc1b = params['fc1_b'].reshape(1, -1).astype(jnp.float32)
    fc2w = jnp.zeros((H // 2, OUT_PAD), jnp.float32).at[:, :S].set(
        params['fc2_w'].T.astype(jnp.float32))                           # (H//2, 128)
    fc2b = jnp.zeros((1, OUT_PAD), jnp.float32).at[:, :S].set(
        params['fc2_b'].reshape(1, S).astype(jnp.float32))

    args = (xr, wih0, b0, w0cat, whh1_b, b1,
            wqkv, bqkv, wo, bo, seg, segT,
            fc1w, fc1b, fc2w, fc2b)

    vmem = pl.BlockSpec(memory_space=pltpu.MemorySpace.VMEM)
    out = pl.pallas_call(
        _lstm_attn_kernel,
        out_shape=jax.ShapeDtypeStruct((BP, OUT_PAD), jnp.float32),
        in_specs=[vmem] * len(args),
        out_specs=vmem,
    )(*args)
    return out[:B, :S].reshape(B, 1, S)


# ----------------------- pure-JAX reference (torch semantics) ------------------------
def ref_forward(x, params):
    B, T, S, F = x.shape
    H, nh, hd = HIDDEN, NUM_HEADS, HEAD_DIM
    xr = x.reshape(B, T, S * F)

    def lstm_layer(inp, w_ih, w_hh, b_ih, b_hh):
        h = jnp.zeros((B, H), jnp.float32)
        c = jnp.zeros((B, H), jnp.float32)
        outs = []
        for t in range(inp.shape[1]):
            z = inp[:, t] @ w_ih.T + h @ w_hh.T + b_ih + b_hh
            i, f, g, o = jnp.split(z, 4, axis=-1)
            i, f, o = jax.nn.sigmoid(i), jax.nn.sigmoid(f), jax.nn.sigmoid(o)
            g = jnp.tanh(g)
            c = f * c + i * g
            h = o * jnp.tanh(c)
            outs.append(h)
        return jnp.stack(outs, axis=1)

    h0 = lstm_layer(xr, params['w_ih_l0'], params['w_hh_l0'], params['b_ih_l0'], params['b_hh_l0'])
    h1 = lstm_layer(h0, params['w_ih_l1'], params['w_hh_l1'], params['b_ih_l1'], params['b_hh_l1'])

    in_w, in_b = params['in_proj_weight'], params['in_proj_bias']
    Wq, Wk, Wv = in_w[:H], in_w[H:2 * H], in_w[2 * H:]
    bq, bk, bv = in_b[:H], in_b[H:2 * H], in_b[2 * H:]
    q = h1 @ Wq.T + bq
    k = h1 @ Wk.T + bk
    v = h1 @ Wv.T + bv

    def heads(a):
        return a.reshape(B, T, nh, hd).transpose(0, 2, 1, 3)

    qh, kh, vh = heads(q), heads(k), heads(v)
    s = jnp.einsum('bhqd,bhkd->bhqk', qh, kh) / math.sqrt(hd)
    p = jax.nn.softmax(s, axis=-1)
    ctx = jnp.einsum('bhqk,bhkd->bhqd', p, vh).transpose(0, 2, 1, 3).reshape(B, T, H)
    attn = ctx @ params['out_proj_weight'].T + params['out_proj_bias']
    last = attn[:, -1]
    y = jnp.maximum(last @ params['fc1_w'].T + params['fc1_b'], 0.0)
    y = y @ params['fc2_w'].T + params['fc2_b']
    return y.reshape(B, 1, S)


def init_params(key):
    H, D = HIDDEN, NUM_STOCKS * NUM_FEATURES
    keys = jax.random.split(key, 16)

    def u(k, shape, scale=0.15):
        return jax.random.uniform(k, shape, jnp.float32, -scale, scale)

    return {
        'w_ih_l0': u(keys[0], (4 * H, D)),
        'w_hh_l0': u(keys[1], (4 * H, H)),
        'b_ih_l0': u(keys[2], (4 * H,)),
        'b_hh_l0': u(keys[3], (4 * H,)),
        'w_ih_l1': u(keys[4], (4 * H, H)),
        'w_hh_l1': u(keys[5], (4 * H, H)),
        'b_ih_l1': u(keys[6], (4 * H,)),
        'b_hh_l1': u(keys[7], (4 * H,)),
        'in_proj_weight': u(keys[8], (3 * H, H)),
        'in_proj_bias': u(keys[9], (3 * H,)),
        'out_proj_weight': u(keys[10], (H, H)),
        'out_proj_bias': u(keys[11], (H,)),
        'fc1_w': u(keys[12], (H // 2, H)),
        'fc1_b': u(keys[13], (H // 2,)),
        'fc2_w': u(keys[14], (NUM_STOCKS, H // 2)),
        'fc2_b': u(keys[15], (NUM_STOCKS,)),
    }


if __name__ == "__main__":
    key = jax.random.PRNGKey(0)
    pkey, xkey = jax.random.split(key)
    params = init_params(pkey)
    x = jax.random.normal(xkey, (BATCH, SEQ, NUM_STOCKS, NUM_FEATURES), jnp.float32)

    out = jax.block_until_ready(stock_lstm_attention_forward(x, params))
    ref = jax.block_until_ready(ref_forward(x, params))

    assert out.shape == (BATCH, 1, NUM_STOCKS)
    # bf16 recurrent-matmul operands (f32 accumulation) keep the error at the few-1e-4
    # level for these small-magnitude weights; exact softmax divide preserves margin.
    assert jnp.allclose(out, ref, atol=2e-3, rtol=2e-3), (out, ref)
    print("KERNEL_OK")
</pallas_src>

<mosaic_0001>
module attributes {stable_mosaic.version = 11 : i64} {
  func.func @_lstm_attn_kernel(%arg0: memref<8x8x16xf32, #tpu.memory_space<vmem>>, %arg1: memref<16x128xf32, #tpu.memory_space<vmem>>, %arg2: memref<1x128xf32, #tpu.memory_space<vmem>>, %arg3: memref<32x256xbf16, #tpu.memory_space<vmem>>, %arg4: memref<32x128xbf16, #tpu.memory_space<vmem>>, %arg5: memref<1x128xf32, #tpu.memory_space<vmem>>, %arg6: memref<32x96xf32, #tpu.memory_space<vmem>>, %arg7: memref<1x96xf32, #tpu.memory_space<vmem>>, %arg8: memref<32x32xf32, #tpu.memory_space<vmem>>, %arg9: memref<1x32xf32, #tpu.memory_space<vmem>>, %arg10: memref<32x4xf32, #tpu.memory_space<vmem>>, %arg11: memref<4x32xf32, #tpu.memory_space<vmem>>, %arg12: memref<32x16xf32, #tpu.memory_space<vmem>>, %arg13: memref<1x16xf32, #tpu.memory_space<vmem>>, %arg14: memref<16x128xf32, #tpu.memory_space<vmem>>, %arg15: memref<1x128xf32, #tpu.memory_space<vmem>>, %arg16: memref<8x128xf32, #tpu.memory_space<vmem>>) attributes {dimension_semantics = [], scalar_prefetch = 0 : i64, scratch_operands = 0 : i64, tpu.core_type = #tpu.core_type<tc>} {
    %c0 = arith.constant 0 : index
    %c0_0 = arith.constant 0 : index
    %c0_1 = arith.constant 0 : index
    %0 = vector.load %arg0[%c0, %c0_0, %c0_1] : memref<8x8x16xf32, #tpu.memory_space<vmem>>, vector<8x8x16xf32>
    %1 = vector.shape_cast %0 : vector<8x8x16xf32> to vector<64x16xf32>
    %c0_2 = arith.constant 0 : index
    %c0_3 = arith.constant 0 : index
    %2 = vector.load %arg1[%c0_2, %c0_3] : memref<16x128xf32, #tpu.memory_space<vmem>>, vector<16x128xf32>
    %cst = arith.constant dense<0.000000e+00> : vector<64x128xf32>
    %3 = tpu.matmul %1, %2, %cst {dimension_numbers = #tpu.dot_dimension_numbers<[1], [0], [0], [1], [0, 0, 1, 1], [], []>} : vector<64x16xf32>, vector<16x128xf32>, vector<64x128xf32> -> vector<64x128xf32>
    %c0_4 = arith.constant 0 : index
    %c0_5 = arith.constant 0 : index
    %4 = vector.load %arg2[%c0_4, %c0_5] : memref<1x128xf32, #tpu.memory_space<vmem>>, vector<1x128xf32>
    %5 = vector.broadcast %4 : vector<1x128xf32> to vector<64x128xf32>
    %6 = arith.addf %3, %5 : vector<64x128xf32>
    %7 = vector.shape_cast %6 : vector<64x128xf32> to vector<8x8x128xf32>
    %c0_6 = arith.constant 0 : index
    %c0_7 = arith.constant 0 : index
    %8 = vector.load %arg3[%c0_6, %c0_7] : memref<32x256xbf16, #tpu.memory_space<vmem>>, vector<32x256xbf16>
    %c0_8 = arith.constant 0 : index
    %c0_9 = arith.constant 0 : index
    %9 = vector.load %arg4[%c0_8, %c0_9] : memref<32x128xbf16, #tpu.memory_space<vmem>>, vector<32x128xbf16>
    %c0_10 = arith.constant 0 : index
    %c0_11 = arith.constant 0 : index
    %10 = vector.load %arg5[%c0_10, %c0_11] : memref<1x128xf32, #tpu.memory_space<vmem>>, vector<1x128xf32>
    %11 = vector.shape_cast %10 : vector<1x128xf32> to vector<1x128xf32>
    %12 = vector.broadcast %11 : vector<1x128xf32> to vector<8x128xf32>
    %cst_12 = arith.constant 0.000000e+00 : f32
    %13 = vector.broadcast %cst_12 : f32 to vector<8x32xf32>
    %cst_13 = arith.constant 0.000000e+00 : f32
    %14 = vector.broadcast %cst_13 : f32 to vector<8x32xf32>
    %cst_14 = arith.constant 0.000000e+00 : f32
    %15 = vector.broadcast %cst_14 : f32 to vector<8x32xf32>
    %16 = vector.extract_strided_slice %7 {offsets = [0, 0, 0], sizes = [1, 8, 128], strides = [1, 1, 1]} : vector<8x8x128xf32> to vector<1x8x128xf32>
    %17 = vector.shape_cast %16 : vector<1x8x128xf32> to vector<8x128xf32>
    %18 = math.tanh %17 : vector<8x128xf32>
    %19 = vector.extract_strided_slice %18 {offsets = [0, 0], sizes = [8, 32], strides = [1, 1]} : vector<8x128xf32> to vector<8x32xf32>
    %cst_15 = arith.constant 5.000000e-01 : f32
    %20 = vector.broadcast %cst_15 : f32 to vector<8x32xf32>
    %21 = arith.mulf %20, %19 : vector<8x32xf32>
    %cst_16 = arith.constant 5.000000e-01 : f32
    %22 = vector.broadcast %cst_16 : f32 to vector<8x32xf32>
    %23 = arith.addf %22, %21 : vector<8x32xf32>
    %24 = vector.extract_strided_slice %18 {offsets = [0, 32], sizes = [8, 32], strides = [1, 1]} : vector<8x128xf32> to vector<8x32xf32>
    %cst_17 = arith.constant 5.000000e-01 : f32
    %25 = vector.broadcast %cst_17 : f32 to vector<8x32xf32>
    %26 = arith.mulf %25, %24 : vector<8x32xf32>
    %cst_18 = arith.constant 5.000000e-01 : f32
    %27 = vector.broadcast %cst_18 : f32 to vector<8x32xf32>
    %28 = arith.addf %27, %26 : vector<8x32xf32>
    %29 = vector.extract_strided_slice %18 {offsets = [0, 64], sizes = [8, 32], strides = [1, 1]} : vector<8x128xf32> to vector<8x32xf32>
    %30 = vector.extract_strided_slice %18 {offsets = [0, 96], sizes = [8, 32], strides = [1, 1]} : vector<8x128xf32> to vector<8x32xf32>
    %cst_19 = arith.constant 5.000000e-01 : f32
    %31 = vector.broadcast %cst_19 : f32 to vector<8x32xf32>
    %32 = arith.mulf %31, %30 : vector<8x32xf32>
    %cst_20 = arith.constant 5.000000e-01 : f32
    %33 = vector.broadcast %cst_20 : f32 to vector<8x32xf32>
    %34 = arith.addf %33, %32 : vector<8x32xf32>
    %35 = arith.mulf %28, %13 : vector<8x32xf32>
    %36 = arith.mulf %23, %29 : vector<8x32xf32>
    %37 = arith.addf %35, %36 : vector<8x32xf32>
    %38 = math.tanh %37 : vector<8x32xf32>
    %39 = arith.mulf %34, %38 : vector<8x32xf32>
    %40 = arith.truncf %39 : vector<8x32xf32> to vector<8x32xbf16>
    %cst_21 = arith.constant dense<0.000000e+00> : vector<8x256xf32>
    %41 = tpu.matmul %40, %8, %cst_21 {dimension_numbers = #tpu.dot_dimension_numbers<[1], [0], [0], [1], [0, 0, 1, 1], [], []>} : vector<8x32xbf16>, vector<32x256xbf16>, vector<8x256xf32> -> vector<8x256xf32>
    %42 = vector.extract_strided_slice %7 {offsets = [1, 0, 0], sizes = [1, 8, 128], strides = [1, 1, 1]} : vector<8x8x128xf32> to vector<1x8x128xf32>
    %43 = vector.shape_cast %42 : vector<1x8x128xf32> to vector<8x128xf32>
    %44 = vector.extract_strided_slice %41 {offsets = [0, 0], sizes = [8, 128], strides = [1, 1]} : vector<8x256xf32> to vector<8x128xf32>
    %45 = arith.addf %43, %44 : vector<8x128xf32>
    %46 = math.tanh %45 : vector<8x128xf32>
    %47 = vector.extract_strided_slice %46 {offsets = [0, 0], sizes = [8, 32], strides = [1, 1]} : vector<8x128xf32> to vector<8x32xf32>
    %cst_22 = arith.constant 5.000000e-01 : f32
    %48 = vector.broadcast %cst_22 : f32 to vector<8x32xf32>
    %49 = arith.mulf %48, %47 : vector<8x32xf32>
    %cst_23 = arith.constant 5.000000e-01 : f32
    %50 = vector.broadcast %cst_23 : f32 to vector<8x32xf32>
    %51 = arith.addf %50, %49 : vector<8x32xf32>
    %52 = vector.extract_strided_slice %46 {offsets = [0, 32], sizes = [8, 32], strides = [1, 1]} : vector<8x128xf32> to vector<8x32xf32>
    %cst_24 = arith.constant 5.000000e-01 : f32
    %53 = vector.broadcast %cst_24 : f32 to vector<8x32xf32>
    %54 = arith.mulf %53, %52 : vector<8x32xf32>
    %cst_25 = arith.constant 5.000000e-01 : f32
    %55 = vector.broadcast %cst_25 : f32 to vector<8x32xf32>
    %56 = arith.addf %55, %54 : vector<8x32xf32>
    %57 = vector.extract_strided_slice %46 {offsets = [0, 64], sizes = [8, 32], strides = [1, 1]} : vector<8x128xf32> to vector<8x32xf32>
    %58 = vector.extract_strided_slice %46 {offsets = [0, 96], sizes = [8, 32], strides = [1, 1]} : vector<8x128xf32> to vector<8x32xf32>
    %cst_26 = arith.constant 5.000000e-01 : f32
    %59 = vector.broadcast %cst_26 : f32 to vector<8x32xf32>
    %60 = arith.mulf %59, %58 : vector<8x32xf32>
    %cst_27 = arith.constant 5.000000e-01 : f32
    %61 = vector.broadcast %cst_27 : f32 to vector<8x32xf32>
    %62 = arith.addf %61, %60 : vector<8x32xf32>
    %63 = arith.mulf %56, %37 : vector<8x32xf32>
    %64 = arith.mulf %51, %57 : vector<8x32xf32>
    %65 = arith.addf %63, %64 : vector<8x32xf32>
    %66 = math.tanh %65 : vector<8x32xf32>
    %67 = arith.mulf %62, %66 : vector<8x32xf32>
    %68 = vector.extract_strided_slice %41 {offsets = [0, 128], sizes = [8, 128], strides = [1, 1]} : vector<8x256xf32> to vector<8x128xf32>
    %69 = arith.addf %12, %68 : vector<8x128xf32>
    %70 = arith.truncf %14 : vector<8x32xf32> to vector<8x32xbf16>
    %cst_28 = arith.constant dense<0.000000e+00> : vector<8x128xf32>
    %71 = tpu.matmul %70, %9, %cst_28 {dimension_numbers = #tpu.dot_dimension_numbers<[1], [0], [0], [1], [0, 0, 1, 1], [], []>} : vector<8x32xbf16>, vector<32x128xbf16>, vector<8x128xf32> -> vector<8x128xf32>
    %72 = arith.addf %69, %71 : vector<8x128xf32>
    %73 = math.tanh %72 : vector<8x128xf32>
    %74 = vector.extract_strided_slice %73 {offsets = [0, 0], sizes = [8, 32], strides = [1, 1]} : vector<8x128xf32> to vector<8x32xf32>
    %cst_29 = arith.constant 5.000000e-01 : f32
    %75 = vector.broadcast %cst_29 : f32 to vector<8x32xf32>
    %76 = arith.mulf %75, %74 : vector<8x32xf32>
    %cst_30 = arith.constant 5.000000e-01 : f32
    %77 = vector.broadcast %cst_30 : f32 to vector<8x32xf32>
    %78 = arith.addf %77, %76 : vector<8x32xf32>
    %79 = vector.extract_strided_slice %73 {offsets = [0, 32], sizes = [8, 32], strides = [1, 1]} : vector<8x128xf32> to vector<8x32xf32>
    %cst_31 = arith.constant 5.000000e-01 : f32
    %80 = vector.broadcast %cst_31 : f32 to vector<8x32xf32>
    %81 = arith.mulf %80, %79 : vector<8x32xf32>
    %cst_32 = arith.constant 5.000000e-01 : f32
    %82 = vector.broadcast %cst_32 : f32 to vector<8x32xf32>
    %83 = arith.addf %82, %81 : vector<8x32xf32>
    %84 = vector.extract_strided_slice %73 {offsets = [0, 64], sizes = [8, 32], strides = [1, 1]} : vector<8x128xf32> to vector<8x32xf32>
    %85 = vector.extract_strided_slice %73 {offsets = [0, 96], sizes = [8, 32], strides = [1, 1]} : vector<8x128xf32> to vector<8x32xf32>
    %cst_33 = arith.constant 5.000000e-01 : f32
    %86 = vector.broadcast %cst_33 : f32 to vector<8x32xf32>
    %87 = arith.mulf %86, %85 : vector<8x32xf32>
    %cst_34 = arith.constant 5.000000e-01 : f32
    %88 = vector.broadcast %cst_34 : f32 to vector<8x32xf32>
    %89 = arith.addf %88, %87 : vector<8x32xf32>
    %90 = arith.mulf %83, %15 : vector<8x32xf32>
    %91 = arith.mulf %78, %84 : vector<8x32xf32>
    %92 = arith.addf %90, %91 : vector<8x32xf32>
    %93 = math.tanh %92 : vector<8x32xf32>
    %94 = arith.mulf %89, %93 : vector<8x32xf32>
    %95 = arith.truncf %67 : vector<8x32xf32> to vector<8x32xbf16>
    %cst_35 = arith.constant dense<0.000000e+00> : vector<8x256xf32>
    %96 = tpu.matmul %95, %8, %cst_35 {dimension_numbers = #tpu.dot_dimension_numbers<[1], [0], [0], [1], [0, 0, 1, 1], [], []>} : vector<8x32xbf16>, vector<32x256xbf16>, vector<8x256xf32> -> vector<8x256xf32>
    %97 = vector.extract_strided_slice %7 {offsets = [2, 0, 0], sizes = [1, 8, 128], strides = [1, 1, 1]} : vector<8x8x128xf32> to vector<1x8x128xf32>
    %98 = vector.shape_cast %97 : vector<1x8x128xf32> to vector<8x128xf32>
    %99 = vector.extract_strided_slice %96 {offsets = [0, 0], sizes = [8, 128], strides = [1, 1]} : vector<8x256xf32> to vector<8x128xf32>
    %100 = arith.addf %98, %99 : vector<8x128xf32>
    %101 = math.tanh %100 : vector<8x128xf32>
    %102 = vector.extract_strided_slice %101 {offsets = [0, 0], sizes = [8, 32], strides = [1, 1]} : vector<8x128xf32> to vector<8x32xf32>
    %cst_36 = arith.constant 5.000000e-01 : f32
    %103 = vector.broadcast %cst_36 : f32 to vector<8x32xf32>
    %104 = arith.mulf %103, %102 : vector<8x32xf32>
    %cst_37 = arith.constant 5.000000e-01 : f32
    %105 = vector.broadcast %cst_37 : f32 to vector<8x32xf32>
    %106 = arith.addf %105, %104 : vector<8x32xf32>
    %107 = vector.extract_strided_slice %101 {offsets = [0, 32], sizes = [8, 32], strides = [1, 1]} : vector<8x128xf32> to vector<8x32xf32>
    %cst_38 = arith.constant 5.000000e-01 : f32
    %108 = vector.broadcast %cst_38 : f32 to vector<8x32xf32>
    %109 = arith.mulf %108, %107 : vector<8x32xf32>
    %cst_39 = arith.constant 5.000000e-01 : f32
    %110 = vector.broadcast %cst_39 : f32 to vector<8x32xf32>
    %111 = arith.addf %110, %109 : vector<8x32xf32>
    %112 = vector.extract_strided_slice %101 {offsets = [0, 64], sizes = [8, 32], strides = [1, 1]} : vector<8x128xf32> to vector<8x32xf32>
    %113 = vector.extract_strided_slice %101 {offsets = [0, 96], sizes = [8, 32], strides = [1, 1]} : vector<8x128xf32> to vector<8x32xf32>
    %cst_40 = arith.constant 5.000000e-01 : f32
    %114 = vector.broadcast %cst_40 : f32 to vector<8x32xf32>
    %115 = arith.mulf %114, %113 : vector<8x32xf32>
    %cst_41 = arith.constant 5.000000e-01 : f32
    %116 = vector.broadcast %cst_41 : f32 to vector<8x32xf32>
    %117 = arith.addf %116, %115 : vector<8x32xf32>
    %118 = arith.mulf %111, %65 : vector<8x32xf32>
    %119 = arith.mulf %106, %112 : vector<8x32xf32>
    %120 = arith.addf %118, %119 : vector<8x32xf32>
    %121 = math.tanh %120 : vector<8x32xf32>
    %122 = arith.mulf %117, %121 : vector<8x32xf32>
    %123 = vector.extract_strided_slice %96 {offsets = [0, 128], sizes = [8, 128], strides = [1, 1]} : vector<8x256xf32> to vector<8x128xf32>
    %124 = arith.addf %12, %123 : vector<8x128xf32>
    %125 = arith.truncf %94 : vector<8x32xf32> to vector<8x32xbf16>
    %cst_42 = arith.constant dense<0.000000e+00> : vector<8x128xf32>
    %126 = tpu.matmul %125, %9, %cst_42 {dimension_numbers = #tpu.dot_dimension_numbers<[1], [0], [0], [1], [0, 0, 1, 1], [], []>} : vector<8x32xbf16>, vector<32x128xbf16>, vector<8x128xf32> -> vector<8x128xf32>
    %127 = arith.addf %124, %126 : vector<8x128xf32>
    %128 = math.tanh %127 : vector<8x128xf32>
    %129 = vector.extract_strided_slice %128 {offsets = [0, 0], sizes = [8, 32], strides = [1, 1]} : vector<8x128xf32> to vector<8x32xf32>
    %cst_43 = arith.constant 5.000000e-01 : f32
    %130 = vector.broadcast %cst_43 : f32 to vector<8x32xf32>
    %131 = arith.mulf %130, %129 : vector<8x32xf32>
    %cst_44 = arith.constant 5.000000e-01 : f32
    %132 = vector.broadcast %cst_44 : f32 to vector<8x32xf32>
    %133 = arith.addf %132, %131 : vector<8x32xf32>
    %134 = vector.extract_strided_slice %128 {offsets = [0, 32], sizes = [8, 32], strides = [1, 1]} : vector<8x128xf32> to vector<8x32xf32>
    %cst_45 = arith.constant 5.000000e-01 : f32
    %135 = vector.broadcast %cst_45 : f32 to vector<8x32xf32>
    %136 = arith.mulf %135, %134 : vector<8x32xf32>
    %cst_46 = arith.constant 5.000000e-01 : f32
    %137 = vector.broadcast %cst_46 : f32 to vector<8x32xf32>
    %138 = arith.addf %137, %136 : vector<8x32xf32>
    %139 = vector.extract_strided_slice %128 {offsets = [0, 64], sizes = [8, 32], strides = [1, 1]} : vector<8x128xf32> to vector<8x32xf32>
    %140 = vector.extract_strided_slice %128 {offsets = [0, 96], sizes = [8, 32], strides = [1, 1]} : vector<8x128xf32> to vector<8x32xf32>
    %cst_47 = arith.constant 5.000000e-01 : f32
    %141 = vector.broadcast %cst_47 : f32 to vector<8x32xf32>
    %142 = arith.mulf %141, %140 : vector<8x32xf32>
    %cst_48 = arith.constant 5.000000e-01 : f32
    %143 = vector.broadcast %cst_48 : f32 to vector<8x32xf32>
    %144 = arith.addf %143, %142 : vector<8x32xf32>
    %145 = arith.mulf %138, %92 : vector<8x32xf32>
    %146 = arith.mulf %133, %139 : vector<8x32xf32>
    %147 = arith.addf %145, %146 : vector<8x32xf32>
    %148 = math.tanh %147 : vector<8x32xf32>
    %149 = arith.mulf %144, %148 : vector<8x32xf32>
    %150 = arith.truncf %122 : vector<8x32xf32> to vector<8x32xbf16>
    %cst_49 = arith.constant dense<0.000000e+00> : vector<8x256xf32>
    %151 = tpu.matmul %150, %8, %cst_49 {dimension_numbers = #tpu.dot_dimension_numbers<[1], [0], [0], [1], [0, 0, 1, 1], [], []>} : vector<8x32xbf16>, vector<32x256xbf16>, vector<8x256xf32> -> vector<8x256xf32>
    %152 = vector.extract_strided_slice %7 {offsets = [3, 0, 0], sizes = [1, 8, 128], strides = [1, 1, 1]} : vector<8x8x128xf32> to vector<1x8x128xf32>
    %153 = vector.shape_cast %152 : vector<1x8x128xf32> to vector<8x128xf32>
    %154 = vector.extract_strided_slice %151 {offsets = [0, 0], sizes = [8, 128], strides = [1, 1]} : vector<8x256xf32> to vector<8x128xf32>
    %155 = arith.addf %153, %154 : vector<8x128xf32>
    %156 = math.tanh %155 : vector<8x128xf32>
    %157 = vector.extract_strided_slice %156 {offsets = [0, 0], sizes = [8, 32], strides = [1, 1]} : vector<8x128xf32> to vector<8x32xf32>
    %cst_50 = arith.constant 5.000000e-01 : f32
    %158 = vector.broadcast %cst_50 : f32 to vector<8x32xf32>
    %159 = arith.mulf %158, %157 : vector<8x32xf32>
    %cst_51 = arith.constant 5.000000e-01 : f32
    %160 = vector.broadcast %cst_51 : f32 to vector<8x32xf32>
    %161 = arith.addf %160, %159 : vector<8x32xf32>
    %162 = vector.extract_strided_slice %156 {offsets = [0, 32], sizes = [8, 32], strides = [1, 1]} : vector<8x128xf32> to vector<8x32xf32>
    %cst_52 = arith.constant 5.000000e-01 : f32
    %163 = vector.broadcast %cst_52 : f32 to vector<8x32xf32>
    %164 = arith.mulf %163, %162 : vector<8x32xf32>
    %cst_53 = arith.constant 5.000000e-01 : f32
    %165 = vector.broadcast %cst_53 : f32 to vector<8x32xf32>
    %166 = arith.addf %165, %164 : vector<8x32xf32>
    %167 = vector.extract_strided_slice %156 {offsets = [0, 64], sizes = [8, 32], strides = [1, 1]} : vector<8x128xf32> to vector<8x32xf32>
    %168 = vector.extract_strided_slice %156 {offsets = [0, 96], sizes = [8, 32], strides = [1, 1]} : vector<8x128xf32> to vector<8x32xf32>
    %cst_54 = arith.constant 5.000000e-01 : f32
    %169 = vector.broadcast %cst_54 : f32 to vector<8x32xf32>
    %170 = arith.mulf %169, %168 : vector<8x32xf32>
    %cst_55 = arith.constant 5.000000e-01 : f32
    %171 = vector.broadcast %cst_55 : f32 to vector<8x32xf32>
    %172 = arith.addf %171, %170 : vector<8x32xf32>
    %173 = arith.mulf %166, %120 : vector<8x32xf32>
    %174 = arith.mulf %161, %167 : vector<8x32xf32>
    %175 = arith.addf %173, %174 : vector<8x32xf32>
    %176 = math.tanh %175 : vector<8x32xf32>
    %177 = arith.mulf %172, %176 : vector<8x32xf32>
    %178 = vector.extract_strided_slice %151 {offsets = [0, 128], sizes = [8, 128], strides = [1, 1]} : vector<8x256xf32> to vector<8x128xf32>
    %179 = arith.addf %12, %178 : vector<8x128xf32>
    %180 = arith.truncf %149 : vector<8x32xf32> to vector<8x32xbf16>
    %cst_56 = arith.constant dense<0.000000e+00> : vector<8x128xf32>
    %181 = tpu.matmul %180, %9, %cst_56 {dimension_numbers = #tpu.dot_dimension_numbers<[1], [0], [0], [1], [0, 0, 1, 1], [], []>} : vector<8x32xbf16>, vector<32x128xbf16>, vector<8x128xf32> -> vector<8x128xf32>
    %182 = arith.addf %179, %181 : vector<8x128xf32>
    %183 = math.tanh %182 : vector<8x128xf32>
    %184 = vector.extract_strided_slice %183 {offsets = [0, 0], sizes = [8, 32], strides = [1, 1]} : vector<8x128xf32> to vector<8x32xf32>
    %cst_57 = arith.constant 5.000000e-01 : f32
    %185 = vector.broadcast %cst_57 : f32 to vector<8x32xf32>
    %186 = arith.mulf %185, %184 : vector<8x32xf32>
    %cst_58 = arith.constant 5.000000e-01 : f32
    %187 = vector.broadcast %cst_58 : f32 to vector<8x32xf32>
    %188 = arith.addf %187, %186 : vector<8x32xf32>
    %189 = vector.extract_strided_slice %183 {offsets = [0, 32], sizes = [8, 32], strides = [1, 1]} : vector<8x128xf32> to vector<8x32xf32>
    %cst_59 = arith.constant 5.000000e-01 : f32
    %190 = vector.broadcast %cst_59 : f32 to vector<8x32xf32>
    %191 = arith.mulf %190, %189 : vector<8x32xf32>
    %cst_60 = arith.constant 5.000000e-01 : f32
    %192 = vector.broadcast %cst_60 : f32 to vector<8x32xf32>
    %193 = arith.addf %192, %191 : vector<8x32xf32>
    %194 = vector.extract_strided_slice %183 {offsets = [0, 64], sizes = [8, 32], strides = [1, 1]} : vector<8x128xf32> to vector<8x32xf32>
    %195 = vector.extract_strided_slice %183 {offsets = [0, 96], sizes = [8, 32], strides = [1, 1]} : vector<8x128xf32> to vector<8x32xf32>
    %cst_61 = arith.constant 5.000000e-01 : f32
    %196 = vector.broadcast %cst_61 : f32 to vector<8x32xf32>
    %197 = arith.mulf %196, %195 : vector<8x32xf32>
    %cst_62 = arith.constant 5.000000e-01 : f32
    %198 = vector.broadcast %cst_62 : f32 to vector<8x32xf32>
    %199 = arith.addf %198, %197 : vector<8x32xf32>
    %200 = arith.mulf %193, %147 : vector<8x32xf32>
    %201 = arith.mulf %188, %194 : vector<8x32xf32>
    %202 = arith.addf %200, %201 : vector<8x32xf32>
    %203 = math.tanh %202 : vector<8x32xf32>
    %204 = arith.mulf %199, %203 : vector<8x32xf32>
    %205 = arith.truncf %177 : vector<8x32xf32> to vector<8x32xbf16>
    %cst_63 = arith.constant dense<0.000000e+00> : vector<8x256xf32>
    %206 = tpu.matmul %205, %8, %cst_63 {dimension_numbers = #tpu.dot_dimension_numbers<[1], [0], [0], [1], [0, 0, 1, 1], [], []>} : vector<8x32xbf16>, vector<32x256xbf16>, vector<8x256xf32> -> vector<8x256xf32>
    %207 = vector.extract_strided_slice %7 {offsets = [4, 0, 0], sizes = [1, 8, 128], strides = [1, 1, 1]} : vector<8x8x128xf32> to vector<1x8x128xf32>
    %208 = vector.shape_cast %207 : vector<1x8x128xf32> to vector<8x128xf32>
    %209 = vector.extract_strided_slice %206 {offsets = [0, 0], sizes = [8, 128], strides = [1, 1]} : vector<8x256xf32> to vector<8x128xf32>
    %210 = arith.addf %208, %209 : vector<8x128xf32>
    %211 = math.tanh %210 : vector<8x128xf32>
    %212 = vector.extract_strided_slice %211 {offsets = [0, 0], sizes = [8, 32], strides = [1, 1]} : vector<8x128xf32> to vector<8x32xf32>
    %cst_64 = arith.constant 5.000000e-01 : f32
    %213 = vector.broadcast %cst_64 : f32 to vector<8x32xf32>
    %214 = arith.mulf %213, %212 : vector<8x32xf32>
    %cst_65 = arith.constant 5.000000e-01 : f32
    %215 = vector.broadcast %cst_65 : f32 to vector<8x32xf32>
    %216 = arith.addf %215, %214 : vector<8x32xf32>
    %217 = vector.extract_strided_slice %211 {offsets = [0, 32], sizes = [8, 32], strides = [1, 1]} : vector<8x128xf32> to vector<8x32xf32>
    %cst_66 = arith.constant 5.000000e-01 : f32
    %218 = vector.broadcast %cst_66 : f32 to vector<8x32xf32>
    %219 = arith.mulf %218, %217 : vector<8x32xf32>
    %cst_67 = arith.constant 5.000000e-01 : f32
    %220 = vector.broadcast %cst_67 : f32 to vector<8x32xf32>
    %221 = arith.addf %220, %219 : vector<8x32xf32>
    %222 = vector.extract_strided_slice %211 {offsets = [0, 64], sizes = [8, 32], strides = [1, 1]} : vector<8x128xf32> to vector<8x32xf32>
    %223 = vector.extract_strided_slice %211 {offsets = [0, 96], sizes = [8, 32], strides = [1, 1]} : vector<8x128xf32> to vector<8x32xf32>
    %cst_68 = arith.constant 5.000000e-01 : f32
    %224 = vector.broadcast %cst_68 : f32 to vector<8x32xf32>
    %225 = arith.mulf %224, %223 : vector<8x32xf32>
    %cst_69 = arith.constant 5.000000e-01 : f32
    %226 = vector.broadcast %cst_69 : f32 to vector<8x32xf32>
    %227 = arith.addf %226, %225 : vector<8x32xf32>
    %228 = arith.mulf %221, %175 : vector<8x32xf32>
    %229 = arith.mulf %216, %222 : vector<8x32xf32>
    %230 = arith.addf %228, %229 : vector<8x32xf32>
    %231 = math.tanh %230 : vector<8x32xf32>
    %232 = arith.mulf %227, %231 : vector<8x32xf32>
    %233 = vector.extract_strided_slice %206 {offsets = [0, 128], sizes = [8, 128], strides = [1, 1]} : vector<8x256xf32> to vector<8x128xf32>
    %234 = arith.addf %12, %233 : vector<8x128xf32>
    %235 = arith.truncf %204 : vector<8x32xf32> to vector<8x32xbf16>
    %cst_70 = arith.constant dense<0.000000e+00> : vector<8x128xf32>
    %236 = tpu.matmul %235, %9, %cst_70 {dimension_numbers = #tpu.dot_dimension_numbers<[1], [0], [0], [1], [0, 0, 1, 1], [], []>} : vector<8x32xbf16>, vector<32x128xbf16>, vector<8x128xf32> -> vector<8x128xf32>
    %237 = arith.addf %234, %236 : vector<8x128xf32>
    %238 = math.tanh %237 : vector<8x128xf32>
    %239 = vector.extract_strided_slice %238 {offsets = [0, 0], sizes = [8, 32], strides = [1, 1]} : vector<8x128xf32> to vector<8x32xf32>
    %cst_71 = arith.constant 5.000000e-01 : f32
    %240 = vector.broadcast %cst_71 : f32 to vector<8x32xf32>
    %241 = arith.mulf %240, %239 : vector<8x32xf32>
    %cst_72 = arith.constant 5.000000e-01 : f32
    %242 = vector.broadcast %cst_72 : f32 to vector<8x32xf32>
    %243 = arith.addf %242, %241 : vector<8x32xf32>
    %244 = vector.extract_strided_slice %238 {offsets = [0, 32], sizes = [8, 32], strides = [1, 1]} : vector<8x128xf32> to vector<8x32xf32>
    %cst_73 = arith.constant 5.000000e-01 : f32
    %245 = vector.broadcast %cst_73 : f32 to vector<8x32xf32>
    %246 = arith.mulf %245, %244 : vector<8x32xf32>
    %cst_74 = arith.constant 5.000000e-01 : f32
    %247 = vector.broadcast %cst_74 : f32 to vector<8x32xf32>
    %248 = arith.addf %247, %246 : vector<8x32xf32>
    %249 = vector.extract_strided_slice %238 {offsets = [0, 64], sizes = [8, 32], strides = [1, 1]} : vector<8x128xf32> to vector<8x32xf32>
    %250 = vector.extract_strided_slice %238 {offsets = [0, 96], sizes = [8, 32], strides = [1, 1]} : vector<8x128xf32> to vector<8x32xf32>
    %cst_75 = arith.constant 5.000000e-01 : f32
    %251 = vector.broadcast %cst_75 : f32 to vector<8x32xf32>
    %252 = arith.mulf %251, %250 : vector<8x32xf32>
    %cst_76 = arith.constant 5.000000e-01 : f32
    %253 = vector.broadcast %cst_76 : f32 to vector<8x32xf32>
    %254 = arith.addf %253, %252 : vector<8x32xf32>
    %255 = arith.mulf %248, %202 : vector<8x32xf32>
    %256 = arith.mulf %243, %249 : vector<8x32xf32>
    %257 = arith.addf %255, %256 : vector<8x32xf32>
    %258 = math.tanh %257 : vector<8x32xf32>
    %259 = arith.mulf %254, %258 : vector<8x32xf32>
    %260 = arith.truncf %232 : vector<8x32xf32> to vector<8x32xbf16>
    %cst_77 = arith.constant dense<0.000000e+00> : vector<8x256xf32>
    %261 = tpu.matmul %260, %8, %cst_77 {dimension_numbers = #tpu.dot_dimension_numbers<[1], [0], [0], [1], [0, 0, 1, 1], [], []>} : vector<8x32xbf16>, vector<32x256xbf16>, vector<8x256xf32> -> vector<8x256xf32>
    %262 = vector.extract_strided_slice %7 {offsets = [5, 0, 0], sizes = [1, 8, 128], strides = [1, 1, 1]} : vector<8x8x128xf32> to vector<1x8x128xf32>
    %263 = vector.shape_cast %262 : vector<1x8x128xf32> to vector<8x128xf32>
    %264 = vector.extract_strided_slice %261 {offsets = [0, 0], sizes = [8, 128], strides = [1, 1]} : vector<8x256xf32> to vector<8x128xf32>
    %265 = arith.addf %263, %264 : vector<8x128xf32>
    %266 = math.tanh %265 : vector<8x128xf32>
    %267 = vector.extract_strided_slice %266 {offsets = [0, 0], sizes = [8, 32], strides = [1, 1]} : vector<8x128xf32> to vector<8x32xf32>
    %cst_78 = arith.constant 5.000000e-01 : f32
    %268 = vector.broadcast %cst_78 : f32 to vector<8x32xf32>
    %269 = arith.mulf %268, %267 : vector<8x32xf32>
    %cst_79 = arith.constant 5.000000e-01 : f32
    %270 = vector.broadcast %cst_79 : f32 to vector<8x32xf32>
    %271 = arith.addf %270, %269 : vector<8x32xf32>
    %272 = vector.extract_strided_slice %266 {offsets = [0, 32], sizes = [8, 32], strides = [1, 1]} : vector<8x128xf32> to vector<8x32xf32>
    %cst_80 = arith.constant 5.000000e-01 : f32
    %273 = vector.broadcast %cst_80 : f32 to vector<8x32xf32>
    %274 = arith.mulf %273, %272 : vector<8x32xf32>
    %cst_81 = arith.constant 5.000000e-01 : f32
    %275 = vector.broadcast %cst_81 : f32 to vector<8x32xf32>
    %276 = arith.addf %275, %274 : vector<8x32xf32>
    %277 = vector.extract_strided_slice %266 {offsets = [0, 64], sizes = [8, 32], strides = [1, 1]} : vector<8x128xf32> to vector<8x32xf32>
    %278 = vector.extract_strided_slice %266 {offsets = [0, 96], sizes = [8, 32], strides = [1, 1]} : vector<8x128xf32> to vector<8x32xf32>
    %cst_82 = arith.constant 5.000000e-01 : f32
    %279 = vector.broadcast %cst_82 : f32 to vector<8x32xf32>
    %280 = arith.mulf %279, %278 : vector<8x32xf32>
    %cst_83 = arith.constant 5.000000e-01 : f32
    %281 = vector.broadcast %cst_83 : f32 to vector<8x32xf32>
    %282 = arith.addf %281, %280 : vector<8x32xf32>
    %283 = arith.mulf %276, %230 : vector<8x32xf32>
    %284 = arith.mulf %271, %277 : vector<8x32xf32>
    %285 = arith.addf %283, %284 : vector<8x32xf32>
    %286 = math.tanh %285 : vector<8x32xf32>
    %287 = arith.mulf %282, %286 : vector<8x32xf32>
    %288 = vector.extract_strided_slice %261 {offsets = [0, 128], sizes = [8, 128], strides = [1, 1]} : vector<8x256xf32> to vector<8x128xf32>
    %289 = arith.addf %12, %288 : vector<8x128xf32>
    %290 = arith.truncf %259 : vector<8x32xf32> to vector<8x32xbf16>
    %cst_84 = arith.constant dense<0.000000e+00> : vector<8x128xf32>
    %291 = tpu.matmul %290, %9, %cst_84 {dimension_numbers = #tpu.dot_dimension_numbers<[1], [0], [0], [1], [0, 0, 1, 1], [], []>} : vector<8x32xbf16>, vector<32x128xbf16>, vector<8x128xf32> -> vector<8x128xf32>
    %292 = arith.addf %289, %291 : vector<8x128xf32>
    %293 = math.tanh %292 : vector<8x128xf32>
    %294 = vector.extract_strided_slice %293 {offsets = [0, 0], sizes = [8, 32], strides = [1, 1]} : vector<8x128xf32> to vector<8x32xf32>
    %cst_85 = arith.constant 5.000000e-01 : f32
    %295 = vector.broadcast %cst_85 : f32 to vector<8x32xf32>
    %296 = arith.mulf %295, %294 : vector<8x32xf32>
    %cst_86 = arith.constant 5.000000e-01 : f32
    %297 = vector.broadcast %cst_86 : f32 to vector<8x32xf32>
    %298 = arith.addf %297, %296 : vector<8x32xf32>
    %299 = vector.extract_strided_slice %293 {offsets = [0, 32], sizes = [8, 32], strides = [1, 1]} : vector<8x128xf32> to vector<8x32xf32>
    %cst_87 = arith.constant 5.000000e-01 : f32
    %300 = vector.broadcast %cst_87 : f32 to vector<8x32xf32>
    %301 = arith.mulf %300, %299 : vector<8x32xf32>
    %cst_88 = arith.constant 5.000000e-01 : f32
    %302 = vector.broadcast %cst_88 : f32 to vector<8x32xf32>
    %303 = arith.addf %302, %301 : vector<8x32xf32>
    %304 = vector.extract_strided_slice %293 {offsets = [0, 64], sizes = [8, 32], strides = [1, 1]} : vector<8x128xf32> to vector<8x32xf32>
    %305 = vector.extract_strided_slice %293 {offsets = [0, 96], sizes = [8, 32], strides = [1, 1]} : vector<8x128xf32> to vector<8x32xf32>
    %cst_89 = arith.constant 5.000000e-01 : f32
    %306 = vector.broadcast %cst_89 : f32 to vector<8x32xf32>
    %307 = arith.mulf %306, %305 : vector<8x32xf32>
    %cst_90 = arith.constant 5.000000e-01 : f32
    %308 = vector.broadcast %cst_90 : f32 to vector<8x32xf32>
    %309 = arith.addf %308, %307 : vector<8x32xf32>
    %310 = arith.mulf %303, %257 : vector<8x32xf32>
    %311 = arith.mulf %298, %304 : vector<8x32xf32>
    %312 = arith.addf %310, %311 : vector<8x32xf32>
    %313 = math.tanh %312 : vector<8x32xf32>
    %314 = arith.mulf %309, %313 : vector<8x32xf32>
    %315 = arith.truncf %287 : vector<8x32xf32> to vector<8x32xbf16>
    %cst_91 = arith.constant dense<0.000000e+00> : vector<8x256xf32>
    %316 = tpu.matmul %315, %8, %cst_91 {dimension_numbers = #tpu.dot_dimension_numbers<[1], [0], [0], [1], [0, 0, 1, 1], [], []>} : vector<8x32xbf16>, vector<32x256xbf16>, vector<8x256xf32> -> vector<8x256xf32>
    %317 = vector.extract_strided_slice %7 {offsets = [6, 0, 0], sizes = [1, 8, 128], strides = [1, 1, 1]} : vector<8x8x128xf32> to vector<1x8x128xf32>
    %318 = vector.shape_cast %317 : vector<1x8x128xf32> to vector<8x128xf32>
    %319 = vector.extract_strided_slice %316 {offsets = [0, 0], sizes = [8, 128], strides = [1, 1]} : vector<8x256xf32> to vector<8x128xf32>
    %320 = arith.addf %318, %319 : vector<8x128xf32>
    %321 = math.tanh %320 : vector<8x128xf32>
    %322 = vector.extract_strided_slice %321 {offsets = [0, 0], sizes = [8, 32], strides = [1, 1]} : vector<8x128xf32> to vector<8x32xf32>
    %cst_92 = arith.constant 5.000000e-01 : f32
    %323 = vector.broadcast %cst_92 : f32 to vector<8x32xf32>
    %324 = arith.mulf %323, %322 : vector<8x32xf32>
    %cst_93 = arith.constant 5.000000e-01 : f32
    %325 = vector.broadcast %cst_93 : f32 to vector<8x32xf32>
    %326 = arith.addf %325, %324 : vector<8x32xf32>
    %327 = vector.extract_strided_slice %321 {offsets = [0, 32], sizes = [8, 32], strides = [1, 1]} : vector<8x128xf32> to vector<8x32xf32>
    %cst_94 = arith.constant 5.000000e-01 : f32
    %328 = vector.broadcast %cst_94 : f32 to vector<8x32xf32>
    %329 = arith.mulf %328, %327 : vector<8x32xf32>
    %cst_95 = arith.constant 5.000000e-01 : f32
    %330 = vector.broadcast %cst_95 : f32 to vector<8x32xf32>
    %331 = arith.addf %330, %329 : vector<8x32xf32>
    %332 = vector.extract_strided_slice %321 {offsets = [0, 64], sizes = [8, 32], strides = [1, 1]} : vector<8x128xf32> to vector<8x32xf32>
    %333 = vector.extract_strided_slice %321 {offsets = [0, 96], sizes = [8, 32], strides = [1, 1]} : vector<8x128xf32> to vector<8x32xf32>
    %cst_96 = arith.constant 5.000000e-01 : f32
    %334 = vector.broadcast %cst_96 : f32 to vector<8x32xf32>
    %335 = arith.mulf %334, %333 : vector<8x32xf32>
    %cst_97 = arith.constant 5.000000e-01 : f32
    %336 = vector.broadcast %cst_97 : f32 to vector<8x32xf32>
    %337 = arith.addf %336, %335 : vector<8x32xf32>
    %338 = arith.mulf %331, %285 : vector<8x32xf32>
    %339 = arith.mulf %326, %332 : vector<8x32xf32>
    %340 = arith.addf %338, %339 : vector<8x32xf32>
    %341 = math.tanh %340 : vector<8x32xf32>
    %342 = arith.mulf %337, %341 : vector<8x32xf32>
    %343 = vector.extract_strided_slice %316 {offsets = [0, 128], sizes = [8, 128], strides = [1, 1]} : vector<8x256xf32> to vector<8x128xf32>
    %344 = arith.addf %12, %343 : vector<8x128xf32>
    %345 = arith.truncf %314 : vector<8x32xf32> to vector<8x32xbf16>
    %cst_98 = arith.constant dense<0.000000e+00> : vector<8x128xf32>
    %346 = tpu.matmul %345, %9, %cst_98 {dimension_numbers = #tpu.dot_dimension_numbers<[1], [0], [0], [1], [0, 0, 1, 1], [], []>} : vector<8x32xbf16>, vector<32x128xbf16>, vector<8x128xf32> -> vector<8x128xf32>
    %347 = arith.addf %344, %346 : vector<8x128xf32>
    %348 = math.tanh %347 : vector<8x128xf32>
    %349 = vector.extract_strided_slice %348 {offsets = [0, 0], sizes = [8, 32], strides = [1, 1]} : vector<8x128xf32> to vector<8x32xf32>
    %cst_99 = arith.constant 5.000000e-01 : f32
    %350 = vector.broadcast %cst_99 : f32 to vector<8x32xf32>
    %351 = arith.mulf %350, %349 : vector<8x32xf32>
    %cst_100 = arith.constant 5.000000e-01 : f32
    %352 = vector.broadcast %cst_100 : f32 to vector<8x32xf32>
    %353 = arith.addf %352, %351 : vector<8x32xf32>
    %354 = vector.extract_strided_slice %348 {offsets = [0, 32], sizes = [8, 32], strides = [1, 1]} : vector<8x128xf32> to vector<8x32xf32>
    %cst_101 = arith.constant 5.000000e-01 : f32
    %355 = vector.broadcast %cst_101 : f32 to vector<8x32xf32>
    %356 = arith.mulf %355, %354 : vector<8x32xf32>
    %cst_102 = arith.constant 5.000000e-01 : f32
    %357 = vector.broadcast %cst_102 : f32 to vector<8x32xf32>
    %358 = arith.addf %357, %356 : vector<8x32xf32>
    %359 = vector.extract_strided_slice %348 {offsets = [0, 64], sizes = [8, 32], strides = [1, 1]} : vector<8x128xf32> to vector<8x32xf32>
    %360 = vector.extract_strided_slice %348 {offsets = [0, 96], sizes = [8, 32], strides = [1, 1]} : vector<8x128xf32> to vector<8x32xf32>
    %cst_103 = arith.constant 5.000000e-01 : f32
    %361 = vector.broadcast %cst_103 : f32 to vector<8x32xf32>
    %362 = arith.mulf %361, %360 : vector<8x32xf32>
    %cst_104 = arith.constant 5.000000e-01 : f32
    %363 = vector.broadcast %cst_104 : f32 to vector<8x32xf32>
    %364 = arith.addf %363, %362 : vector<8x32xf32>
    %365 = arith.mulf %358, %312 : vector<8x32xf32>
    %366 = arith.mulf %353, %359 : vector<8x32xf32>
    %367 = arith.addf %365, %366 : vector<8x32xf32>
    %368 = math.tanh %367 : vector<8x32xf32>
    %369 = arith.mulf %364, %368 : vector<8x32xf32>
    %370 = arith.truncf %342 : vector<8x32xf32> to vector<8x32xbf16>
    %cst_105 = arith.constant dense<0.000000e+00> : vector<8x256xf32>
    %371 = tpu.matmul %370, %8, %cst_105 {dimension_numbers = #tpu.dot_dimension_numbers<[1], [0], [0], [1], [0, 0, 1, 1], [], []>} : vector<8x32xbf16>, vector<32x256xbf16>, vector<8x256xf32> -> vector<8x256xf32>
    %372 = vector.extract_strided_slice %7 {offsets = [7, 0, 0], sizes = [1, 8, 128], strides = [1, 1, 1]} : vector<8x8x128xf32> to vector<1x8x128xf32>
    %373 = vector.shape_cast %372 : vector<1x8x128xf32> to vector<8x128xf32>
    %374 = vector.extract_strided_slice %371 {offsets = [0, 0], sizes = [8, 128], strides = [1, 1]} : vector<8x256xf32> to vector<8x128xf32>
    %375 = arith.addf %373, %374 : vector<8x128xf32>
    %376 = math.tanh %375 : vector<8x128xf32>
    %377 = vector.extract_strided_slice %376 {offsets = [0, 0], sizes = [8, 32], strides = [1, 1]} : vector<8x128xf32> to vector<8x32xf32>
    %cst_106 = arith.constant 5.000000e-01 : f32
    %378 = vector.broadcast %cst_106 : f32 to vector<8x32xf32>
    %379 = arith.mulf %378, %377 : vector<8x32xf32>
    %cst_107 = arith.constant 5.000000e-01 : f32
    %380 = vector.broadcast %cst_107 : f32 to vector<8x32xf32>
    %381 = arith.addf %380, %379 : vector<8x32xf32>
    %382 = vector.extract_strided_slice %376 {offsets = [0, 32], sizes = [8, 32], strides = [1, 1]} : vector<8x128xf32> to vector<8x32xf32>
    %cst_108 = arith.constant 5.000000e-01 : f32
    %383 = vector.broadcast %cst_108 : f32 to vector<8x32xf32>
    %384 = arith.mulf %383, %382 : vector<8x32xf32>
    %cst_109 = arith.constant 5.000000e-01 : f32
    %385 = vector.broadcast %cst_109 : f32 to vector<8x32xf32>
    %386 = arith.addf %385, %384 : vector<8x32xf32>
    %387 = vector.extract_strided_slice %376 {offsets = [0, 64], sizes = [8, 32], strides = [1, 1]} : vector<8x128xf32> to vector<8x32xf32>
    %388 = vector.extract_strided_slice %376 {offsets = [0, 96], sizes = [8, 32], strides = [1, 1]} : vector<8x128xf32> to vector<8x32xf32>
    %cst_110 = arith.constant 5.000000e-01 : f32
    %389 = vector.broadcast %cst_110 : f32 to vector<8x32xf32>
    %390 = arith.mulf %389, %388 : vector<8x32xf32>
    %cst_111 = arith.constant 5.000000e-01 : f32
    %391 = vector.broadcast %cst_111 : f32 to vector<8x32xf32>
    %392 = arith.addf %391, %390 : vector<8x32xf32>
    %393 = arith.mulf %386, %340 : vector<8x32xf32>
    %394 = arith.mulf %381, %387 : vector<8x32xf32>
    %395 = arith.addf %393, %394 : vector<8x32xf32>
    %396 = math.tanh %395 : vector<8x32xf32>
    %397 = arith.mulf %392, %396 : vector<8x32xf32>
    %398 = vector.extract_strided_slice %371 {offsets = [0, 128], sizes = [8, 128], strides = [1, 1]} : vector<8x256xf32> to vector<8x128xf32>
    %399 = arith.addf %12, %398 : vector<8x128xf32>
    %400 = arith.truncf %369 : vector<8x32xf32> to vector<8x32xbf16>
    %cst_112 = arith.constant dense<0.000000e+00> : vector<8x128xf32>
    %401 = tpu.matmul %400, %9, %cst_112 {dimension_numbers = #tpu.dot_dimension_numbers<[1], [0], [0], [1], [0, 0, 1, 1], [], []>} : vector<8x32xbf16>, vector<32x128xbf16>, vector<8x128xf32> -> vector<8x128xf32>
    %402 = arith.addf %399, %401 : vector<8x128xf32>
    %403 = math.tanh %402 : vector<8x128xf32>
    %404 = vector.extract_strided_slice %403 {offsets = [0, 0], sizes = [8, 32], strides = [1, 1]} : vector<8x128xf32> to vector<8x32xf32>
    %cst_113 = arith.constant 5.000000e-01 : f32
    %405 = vector.broadcast %cst_113 : f32 to vector<8x32xf32>
    %406 = arith.mulf %405, %404 : vector<8x32xf32>
    %cst_114 = arith.constant 5.000000e-01 : f32
    %407 = vector.broadcast %cst_114 : f32 to vector<8x32xf32>
    %408 = arith.addf %407, %406 : vector<8x32xf32>
    %409 = vector.extract_strided_slice %403 {offsets = [0, 32], sizes = [8, 32], strides = [1, 1]} : vector<8x128xf32> to vector<8x32xf32>
    %cst_115 = arith.constant 5.000000e-01 : f32
    %410 = vector.broadcast %cst_115 : f32 to vector<8x32xf32>
    %411 = arith.mulf %410, %409 : vector<8x32xf32>
    %cst_116 = arith.constant 5.000000e-01 : f32
    %412 = vector.broadcast %cst_116 : f32 to vector<8x32xf32>
    %413 = arith.addf %412, %411 : vector<8x32xf32>
    %414 = vector.extract_strided_slice %403 {offsets = [0, 64], sizes = [8, 32], strides = [1, 1]} : vector<8x128xf32> to vector<8x32xf32>
    %415 = vector.extract_strided_slice %403 {offsets = [0, 96], sizes = [8, 32], strides = [1, 1]} : vector<8x128xf32> to vector<8x32xf32>
    %cst_117 = arith.constant 5.000000e-01 : f32
    %416 = vector.broadcast %cst_117 : f32 to vector<8x32xf32>
    %417 = arith.mulf %416, %415 : vector<8x32xf32>
    %cst_118 = arith.constant 5.000000e-01 : f32
    %418 = vector.broadcast %cst_118 : f32 to vector<8x32xf32>
    %419 = arith.addf %418, %417 : vector<8x32xf32>
    %420 = arith.mulf %413, %367 : vector<8x32xf32>
    %421 = arith.mulf %408, %414 : vector<8x32xf32>
    %422 = arith.addf %420, %421 : vector<8x32xf32>
    %423 = math.tanh %422 : vector<8x32xf32>
    %424 = arith.mulf %419, %423 : vector<8x32xf32>
    %425 = arith.truncf %397 : vector<8x32xf32> to vector<8x32xbf16>
    %cst_119 = arith.constant dense<0.000000e+00> : vector<8x256xf32>
    %426 = tpu.matmul %425, %8, %cst_119 {dimension_numbers = #tpu.dot_dimension_numbers<[1], [0], [0], [1], [0, 0, 1, 1], [], []>} : vector<8x32xbf16>, vector<32x256xbf16>, vector<8x256xf32> -> vector<8x256xf32>
    %427 = vector.extract_strided_slice %426 {offsets = [0, 128], sizes = [8, 128], strides = [1, 1]} : vector<8x256xf32> to vector<8x128xf32>
    %428 = arith.addf %12, %427 : vector<8x128xf32>
    %429 = arith.truncf %424 : vector<8x32xf32> to vector<8x32xbf16>
    %cst_120 = arith.constant dense<0.000000e+00> : vector<8x128xf32>
    %430 = tpu.matmul %429, %9, %cst_120 {dimension_numbers = #tpu.dot_dimension_numbers<[1], [0], [0], [1], [0, 0, 1, 1], [], []>} : vector<8x32xbf16>, vector<32x128xbf16>, vector<8x128xf32> -> vector<8x128xf32>
    %431 = arith.addf %428, %430 : vector<8x128xf32>
    %432 = math.tanh %431 : vector<8x128xf32>
    %433 = vector.extract_strided_slice %432 {offsets = [0, 0], sizes = [8, 32], strides = [1, 1]} : vector<8x128xf32> to vector<8x32xf32>
    %cst_121 = arith.constant 5.000000e-01 : f32
    %434 = vector.broadcast %cst_121 : f32 to vector<8x32xf32>
    %435 = arith.mulf %434, %433 : vector<8x32xf32>
    %cst_122 = arith.constant 5.000000e-01 : f32
    %436 = vector.broadcast %cst_122 : f32 to vector<8x32xf32>
    %437 = arith.addf %436, %435 : vector<8x32xf32>
    %438 = vector.extract_strided_slice %432 {offsets = [0, 32], sizes = [8, 32], strides = [1, 1]} : vector<8x128xf32> to vector<8x32xf32>
    %cst_123 = arith.constant 5.000000e-01 : f32
    %439 = vector.broadcast %cst_123 : f32 to vector<8x32xf32>
    %440 = arith.mulf %439, %438 : vector<8x32xf32>
    %cst_124 = arith.constant 5.000000e-01 : f32
    %441 = vector.broadcast %cst_124 : f32 to vector<8x32xf32>
    %442 = arith.addf %441, %440 : vector<8x32xf32>
    %443 = vector.extract_strided_slice %432 {offsets = [0, 64], sizes = [8, 32], strides = [1, 1]} : vector<8x128xf32> to vector<8x32xf32>
    %444 = vector.extract_strided_slice %432 {offsets = [0, 96], sizes = [8, 32], strides = [1, 1]} : vector<8x128xf32> to vector<8x32xf32>
    %cst_125 = arith.constant 5.000000e-01 : f32
    %445 = vector.broadcast %cst_125 : f32 to vector<8x32xf32>
    %446 = arith.mulf %445, %444 : vector<8x32xf32>
    %cst_126 = arith.constant 5.000000e-01 : f32
    %447 = vector.broadcast %cst_126 : f32 to vector<8x32xf32>
    %448 = arith.addf %447, %446 : vector<8x32xf32>
    %449 = arith.mulf %442, %422 : vector<8x32xf32>
    %450 = arith.mulf %437, %443 : vector<8x32xf32>
    %451 = arith.addf %449, %450 : vector<8x32xf32>
    %452 = math.tanh %451 : vector<8x32xf32>
    %453 = arith.mulf %448, %452 : vector<8x32xf32>
    %454 = vector.shape_cast %94 : vector<8x32xf32> to vector<1x8x32xf32>
    %455 = vector.shape_cast %149 : vector<8x32xf32> to vector<1x8x32xf32>
    %456 = vector.shape_cast %204 : vector<8x32xf32> to vector<1x8x32xf32>
    %457 = vector.shape_cast %259 : vector<8x32xf32> to vector<1x8x32xf32>
    %458 = vector.shape_cast %314 : vector<8x32xf32> to vector<1x8x32xf32>
    %459 = vector.shape_cast %369 : vector<8x32xf32> to vector<1x8x32xf32>
    %460 = vector.shape_cast %424 : vector<8x32xf32> to vector<1x8x32xf32>
    %461 = vector.shape_cast %453 : vector<8x32xf32> to vector<1x8x32xf32>
    %462 = tpu.concatenate %454, %455, %456, %457, %458, %459, %460, %461 in 0 : vector<1x8x32xf32>, vector<1x8x32xf32>, vector<1x8x32xf32>, vector<1x8x32xf32>, vector<1x8x32xf32>, vector<1x8x32xf32>, vector<1x8x32xf32>, vector<1x8x32xf32> -> vector<8x8x32xf32>
    %463 = vector.shape_cast %462 : vector<8x8x32xf32> to vector<64x32xf32>
    %c0_127 = arith.constant 0 : index
    %c0_128 = arith.constant 0 : index
    %464 = vector.load %arg6[%c0_127, %c0_128] : memref<32x96xf32, #tpu.memory_space<vmem>>, vector<32x96xf32>
    %cst_129 = arith.constant dense<0.000000e+00> : vector<64x96xf32>
    %465 = tpu.matmul %463, %464, %cst_129 {dimension_numbers = #tpu.dot_dimension_numbers<[1], [0], [0], [1], [0, 0, 1, 1], [], []>} : vector<64x32xf32>, vector<32x96xf32>, vector<64x96xf32> -> vector<64x96xf32>
    %c0_130 = arith.constant 0 : index
    %c0_131 = arith.constant 0 : index
    %466 = vector.load %arg7[%c0_130, %c0_131] : memref<1x96xf32, #tpu.memory_space<vmem>>, vector<1x96xf32>
    %467 = vector.broadcast %466 : vector<1x96xf32> to vector<64x96xf32>
    %468 = arith.addf %465, %467 : vector<64x96xf32>
    %469 = vector.shape_cast %468 : vector<64x96xf32> to vector<8x8x96xf32>
    %470 = vector.extract_strided_slice %469 {offsets = [7, 0, 0], sizes = [1, 8, 32], strides = [1, 1, 1]} : vector<8x8x96xf32> to vector<1x8x32xf32>
    %471 = vector.shape_cast %470 : vector<1x8x32xf32> to vector<8x32xf32>
    %472 = vector.extract_strided_slice %469 {offsets = [0, 0, 32], sizes = [8, 8, 32], strides = [1, 1, 1]} : vector<8x8x96xf32> to vector<8x8x32xf32>
    %473 = vector.extract_strided_slice %469 {offsets = [0, 0, 64], sizes = [8, 8, 32], strides = [1, 1, 1]} : vector<8x8x96xf32> to vector<8x8x32xf32>
    %474 = vector.shape_cast %471 : vector<8x32xf32> to vector<1x8x32xf32>
    %475 = vector.broadcast %474 : vector<1x8x32xf32> to vector<8x8x32xf32>
    %476 = arith.mulf %475, %472 : vector<8x8x32xf32>
    %477 = vector.shape_cast %476 : vector<8x8x32xf32> to vector<64x32xf32>
    %c0_132 = arith.constant 0 : index
    %c0_133 = arith.constant 0 : index
    %478 = vector.load %arg10[%c0_132, %c0_133] : memref<32x4xf32, #tpu.memory_space<vmem>>, vector<32x4xf32>
    %cst_134 = arith.constant dense<0.000000e+00> : vector<64x4xf32>
    %479 = tpu.matmul %477, %478, %cst_134 {dimension_numbers = #tpu.dot_dimension_numbers<[1], [0], [0], [1], [0, 0, 1, 1], [], []>} : vector<64x32xf32>, vector<32x4xf32>, vector<64x4xf32> -> vector<64x4xf32>
    %cst_135 = arith.constant 0.353553385 : f32
    %480 = vector.broadcast %cst_135 : f32 to vector<64x4xf32>
    %481 = arith.mulf %479, %480 : vector<64x4xf32>
    %482 = vector.shape_cast %481 : vector<64x4xf32> to vector<8x8x4xf32>
    %cst_136 = arith.constant dense<0xFF800000> : vector<8x4xf32>
    %483 = vector.multi_reduction <maximumf>, %482, %cst_136 [0] : vector<8x8x4xf32> to vector<8x4xf32>
    %484 = vector.shape_cast %483 : vector<8x4xf32> to vector<1x8x4xf32>
    %485 = vector.broadcast %484 : vector<1x8x4xf32> to vector<8x8x4xf32>
    %486 = arith.subf %482, %485 : vector<8x8x4xf32>
    %487 = math.exp %486 : vector<8x8x4xf32>
    %cst_137 = arith.constant dense<0.000000e+00> : vector<8x4xf32>
    %488 = vector.multi_reduction <add>, %487, %cst_137 [0] : vector<8x8x4xf32> to vector<8x4xf32>
    %489 = vector.shape_cast %488 : vector<8x4xf32> to vector<1x8x4xf32>
    %490 = vector.broadcast %489 : vector<1x8x4xf32> to vector<8x8x4xf32>
    %491 = arith.divf %487, %490 : vector<8x8x4xf32>
    %492 = vector.shape_cast %491 : vector<8x8x4xf32> to vector<64x4xf32>
    %c0_138 = arith.constant 0 : index
    %c0_139 = arith.constant 0 : index
    %493 = vector.load %arg11[%c0_138, %c0_139] : memref<4x32xf32, #tpu.memory_space<vmem>>, vector<4x32xf32>
    %cst_140 = arith.constant dense<0.000000e+00> : vector<64x32xf32>
    %494 = tpu.matmul %492, %493, %cst_140 {dimension_numbers = #tpu.dot_dimension_numbers<[1], [0], [0], [1], [0, 0, 1, 1], [], []>} : vector<64x4xf32>, vector<4x32xf32>, vector<64x32xf32> -> vector<64x32xf32>
    %495 = vector.shape_cast %494 : vector<64x32xf32> to vector<8x8x32xf32>
    %496 = arith.mulf %495, %473 : vector<8x8x32xf32>
    %cst_141 = arith.constant dense<0.000000e+00> : vector<8x32xf32>
    %497 = vector.multi_reduction <add>, %496, %cst_141 [0] : vector<8x8x32xf32> to vector<8x32xf32>
    %c0_142 = arith.constant 0 : index
    %c0_143 = arith.constant 0 : index
    %498 = vector.load %arg8[%c0_142, %c0_143] : memref<32x32xf32, #tpu.memory_space<vmem>>, vector<32x32xf32>
    %cst_144 = arith.constant dense<0.000000e+00> : vector<8x32xf32>
    %499 = tpu.matmul %497, %498, %cst_144 {dimension_numbers = #tpu.dot_dimension_numbers<[1], [0], [0], [1], [0, 0, 1, 1], [], []>} : vector<8x32xf32>, vector<32x32xf32>, vector<8x32xf32> -> vector<8x32xf32>
    %c0_145 = arith.constant 0 : index
    %c0_146 = arith.constant 0 : index
    %500 = vector.load %arg9[%c0_145, %c0_146] : memref<1x32xf32, #tpu.memory_space<vmem>>, vector<1x32xf32>
    %501 = vector.broadcast %500 : vector<1x32xf32> to vector<8x32xf32>
    %502 = arith.addf %499, %501 : vector<8x32xf32>
    %c0_147 = arith.constant 0 : index
    %c0_148 = arith.constant 0 : index
    %503 = vector.load %arg12[%c0_147, %c0_148] : memref<32x16xf32, #tpu.memory_space<vmem>>, vector<32x16xf32>
    %cst_149 = arith.constant dense<0.000000e+00> : vector<8x16xf32>
    %504 = tpu.matmul %502, %503, %cst_149 {dimension_numbers = #tpu.dot_dimension_numbers<[1], [0], [0], [1], [0, 0, 1, 1], [], []>} : vector<8x32xf32>, vector<32x16xf32>, vector<8x16xf32> -> vector<8x16xf32>
    %c0_150 = arith.constant 0 : index
    %c0_151 = arith.constant 0 : index
    %505 = vector.load %arg13[%c0_150, %c0_151] : memref<1x16xf32, #tpu.memory_space<vmem>>, vector<1x16xf32>
    %506 = vector.broadcast %505 : vector<1x16xf32> to vector<8x16xf32>
    %507 = arith.addf %504, %506 : vector<8x16xf32>
    %cst_152 = arith.constant 0.000000e+00 : f32
    %508 = vector.broadcast %cst_152 : f32 to vector<8x16xf32>
    %509 = arith.maximumf %507, %508 : vector<8x16xf32>
    %c0_153 = arith.constant 0 : index
    %c0_154 = arith.constant 0 : index
    %510 = vector.load %arg14[%c0_153, %c0_154] : memref<16x128xf32, #tpu.memory_space<vmem>>, vector<16x128xf32>
    %cst_155 = arith.constant dense<0.000000e+00> : vector<8x128xf32>
    %511 = tpu.matmul %509, %510, %cst_155 {dimension_numbers = #tpu.dot_dimension_numbers<[1], [0], [0], [1], [0, 0, 1, 1], [], []>} : vector<8x16xf32>, vector<16x128xf32>, vector<8x128xf32> -> vector<8x128xf32>
    %c0_156 = arith.constant 0 : index
    %c0_157 = arith.constant 0 : index
    %512 = vector.load %arg15[%c0_156, %c0_157] : memref<1x128xf32, #tpu.memory_space<vmem>>, vector<1x128xf32>
    %513 = vector.broadcast %512 : vector<1x128xf32> to vector<8x128xf32>
    %514 = arith.addf %511, %513 : vector<8x128xf32>
    %c0_158 = arith.constant 0 : index
    %c0_159 = arith.constant 0 : index
    %515 = vector.load %arg16[%c0_158, %c0_159] : memref<8x128xf32, #tpu.memory_space<vmem>>, vector<8x128xf32>
    tpu.vector_store %arg16[%c0_158, %c0_159], %514 {strides = array<i32>} : memref<8x128xf32, #tpu.memory_space<vmem>>, vector<8x128xf32>,
    return
  }
}

</mosaic_0001>

<llo_original>
// kernel: tpu_custom_call.1
$region0: #{tpu_custom_call.1}
  #allocation0 [shape = 'u32[]', space=smem, size = 0x4, offset = 0x4, fixed_abs, tag = 'smem constant byte address 0x4 - core index']
  #allocation1 [shape = 'u32[144,128]{1,0:T(1,128)}', space=vmem, size = 0x12000, scoped, tag = 'internal scratch']
  %s0 = inlined_call_operand.vmem [shape: f32[8,8,16], index: 0, kind: input, shape index: {}]
  %s1 = inlined_call_operand.hbm [shape: f32[16,128], index: 1, kind: input, shape index: {}]
  %s2 = inlined_call_operand.vmem [shape: f32[1,128], index: 2, kind: input, shape index: {}]
  %s3 = inlined_call_operand.hbm [shape: bf16[32,256], index: 3, kind: input, shape index: {}]
  %s4 = inlined_call_operand.hbm [shape: bf16[32,128], index: 4, kind: input, shape index: {}]
  %s5 = inlined_call_operand.hbm [shape: f32[1,128], index: 5, kind: input, shape index: {}]
  %s6 = inlined_call_operand.vmem [shape: f32[32,96], index: 6, kind: input, shape index: {}]
  %s7 = inlined_call_operand.hbm [shape: f32[1,96], index: 7, kind: input, shape index: {}]
  %s8 = inlined_call_operand.hbm [shape: f32[32,32], index: 8, kind: input, shape index: {}]
  %s9 = inlined_call_operand.hbm [shape: f32[1,32], index: 9, kind: input, shape index: {}]
  %s10 = inlined_call_operand.vmem [shape: f32[32,4], index: 10, kind: input, shape index: {}]
  %s11 = inlined_call_operand.hbm [shape: f32[4,32], index: 11, kind: input, shape index: {}]
  %s12 = inlined_call_operand.vmem [shape: f32[32,16], index: 12, kind: input, shape index: {}]
  %s13 = inlined_call_operand.vmem [shape: f32[1,16], index: 13, kind: input, shape index: {}]
  %s14 = inlined_call_operand.vmem [shape: f32[16,128], index: 14, kind: input, shape index: {}]
  %s15 = inlined_call_operand.vmem [shape: f32[1,128], index: 15, kind: input, shape index: {}]
  %s16 = inlined_call_operand.hbm [shape: f32[8,128], index: 16, kind: output, shape index: {}]
  %s17 = sld [smem:[#allocation0]]
  $region106: #{tpu_custom_call.1} parent=0
    _
  %s19 = ssub.s32 1, %s17
  %s20 = scalar_select 0, %s19, %s17
  $region1: #{tpu_custom_call.1} parent=0
    #allocation2 [shape = 'u8[8192]{0}', space=vmem, size = 0x2000, scoped, tag = 'input window, operand 1, single buffered']
    #allocation3 [shape = 's32[1]{0}', space=sflag, size = 0x4, scoped, tag = 'scoped memory for tpu_custom_call.1']
    #allocation4 [shape = 's32[1]{0}', space=sflag, size = 0x4, scoped, tag = 'scoped memory for tpu_custom_call.1']
    #allocation5 [shape = 'u8[16384]{0}', space=vmem, size = 0x4000, scoped, tag = 'input window, operand 3, single buffered']
    #allocation6 [shape = 's32[1]{0}', space=sflag, size = 0x4, scoped, tag = 'scoped memory for tpu_custom_call.1']
    #allocation7 [shape = 'u8[8192]{0}', space=vmem, size = 0x2000, scoped, tag = 'input window, operand 4, single buffered']
    #allocation8 [shape = 'u8[512]{0}', space=vmem, size = 0x400, scoped, tag = 'input window, operand 5, single buffered']
    #allocation9 [shape = 's32[1]{0}', space=sflag, size = 0x4, scoped, tag = 'scoped memory for tpu_custom_call.1']
    #allocation10 [shape = 'u8[512]{0}', space=vmem, size = 0x400, scoped, tag = 'input window, operand 7, single buffered']
    #allocation11 [shape = 'u8[16384]{0}', space=vmem, size = 0x4000, scoped, tag = 'input window, operand 8, single buffered']
    #allocation12 [shape = 's32[1]{0}', space=sflag, size = 0x4, scoped, tag = 'scoped memory for tpu_custom_call.1']
    #allocation13 [shape = 'u8[512]{0}', space=vmem, size = 0x400, scoped, tag = 'input window, operand 9, single buffered']
    #allocation14 [shape = 'u8[2048]{0}', space=vmem, size = 0x800, scoped, tag = 'input window, operand 11, single buffered']
    #allocation15 [shape = 's32[1]{0}', space=sflag, size = 0x4, scoped, tag = 'scoped memory for tpu_custom_call.1']
    #allocation16 [shape = 'u8[4096]{0}', space=vmem, size = 0x1000, scoped, tag = 'output window, operand 0, single buffered']
    %21 = vsyncpa [#allocation3], 0
    %22 = vsyncpa [#allocation6], 0
    %23 = vsyncpa [#allocation9], 0
    %24 = vsyncpa [#allocation12], 0
    %25 = vsyncpa [#allocation15], 0
    %26 = vsyncpa [#allocation4], 0
    // Predicated region
    $region2: #{tpu_custom_call.1} parent=1 // pred_check
      _
    $region3: #{tpu_custom_call.1} parent=1 // pred_check_branch
      %28 = sbr.rel (0) target = $region5
    $region4: #{tpu_custom_call.1} parent=1 // pred_region
      _
    $region5: #{tpu_custom_call.1} parent=1 // pred_fallthru
      _
    // Predicated region
    $region6: #{tpu_custom_call.1} parent=1 // pred_check
      _
    $region7: #{tpu_custom_call.1} parent=1 // pred_check_branch
      %30 = sbr.rel (0) target = $region9
    $region8: #{tpu_custom_call.1} parent=1 // pred_region
      %s32 = ssub.s32 256, 256
      %33 = vsyncadd [#allocation3], %s32
      %s34 = sshll.u32 [#allocation2], 4
      %s35 = int_to_ptr.vmem [resolvable:$true] %s34
      %40 = dma.hbm_to_vmem [thread:$0]  %s1, 256, %s35, [#allocation3], 128, 128, 8
    $region9: #{tpu_custom_call.1} parent=1 // pred_fallthru
      _
    // Predicated region
    $region10: #{tpu_custom_call.1} parent=1 // pred_check
      _
    $region11: #{tpu_custom_call.1} parent=1 // pred_check_branch
      %42 = sbr.rel (0) target = $region13
    $region12: #{tpu_custom_call.1} parent=1 // pred_region
      _
    $region13: #{tpu_custom_call.1} parent=1 // pred_fallthru
      _
    // Predicated region
    $region14: #{tpu_custom_call.1} parent=1 // pred_check
      _
    $region15: #{tpu_custom_call.1} parent=1 // pred_check_branch
      %44 = sbr.rel (0) target = $region17
    $region16: #{tpu_custom_call.1} parent=1 // pred_region
      %s46 = ssub.s32 512, 512
      %47 = vsyncadd [#allocation6], %s46
      %s48 = sshll.u32 [#allocation5], 4
      %s49 = int_to_ptr.vmem [resolvable:$true] %s48
      %54 = dma.hbm_to_vmem [thread:$0]  %s3, 512, %s49, [#allocation6], 128, 128, 8
    $region17: #{tpu_custom_call.1} parent=1 // pred_fallthru
      _
    // Predicated region
    $region18: #{tpu_custom_call.1} parent=1 // pred_check
      _
    $region19: #{tpu_custom_call.1} parent=1 // pred_check_branch
      %56 = sbr.rel (0) target = $region21
    $region20: #{tpu_custom_call.1} parent=1 // pred_region
      %s58 = ssub.s32 256, 256
      %59 = vsyncadd [#allocation6], %s58
      %s60 = sshll.u32 [#allocation7], 4
      %s61 = int_to_ptr.vmem [resolvable:$true] %s60
      %66 = dma.hbm_to_vmem [thread:$0]  %s4, 256, %s61, [#allocation6], 64, 64, 4
    $region21: #{tpu_custom_call.1} parent=1 // pred_fallthru
      _
    // Predicated region
    $region22: #{tpu_custom_call.1} parent=1 // pred_check
      _
    $region23: #{tpu_custom_call.1} parent=1 // pred_check_branch
      %68 = sbr.rel (0) target = $region25
    $region24: #{tpu_custom_call.1} parent=1 // pred_region
      %s70 = ssub.s32 16, 16
      %71 = vsyncadd [#allocation9], %s70
      %s73 = sshll.u32 [#allocation8], 4
      %s74 = int_to_ptr.vmem [resolvable:$true] %s73
      %76 = dma.hbm_to_vmem [thread:$0]  %s5, 16, %s74, [#allocation9]
    $region25: #{tpu_custom_call.1} parent=1 // pred_fallthru
      _
    // Predicated region
    $region26: #{tpu_custom_call.1} parent=1 // pred_check
      _
    $region27: #{tpu_custom_call.1} parent=1 // pred_check_branch
      %78 = sbr.rel (0) target = $region29
    $region28: #{tpu_custom_call.1} parent=1 // pred_region
      _
    $region29: #{tpu_custom_call.1} parent=1 // pred_fallthru
      _
    // Predicated region
    $region30: #{tpu_custom_call.1} parent=1 // pred_check
      _
    $region31: #{tpu_custom_call.1} parent=1 // pred_check_branch
      %80 = sbr.rel (0) target = $region33
    $region32: #{tpu_custom_call.1} parent=1 // pred_region
      %s82 = ssub.s32 16, 16
      %83 = vsyncadd [#allocation9], %s82
      %s85 = sshll.u32 [#allocation10], 4
      %s86 = int_to_ptr.vmem [resolvable:$true] %s85
      %88 = dma.hbm_to_vmem [thread:$0]  %s7, 16, %s86, [#allocation9]
    $region33: #{tpu_custom_call.1} parent=1 // pred_fallthru
      _
    // Predicated region
    $region34: #{tpu_custom_call.1} parent=1 // pred_check
      _
    $region35: #{tpu_custom_call.1} parent=1 // pred_check_branch
      %90 = sbr.rel (0) target = $region37
    $region36: #{tpu_custom_call.1} parent=1 // pred_region
      %s92 = ssub.s32 512, 512
      %93 = vsyncadd [#allocation12], %s92
      %s94 = sshll.u32 [#allocation11], 4
      %s95 = int_to_ptr.vmem [resolvable:$true] %s94
      %100 = dma.hbm_to_vmem [thread:$0]  %s8, 512, %s95, [#allocation12], 128, 128, 8
    $region37: #{tpu_custom_call.1} parent=1 // pred_fallthru
      _
    // Predicated region
    $region38: #{tpu_custom_call.1} parent=1 // pred_check
      _
    $region39: #{tpu_custom_call.1} parent=1 // pred_check_branch
      %102 = sbr.rel (0) target = $region41
    $region40: #{tpu_custom_call.1} parent=1 // pred_region
      %s104 = ssub.s32 16, 16
      %105 = vsyncadd [#allocation12], %s104
      %s107 = sshll.u32 [#allocation13], 4
      %s108 = int_to_ptr.vmem [resolvable:$true] %s107
      %110 = dma.hbm_to_vmem [thread:$0]  %s9, 16, %s108, [#allocation12]
    $region41: #{tpu_custom_call.1} parent=1 // pred_fallthru
      _
    // Predicated region
    $region42: #{tpu_custom_call.1} parent=1 // pred_check
      _
    $region43: #{tpu_custom_call.1} parent=1 // pred_check_branch
      %112 = sbr.rel (0) target = $region45
    $region44: #{tpu_custom_call.1} parent=1 // pred_region
      _
    $region45: #{tpu_custom_call.1} parent=1 // pred_fallthru
      _
    // Predicated region
    $region46: #{tpu_custom_call.1} parent=1 // pred_check
      _
    $region47: #{tpu_custom_call.1} parent=1 // pred_check_branch
      %114 = sbr.rel (0) target = $region49
    $region48: #{tpu_custom_call.1} parent=1 // pred_region
      %s116 = ssub.s32 64, 64
      %117 = vsyncadd [#allocation15], %s116
      %s119 = sshll.u32 [#allocation14], 4
      %s120 = int_to_ptr.vmem [resolvable:$true] %s119
      %122 = dma.hbm_to_vmem [thread:$0]  %s11, 64, %s120, [#allocation15]
    $region49: #{tpu_custom_call.1} parent=1 // pred_fallthru
      _
    // Predicated region
    $region50: #{tpu_custom_call.1} parent=1 // pred_check
      _
    $region51: #{tpu_custom_call.1} parent=1 // pred_check_branch
      %124 = sbr.rel (0) target = $region53
    $region52: #{tpu_custom_call.1} parent=1 // pred_region
      _
    $region53: #{tpu_custom_call.1} parent=1 // pred_fallthru
      _
    // Predicated region
    $region54: #{tpu_custom_call.1} parent=1 // pred_check
      _
    $region55: #{tpu_custom_call.1} parent=1 // pred_check_branch
      %126 = sbr.rel (0) target = $region57
    $region56: #{tpu_custom_call.1} parent=1 // pred_region
      _
    $region57: #{tpu_custom_call.1} parent=1 // pred_fallthru
      _
    // Predicated region
    $region58: #{tpu_custom_call.1} parent=1 // pred_check
      _
    $region59: #{tpu_custom_call.1} parent=1 // pred_check_branch
      %128 = sbr.rel (0) target = $region61
    $region60: #{tpu_custom_call.1} parent=1 // pred_region
      _
    $region61: #{tpu_custom_call.1} parent=1 // pred_fallthru
      _
    // Predicated region
    $region62: #{tpu_custom_call.1} parent=1 // pred_check
      _
    $region63: #{tpu_custom_call.1} parent=1 // pred_check_branch
      %130 = sbr.rel (0) target = $region65
    $region64: #{tpu_custom_call.1} parent=1 // pred_region
      _
    $region65: #{tpu_custom_call.1} parent=1 // pred_fallthru
      _
    // Predicated region
    $region66: #{tpu_custom_call.1} parent=1 // pred_check
      _
    $region67: #{tpu_custom_call.1} parent=1 // pred_check_branch
      %132 = sbr.rel (0) target = $region69
    $region68: #{tpu_custom_call.1} parent=1 // pred_region
      %133 = dma.done [#allocation3], 256
    $region69: #{tpu_custom_call.1} parent=1 // pred_fallthru
      _
    // Predicated region
    $region70: #{tpu_custom_call.1} parent=1 // pred_check
      _
    $region71: #{tpu_custom_call.1} parent=1 // pred_check_branch
      %135 = sbr.rel (0) target = $region73
    $region72: #{tpu_custom_call.1} parent=1 // pred_region
      %136 = dma.done [#allocation6], 512
    $region73: #{tpu_custom_call.1} parent=1 // pred_fallthru
      _
    // Predicated region
    $region74: #{tpu_custom_call.1} parent=1 // pred_check
      _
    $region75: #{tpu_custom_call.1} parent=1 // pred_check_branch
      %138 = sbr.rel (0) target = $region77
    $region76: #{tpu_custom_call.1} parent=1 // pred_region
      %139 = dma.done [#allocation6], 256
    $region77: #{tpu_custom_call.1} parent=1 // pred_fallthru
      _
    // Predicated region
    $region78: #{tpu_custom_call.1} parent=1 // pred_check
      _
    $region79: #{tpu_custom_call.1} parent=1 // pred_check_branch
      %141 = sbr.rel (0) target = $region81
    $region80: #{tpu_custom_call.1} parent=1 // pred_region
      %142 = dma.done [#allocation9], 16
    $region81: #{tpu_custom_call.1} parent=1 // pred_fallthru
      _
    // Predicated region
    $region82: #{tpu_custom_call.1} parent=1 // pred_check
      _
    $region83: #{tpu_custom_call.1} parent=1 // pred_check_branch
      %144 = sbr.rel (0) target = $region85
    $region84: #{tpu_custom_call.1} parent=1 // pred_region
      %145 = dma.done [#allocation9], 16
    $region85: #{tpu_custom_call.1} parent=1 // pred_fallthru
      _
    // Predicated region
    $region86: #{tpu_custom_call.1} parent=1 // pred_check
      _
    $region87: #{tpu_custom_call.1} parent=1 // pred_check_branch
      %147 = sbr.rel (0) target = $region89
    $region88: #{tpu_custom_call.1} parent=1 // pred_region
      %148 = dma.done [#allocation12], 512
    $region89: #{tpu_custom_call.1} parent=1 // pred_fallthru
      _
    // Predicated region
    $region90: #{tpu_custom_call.1} parent=1 // pred_check
      _
    $region91: #{tpu_custom_call.1} parent=1 // pred_check_branch
      %150 = sbr.rel (0) target = $region93
    $region92: #{tpu_custom_call.1} parent=1 // pred_region
      %151 = dma.done [#allocation12], 16
    $region93: #{tpu_custom_call.1} parent=1 // pred_fallthru
      _
    // Predicated region
    $region94: #{tpu_custom_call.1} parent=1 // pred_check
      _
    $region95: #{tpu_custom_call.1} parent=1 // pred_check_branch
      %153 = sbr.rel (0) target = $region97
    $region96: #{tpu_custom_call.1} parent=1 // pred_region
      %154 = dma.done [#allocation15], 64
    $region97: #{tpu_custom_call.1} parent=1 // pred_fallthru
      _
    %v156 = vld [vmem:[%s0] sm:$0xff]
    %v157 = vld [vmem:[%s0 + $0x8] sm:$0xff]
    %v158 = vld [vmem:[%s0 + $0x10] sm:$0xff]
    %v159 = vld [vmem:[%s0 + $0x18] sm:$0xff]
    %v160 = vld [vmem:[%s0 + $0x20] sm:$0xff]
    %v161 = vld [vmem:[%s0 + $0x28] sm:$0xff]
    %v162 = vld [vmem:[%s0 + $0x30] sm:$0xff]
    %v163 = vld [vmem:[%s0 + $0x38] sm:$0xff]
    %v164 = vld [vmem:[#allocation2] sm:$0xff]
    %v165 = vld [vmem:[#allocation2 + $0x8] sm:$0xff]
    %v166 = vld [vmem:[%s2] sm:$0x1]
    %v168 = vlaneseq
    %v169 = vshrl.u32 %v168, 7
    %v170 = vsub.s32 0, %v169
    %v171 = vrot.slane %v166, %v170
    %vm173 = vcmask 130048
    %v175 = vsel %vm173, %v156, 0
    %v178 = vsel %vm173, %v157, 0
    %v181 = vsel %vm173, %v158, 0
    %v184 = vsel %vm173, %v159, 0
    %v187 = vsel %vm173, %v160, 0
    %v190 = vsel %vm173, %v161, 0
    %v193 = vsel %vm173, %v162, 0
    %v196 = vsel %vm173, %v163, 0
    %198 = vmatprep.subr.mxu0 0.0
    %199 = vmatpush1.msra.mxu0 %v164
    %200 = vmatprep.subr.mxu0 0.0
    %201 = vmatpush1.msra.mxu0 %v165
    %202 = vmatprep.subr.mxu0 0.0
    %203 = vmatpush1.msra.mxu0 0.0
    %204 = vmatprep.subr.mxu0 0.0
    %205 = vmatpush1.msra.mxu0 0.0
    %206 = vmatprep.subr.mxu0 0.0
    %207 = vmatpush1.msra.mxu0 0.0
    %208 = vmatprep.subr.mxu0 0.0
    %209 = vmatpush1.msra.mxu0 0.0
    %210 = vmatprep.subr.mxu0 0.0
    %211 = vmatpush1.msra.mxu0 0.0
    %212 = vmatprep.subr.mxu0 0.0
    %213 = vmatpush1.msra.mxu0 0.0
    %214 = vmatprep.subr.mxu0 0.0
    %215 = vmatpush1.msra.mxu0 0.0
    %216 = vmatprep.subr.mxu0 0.0
    %217 = vmatpush1.msra.mxu0 0.0
    %218 = vmatprep.subr.mxu0 0.0
    %219 = vmatpush1.msra.mxu0 0.0
    %220 = vmatprep.subr.mxu0 0.0
    %221 = vmatpush1.msra.mxu0 0.0
    %222 = vmatprep.subr.mxu0 0.0
    %223 = vmatpush1.msra.mxu0 0.0
    %224 = vmatprep.subr.mxu0 0.0
    %225 = vmatpush1.msra.mxu0 0.0
    %226 = vmatprep.subr.mxu0 0.0
    %227 = vmatpush1.msra.mxu0 0.0
    %228 = vmatprep.subr.mxu0 0.0
    %229 = vmatpush1.msra.mxu0 0.0
    %230 = vmatprep.subr.mxu0 0.0
    %231 = vmatpush1.msra.mxu0 0.0
    %232 = vmatprep.subr.mxu0 0.0
    %233 = vmatpush1.msra.mxu0 0.0
    %234 = vmatprep.subr.mxu0 0.0
    %235 = vmatpush1.msra.mxu0 0.0
    %236 = vmatprep.subr.mxu0 0.0
    %237 = vmatpush1.msra.mxu0 0.0
    %238 = vmatprep.subr.mxu0 0.0
    %239 = vmatpush1.msra.mxu0 0.0
    %240 = vmatprep.subr.mxu0 0.0
    %241 = vmatpush1.msra.mxu0 0.0
    %242 = vmatprep.subr.mxu0 0.0
    %243 = vmatpush1.msra.mxu0 0.0
    %244 = vmatprep.subr.mxu0 0.0
    %245 = vmatpush1.msra.mxu0 0.0
    %246 = vmatprep.subr.mxu0 0.0
    %247 = vmatpush1.msra.mxu0 0.0
    %248 = vmatprep.subr.mxu0 0.0
    %249 = vmatpush1.msra.mxu0 0.0
    %250 = vmatprep.subr.mxu0 0.0
    %251 = vmatpush1.msra.mxu0 0.0
    %252 = vmatprep.subr.mxu0 0.0
    %253 = vmatpush1.msra.mxu0 0.0
    %254 = vmatprep.subr.mxu0 0.0
    %255 = vmatpush1.msra.mxu0 0.0
    %256 = vmatprep.subr.mxu0 0.0
    %257 = vmatpush1.msra.mxu0 0.0
    %258 = vmatprep.subr.mxu0 0.0
    %259 = vmatpush1.msra.mxu0 0.0
    %260 = vmatprep.subr.mxu0 0.0
    %261 = vmatpush1.msra.mxu0 0.0
    %262 = vmatprep.mubr.f32.mxu0 0.0
    %263 = vmatmul.mubr.f32.gmra.mrb[0].mxu0 %v175
    %v264 = vpop.f32.mrb[0].mxu0
    %v265 = vadd.f32 %v171, %v264
    %v266 = vpop.f32.mrb[0].mxu0
    %267 = vmatprep.mubr.f32.mxu0 0.0
    %268 = vmatmul.mubr.f32.gmra.mrb[0].mxu0 %v178
    %v269 = vpop.f32.mrb[0].mxu0
    %v270 = vadd.f32 %v171, %v269
    %v271 = vpop.f32.mrb[0].mxu0
    %272 = vmatprep.mubr.f32.mxu0 0.0
    %273 = vmatmul.mubr.f32.gmra.mrb[0].mxu0 %v181
    %v274 = vpop.f32.mrb[0].mxu0
    %v275 = vadd.f32 %v171, %v274
    %v276 = vpop.f32.mrb[0].mxu0
    %277 = vmatprep.mubr.f32.mxu0 0.0
    %278 = vmatmul.mubr.f32.gmra.mrb[0].mxu0 %v184
    %v279 = vpop.f32.mrb[0].mxu0
    %v280 = vadd.f32 %v171, %v279
    %v281 = vpop.f32.mrb[0].mxu0
    %282 = vmatprep.mubr.f32.mxu0 0.0
    %283 = vmatmul.mubr.f32.gmra.mrb[0].mxu0 %v187
    %v284 = vpop.f32.mrb[0].mxu0
    %v285 = vadd.f32 %v171, %v284
    %v286 = vpop.f32.mrb[0].mxu0
    %287 = vmatprep.mubr.f32.mxu0 0.0
    %288 = vmatmul.mubr.f32.gmra.mrb[0].mxu0 %v190
    %v289 = vpop.f32.mrb[0].mxu0
    %v290 = vadd.f32 %v171, %v289
    %v291 = vpop.f32.mrb[0].mxu0
    %292 = vmatprep.mubr.f32.mxu0 0.0
    %293 = vmatmul.mubr.f32.gmra.mrb[0].mxu0 %v193
    %v294 = vpop.f32.mrb[0].mxu0
    %v295 = vadd.f32 %v171, %v294
    %v296 = vpop.f32.mrb[0].mxu0
    %297 = vmatprep.mubr.f32.mxu0 0.0
    %298 = vmatmul.mubr.f32.gmra.mrb[0].mxu0 %v196
    %v299 = vpop.f32.mrb[0].mxu0
    %v300 = vadd.f32 %v171, %v299
    %v301 = vpop.f32.mrb[0].mxu0
    %302 = vdwg.mxu0
    %v303 = vld [vmem:[#allocation5] sm:$0xff]
    %v304 = vld [vmem:[#allocation5 + $0x8] sm:$0xff]
    %v305 = vld [vmem:[#allocation5 + $0x10] sm:$0xff]
    %v306 = vld [vmem:[#allocation5 + $0x18] sm:$0xff]
    %v307 = vld [vmem:[#allocation7] sm:$0xf]
    %v308 = vld [vmem:[#allocation7 + $0x4] sm:$0xf]
    %v309 = vld [vmem:[#allocation7 + $0x8] sm:$0xf]
    %v310 = vld [vmem:[#allocation7 + $0xc] sm:$0xf]
    %v311 = vld [vmem:[#allocation8] sm:$0x1]
    %v313 = vlaneseq
    %v314 = vshrl.u32 %v313, 7
    %v315 = vsub.s32 0, %v314
    %v316 = vrot.slane %v311, %v315
    %v318 = vtanh.pop %v265
    %v319 = vmul.f32 %v318, 0.5
    %v320 = vadd.f32 %v319, 0.5
    %v321 = vmul.f32 %v320, 0.0
    %323 = vrot.lane.b32.xlu0 %v318, 64
    %v324 = vpop.permute.xlu0 %323
    %v326 = vmul.f32 %v320, %v324
    %328 = vrot.lane.b32.xlu0 %v326, 32
    %v329 = vpop.permute.xlu0 %328
    %v331 = vadd.f32 %v321, %v329
    %v332 = vtanh.pop %v331
    %334 = vrot.lane.b32.xlu0 %v332, 64
    %v335 = vpop.permute.xlu0 %334
    %v337 = vmul.f32 %v320, %v335
    %v338 = vpack.c.bf16 %v337, %v337
    %340 = vrot.lane.b32.xlu0 %v338, 32
    %v341 = vpop.permute.xlu0 %340
    %v346 = vunpack.c.l.b16 %v303
    %v347 = vunpack.c.h.b16 %v303
    %v348 = vunpack.c.l.b16 %v304
    %v349 = vunpack.c.h.b16 %v304
    %v350 = vunpack.c.l.b16 %v305
    %v351 = vunpack.c.h.b16 %v305
    %v352 = vunpack.c.l.b16 %v306
    %v353 = vunpack.c.h.b16 %v306
    %v354 = vpack.c.b16 %v348, %v346
    %v355 = vpack.c.b16 %v349, %v347
    %v356 = vpack.c.b16 %v352, %v350
    %v357 = vpack.c.b16 %v353, %v351
    %vm362 = vcmask 261120
    %v364 = vsel %vm362, %v341, 0
    %366 = vmatprep.subr.bf16.mxu0 %v355
    %367 = vmatpush1.bf16.msra.mxu0 %v354
    %368 = vmatprep.subr.bf16.mxu0 %v357
    %369 = vmatpush1.bf16.msra.mxu0 %v356
    %370 = vmatprep.subr.bf16.mxu0 0
    %371 = vmatpush1.bf16.msra.mxu0 0
    %372 = vmatprep.subr.bf16.mxu0 0
    %373 = vmatpush1.bf16.msra.mxu0 0
    %374 = vmatprep.subr.bf16.mxu0 0
    %375 = vmatpush1.bf16.msra.mxu0 0
    %376 = vmatprep.subr.bf16.mxu0 0
    %377 = vmatpush1.bf16.msra.mxu0 0
    %378 = vmatprep.subr.bf16.mxu0 0
    %379 = vmatpush1.bf16.msra.mxu0 0
    %380 = vmatprep.subr.bf16.mxu0 0
    %381 = vmatpush1.bf16.msra.mxu0 0
    %382 = vmatprep.subr.bf16.mxu0 0
    %383 = vmatpush1.bf16.msra.mxu0 0
    %384 = vmatprep.subr.bf16.mxu0 0
    %385 = vmatpush1.bf16.msra.mxu0 0
    %386 = vmatprep.subr.bf16.mxu0 0
    %387 = vmatpush1.bf16.msra.mxu0 0
    %388 = vmatprep.subr.bf16.mxu0 0
    %389 = vmatpush1.bf16.msra.mxu0 0
    %390 = vmatprep.subr.bf16.mxu0 0
    %391 = vmatpush1.bf16.msra.mxu0 0
    %392 = vmatprep.subr.bf16.mxu0 0
    %393 = vmatpush1.bf16.msra.mxu0 0
    %394 = vmatprep.subr.bf16.mxu0 0
    %395 = vmatpush1.bf16.msra.mxu0 0
    %396 = vmatprep.subr.bf16.mxu0 0
    %397 = vmatpush1.bf16.msra.mxu0 0
    %398 = vmatprep.mubr.bf16.mxu0 0
    %399 = vmatmul.mubr.bf16.gmra.mrb[0].mxu0 %v364
    %v400 = vpop.f32.mrb[0].mxu0
    %v401 = vadd.f32 0.0, %v400
    %v402 = vpop.f32.mrb[0].mxu0
    %v403 = vadd.f32 0.0, %v402
    %v404 = vpop.f32.mrb[0].mxu0
    %v405 = vpop.f32.mrb[0].mxu0
    %406 = vdwg.mxu0
    %v407 = vadd.f32 %v270, %v401
    %v408 = vtanh.pop %v407
    %v409 = vmul.f32 %v408, 0.5
    %v410 = vadd.f32 %v409, 0.5
    %v411 = vmul.f32 %v410, %v331
    %413 = vrot.lane.b32.xlu0 %v408, 64
    %v414 = vpop.permute.xlu0 %413
    %v416 = vmul.f32 %v410, %v414
    %418 = vrot.lane.b32.xlu0 %v416, 32
    %v419 = vpop.permute.xlu0 %418
    %v421 = vadd.f32 %v411, %v419
    %v422 = vtanh.pop %v421
    %424 = vrot.lane.b32.xlu0 %v422, 64
    %v425 = vpop.permute.xlu0 %424
    %v427 = vmul.f32 %v410, %v425
    %v428 = vadd.f32 %v316, %v403
    %v433 = vunpack.c.l.b16 %v307
    %v434 = vunpack.c.l.b16 %v308
    %v435 = vunpack.c.l.b16 %v309
    %v436 = vunpack.c.l.b16 %v310
    %v437 = vpack.c.b16 %v434, %v433
    %v438 = vpack.c.b16 %v436, %v435
    %v442 = vsel %vm362, 0, 0
    %444 = vmatprep.subr.bf16.mxu0 0
    %445 = vmatpush1.bf16.msra.mxu0 %v437
    %446 = vmatprep.subr.bf16.mxu0 0
    %447 = vmatpush1.bf16.msra.mxu0 %v438
    %448 = vmatprep.subr.bf16.mxu0 0
    %449 = vmatpush1.bf16.msra.mxu0 0
    %450 = vmatprep.subr.bf16.mxu0 0
    %451 = vmatpush1.bf16.msra.mxu0 0
    %452 = vmatprep.subr.bf16.mxu0 0
    %453 = vmatpush1.bf16.msra.mxu0 0
    %454 = vmatprep.subr.bf16.mxu0 0
    %455 = vmatpush1.bf16.msra.mxu0 0
    %456 = vmatprep.subr.bf16.mxu0 0
    %457 = vmatpush1.bf16.msra.mxu0 0
    %458 = vmatprep.subr.bf16.mxu0 0
    %459 = vmatpush1.bf16.msra.mxu0 0
    %460 = vmatprep.subr.bf16.mxu0 0
    %461 = vmatpush1.bf16.msra.mxu0 0
    %462 = vmatprep.subr.bf16.mxu0 0
    %463 = vmatpush1.bf16.msra.mxu0 0
    %464 = vmatprep.subr.bf16.mxu0 0
    %465 = vmatpush1.bf16.msra.mxu0 0
    %466 = vmatprep.subr.bf16.mxu0 0
    %467 = vmatpush1.bf16.msra.mxu0 0
    %468 = vmatprep.subr.bf16.mxu0 0
    %469 = vmatpush1.bf16.msra.mxu0 0
    %470 = vmatprep.subr.bf16.mxu0 0
    %471 = vmatpush1.bf16.msra.mxu0 0
    %472 = vmatprep.subr.bf16.mxu0 0
    %473 = vmatpush1.bf16.msra.mxu0 0
    %474 = vmatprep.subr.bf16.mxu0 0
    %475 = vmatpush1.bf16.msra.mxu0 0
    %476 = vmatprep.mubr.bf16.mxu0 0
    %477 = vmatmul.mubr.bf16.gmra.mrb[0].mxu0 %v442
    %v478 = vpop.f32.mrb[0].mxu0
    %v479 = vadd.f32 0.0, %v478
    %v480 = vpop.f32.mrb[0].mxu0
    %v481 = vpop.f32.mrb[0].mxu0
    %v482 = vpop.f32.mrb[0].mxu0
    %483 = vdwg.mxu0
    %v484 = vadd.f32 %v428, %v479
    %v485 = vtanh.pop %v484
    %v486 = vmul.f32 %v485, 0.5
    %v487 = vadd.f32 %v486, 0.5
    %v488 = vmul.f32 %v487, 0.0
    %490 = vrot.lane.b32.xlu0 %v485, 64
    %v491 = vpop.permute.xlu0 %490
    %v493 = vmul.f32 %v487, %v491
    %495 = vrot.lane.b32.xlu0 %v493, 32
    %v496 = vpop.permute.xlu0 %495
    %v498 = vadd.f32 %v488, %v496
    %v499 = vtanh.pop %v498
    %501 = vrot.lane.b32.xlu0 %v499, 64
    %v502 = vpop.permute.xlu0 %501
    %v504 = vmul.f32 %v487, %v502
    %v505 = vpack.c.bf16 %v427, %v427
    %507 = vrot.lane.b32.xlu0 %v505, 32
    %v508 = vpop.permute.xlu0 %507
    %v510 = vsel %vm362, %v508, 0
    %512 = vmatprep.subr.bf16.mxu0 %v355
    %513 = vmatpush1.bf16.msra.mxu0 %v354
    %514 = vmatprep.subr.bf16.mxu0 %v357
    %515 = vmatpush1.bf16.msra.mxu0 %v356
    %516 = vmatprep.subr.bf16.mxu0 0
    %517 = vmatpush1.bf16.msra.mxu0 0
    %518 = vmatprep.subr.bf16.mxu0 0
    %519 = vmatpush1.bf16.msra.mxu0 0
    %520 = vmatprep.subr.bf16.mxu0 0
    %521 = vmatpush1.bf16.msra.mxu0 0
    %522 = vmatprep.subr.bf16.mxu0 0
    %523 = vmatpush1.bf16.msra.mxu0 0
    %524 = vmatprep.subr.bf16.mxu0 0
    %525 = vmatpush1.bf16.msra.mxu0 0
    %526 = vmatprep.subr.bf16.mxu0 0
    %527 = vmatpush1.bf16.msra.mxu0 0
    %528 = vmatprep.subr.bf16.mxu0 0
    %529 = vmatpush1.bf16.msra.mxu0 0
    %530 = vmatprep.subr.bf16.mxu0 0
    %531 = vmatpush1.bf16.msra.mxu0 0
    %532 = vmatprep.subr.bf16.mxu0 0
    %533 = vmatpush1.bf16.msra.mxu0 0
    %534 = vmatprep.subr.bf16.mxu0 0
    %535 = vmatpush1.bf16.msra.mxu0 0
    %536 = vmatprep.subr.bf16.mxu0 0
    %537 = vmatpush1.bf16.msra.mxu0 0
    %538 = vmatprep.subr.bf16.mxu0 0
    %539 = vmatpush1.bf16.msra.mxu0 0
    %540 = vmatprep.subr.bf16.mxu0 0
    %541 = vmatpush1.bf16.msra.mxu0 0
    %542 = vmatprep.subr.bf16.mxu0 0
    %543 = vmatpush1.bf16.msra.mxu0 0
    %544 = vmatprep.mubr.bf16.mxu0 0
    %545 = vmatmul.mubr.bf16.gmra.mrb[0].mxu0 %v510
    %v546 = vpop.f32.mrb[0].mxu0
    %v547 = vadd.f32 0.0, %v546
    %v548 = vpop.f32.mrb[0].mxu0
    %v549 = vadd.f32 0.0, %v548
    %v550 = vpop.f32.mrb[0].mxu0
    %v551 = vpop.f32.mrb[0].mxu0
    %552 = vdwg.mxu0
    %v553 = vadd.f32 %v275, %v547
    %v554 = vtanh.pop %v553
    %v555 = vmul.f32 %v554, 0.5
    %v556 = vadd.f32 %v555, 0.5
    %v557 = vmul.f32 %v556, %v421
    %559 = vrot.lane.b32.xlu0 %v554, 64
    %v560 = vpop.permute.xlu0 %559
    %v562 = vmul.f32 %v556, %v560
    %564 = vrot.lane.b32.xlu0 %v562, 32
    %v565 = vpop.permute.xlu0 %564
    %v567 = vadd.f32 %v557, %v565
    %v568 = vtanh.pop %v567
    %570 = vrot.lane.b32.xlu0 %v568, 64
    %v571 = vpop.permute.xlu0 %570
    %v573 = vmul.f32 %v556, %v571
    %v574 = vadd.f32 %v316, %v549
    %v575 = vpack.c.bf16 %v504, %v504
    %577 = vrot.lane.b32.xlu0 %v575, 32
    %v578 = vpop.permute.xlu0 %577
    %v580 = vsel %vm362, %v578, 0
    %582 = vmatprep.subr.bf16.mxu0 0
    %583 = vmatpush1.bf16.msra.mxu0 %v437
    %584 = vmatprep.subr.bf16.mxu0 0
    %585 = vmatpush1.bf16.msra.mxu0 %v438
    %586 = vmatprep.subr.bf16.mxu0 0
    %587 = vmatpush1.bf16.msra.mxu0 0
    %588 = vmatprep.subr.bf16.mxu0 0
    %589 = vmatpush1.bf16.msra.mxu0 0
    %590 = vmatprep.subr.bf16.mxu0 0
    %591 = vmatpush1.bf16.msra.mxu0 0
    %592 = vmatprep.subr.bf16.mxu0 0
    %593 = vmatpush1.bf16.msra.mxu0 0
    %594 = vmatprep.subr.bf16.mxu0 0
    %595 = vmatpush1.bf16.msra.mxu0 0
    %596 = vmatprep.subr.bf16.mxu0 0
    %597 = vmatpush1.bf16.msra.mxu0 0
    %598 = vmatprep.subr.bf16.mxu0 0
    %599 = vmatpush1.bf16.msra.mxu0 0
    %600 = vmatprep.subr.bf16.mxu0 0
    %601 = vmatpush1.bf16.msra.mxu0 0
    %602 = vmatprep.subr.bf16.mxu0 0
    %603 = vmatpush1.bf16.msra.mxu0 0
    %604 = vmatprep.subr.bf16.mxu0 0
    %605 = vmatpush1.bf16.msra.mxu0 0
    %606 = vmatprep.subr.bf16.mxu0 0
    %607 = vmatpush1.bf16.msra.mxu0 0
    %608 = vmatprep.subr.bf16.mxu0 0
    %609 = vmatpush1.bf16.msra.mxu0 0
    %610 = vmatprep.subr.bf16.mxu0 0
    %611 = vmatpush1.bf16.msra.mxu0 0
    %612 = vmatprep.subr.bf16.mxu0 0
    %613 = vmatpush1.bf16.msra.mxu0 0
    %614 = vmatprep.mubr.bf16.mxu0 0
    %615 = vmatmul.mubr.bf16.gmra.mrb[0].mxu0 %v580
    %v616 = vpop.f32.mrb[0].mxu0
    %v617 = vadd.f32 0.0, %v616
    %v618 = vpop.f32.mrb[0].mxu0
    %v619 = vpop.f32.mrb[0].mxu0
    %v620 = vpop.f32.mrb[0].mxu0
    %621 = vdwg.mxu0
    %v622 = vadd.f32 %v574, %v617
    %v623 = vtanh.pop %v622
    %v624 = vmul.f32 %v623, 0.5
    %v625 = vadd.f32 %v624, 0.5
    %v626 = vmul.f32 %v625, %v498
    %628 = vrot.lane.b32.xlu0 %v623, 64
    %v629 = vpop.permute.xlu0 %628
    %v631 = vmul.f32 %v625, %v629
    %633 = vrot.lane.b32.xlu0 %v631, 32
    %v634 = vpop.permute.xlu0 %633
    %v636 = vadd.f32 %v626, %v634
    %v637 = vtanh.pop %v636
    %639 = vrot.lane.b32.xlu0 %v637, 64
    %v640 = vpop.permute.xlu0 %639
    %v642 = vmul.f32 %v625, %v640
    %v643 = vpack.c.bf16 %v573, %v573
    %645 = vrot.lane.b32.xlu0 %v643, 32
    %v646 = vpop.permute.xlu0 %645
    %v648 = vsel %vm362, %v646, 0
    %650 = vmatprep.subr.bf16.mxu0 %v355
    %651 = vmatpush1.bf16.msra.mxu0 %v354
    %652 = vmatprep.subr.bf16.mxu0 %v357
    %653 = vmatpush1.bf16.msra.mxu0 %v356
    %654 = vmatprep.subr.bf16.mxu0 0
    %655 = vmatpush1.bf16.msra.mxu0 0
    %656 = vmatprep.subr.bf16.mxu0 0
    %657 = vmatpush1.bf16.msra.mxu0 0
    %658 = vmatprep.subr.bf16.mxu0 0
    %659 = vmatpush1.bf16.msra.mxu0 0
    %660 = vmatprep.subr.bf16.mxu0 0
    %661 = vmatpush1.bf16.msra.mxu0 0
    %662 = vmatprep.subr.bf16.mxu0 0
    %663 = vmatpush1.bf16.msra.mxu0 0
    %664 = vmatprep.subr.bf16.mxu0 0
    %665 = vmatpush1.bf16.msra.mxu0 0
    %666 = vmatprep.subr.bf16.mxu0 0
    %667 = vmatpush1.bf16.msra.mxu0 0
    %668 = vmatprep.subr.bf16.mxu0 0
    %669 = vmatpush1.bf16.msra.mxu0 0
    %670 = vmatprep.subr.bf16.mxu0 0
    %671 = vmatpush1.bf16.msra.mxu0 0
    %672 = vmatprep.subr.bf16.mxu0 0
    %673 = vmatpush1.bf16.msra.mxu0 0
    %674 = vmatprep.subr.bf16.mxu0 0
    %675 = vmatpush1.bf16.msra.mxu0 0
    %676 = vmatprep.subr.bf16.mxu0 0
    %677 = vmatpush1.bf16.msra.mxu0 0
    %678 = vmatprep.subr.bf16.mxu0 0
    %679 = vmatpush1.bf16.msra.mxu0 0
    %680 = vmatprep.subr.bf16.mxu0 0
    %681 = vmatpush1.bf16.msra.mxu0 0
    %682 = vmatprep.mubr.bf16.mxu0 0
    %683 = vmatmul.mubr.bf16.gmra.mrb[0].mxu0 %v648
    %v684 = vpop.f32.mrb[0].mxu0
    %v685 = vadd.f32 0.0, %v684
    %v686 = vpop.f32.mrb[0].mxu0
    %v687 = vadd.f32 0.0, %v686
    %v688 = vpop.f32.mrb[0].mxu0
    %v689 = vpop.f32.mrb[0].mxu0
    %690 = vdwg.mxu0
    %v691 = vadd.f32 %v280, %v685
    %v692 = vtanh.pop %v691
    %v693 = vmul.f32 %v692, 0.5
    %v694 = vadd.f32 %v693, 0.5
    %v695 = vmul.f32 %v694, %v567
    %697 = vrot.lane.b32.xlu0 %v692, 64
    %v698 = vpop.permute.xlu0 %697
    %v700 = vmul.f32 %v694, %v698
    %702 = vrot.lane.b32.xlu0 %v700, 32
    %v703 = vpop.permute.xlu0 %702
    %v705 = vadd.f32 %v695, %v703
    %v706 = vtanh.pop %v705
    %708 = vrot.lane.b32.xlu0 %v706, 64
    %v709 = vpop.permute.xlu0 %708
    %v711 = vmul.f32 %v694, %v709
    %v712 = vadd.f32 %v316, %v687
    %v713 = vpack.c.bf16 %v642, %v642
    %715 = vrot.lane.b32.xlu0 %v713, 32
    %v716 = vpop.permute.xlu0 %715
    %v718 = vsel %vm362, %v716, 0
    %720 = vmatprep.subr.bf16.mxu0 0
    %721 = vmatpush1.bf16.msra.mxu0 %v437
    %722 = vmatprep.subr.bf16.mxu0 0
    %723 = vmatpush1.bf16.msra.mxu0 %v438
    %724 = vmatprep.subr.bf16.mxu0 0
    %725 = vmatpush1.bf16.msra.mxu0 0
    %726 = vmatprep.subr.bf16.mxu0 0
    %727 = vmatpush1.bf16.msra.mxu0 0
    %728 = vmatprep.subr.bf16.mxu0 0
    %729 = vmatpush1.bf16.msra.mxu0 0
    %730 = vmatprep.subr.bf16.mxu0 0
    %731 = vmatpush1.bf16.msra.mxu0 0
    %732 = vmatprep.subr.bf16.mxu0 0
    %733 = vmatpush1.bf16.msra.mxu0 0
    %734 = vmatprep.subr.bf16.mxu0 0
    %735 = vmatpush1.bf16.msra.mxu0 0
    %736 = vmatprep.subr.bf16.mxu0 0
    %737 = vmatpush1.bf16.msra.mxu0 0
    %738 = vmatprep.subr.bf16.mxu0 0
    %739 = vmatpush1.bf16.msra.mxu0 0
    %740 = vmatprep.subr.bf16.mxu0 0
    %741 = vmatpush1.bf16.msra.mxu0 0
    %742 = vmatprep.subr.bf16.mxu0 0
    %743 = vmatpush1.bf16.msra.mxu0 0
    %744 = vmatprep.subr.bf16.mxu0 0
    %745 = vmatpush1.bf16.msra.mxu0 0
    %746 = vmatprep.subr.bf16.mxu0 0
    %747 = vmatpush1.bf16.msra.mxu0 0
    %748 = vmatprep.subr.bf16.mxu0 0
    %749 = vmatpush1.bf16.msra.mxu0 0
    %750 = vmatprep.subr.bf16.mxu0 0
    %751 = vmatpush1.bf16.msra.mxu0 0
    %752 = vmatprep.mubr.bf16.mxu0 0
    %753 = vmatmul.mubr.bf16.gmra.mrb[0].mxu0 %v718
    %v754 = vpop.f32.mrb[0].mxu0
    %v755 = vadd.f32 0.0, %v754
    %v756 = vpop.f32.mrb[0].mxu0
    %v757 = vpop.f32.mrb[0].mxu0
    %v758 = vpop.f32.mrb[0].mxu0
    %759 = vdwg.mxu0
    %v760 = vadd.f32 %v712, %v755
    %v761 = vtanh.pop %v760
    %v762 = vmul.f32 %v761, 0.5
    %v763 = vadd.f32 %v762, 0.5
    %v764 = vmul.f32 %v763, %v636
    %766 = vrot.lane.b32.xlu0 %v761, 64
    %v767 = vpop.permute.xlu0 %766
    %v769 = vmul.f32 %v763, %v767
    %771 = vrot.lane.b32.xlu0 %v769, 32
    %v772 = vpop.permute.xlu0 %771
    %v774 = vadd.f32 %v764, %v772
    %v775 = vtanh.pop %v774
    %777 = vrot.lane.b32.xlu0 %v775, 64
    %v778 = vpop.permute.xlu0 %777
    %v780 = vmul.f32 %v763, %v778
    %v781 = vpack.c.bf16 %v711, %v711
    %783 = vrot.lane.b32.xlu0 %v781, 32
    %v784 = vpop.permute.xlu0 %783
    %v786 = vsel %vm362, %v784, 0
    %788 = vmatprep.subr.bf16.mxu0 %v355
    %789 = vmatpush1.bf16.msra.mxu0 %v354
    %790 = vmatprep.subr.bf16.mxu0 %v357
    %791 = vmatpush1.bf16.msra.mxu0 %v356
    %792 = vmatprep.subr.bf16.mxu0 0
    %793 = vmatpush1.bf16.msra.mxu0 0
    %794 = vmatprep.subr.bf16.mxu0 0
    %795 = vmatpush1.bf16.msra.mxu0 0
    %796 = vmatprep.subr.bf16.mxu0 0
    %797 = vmatpush1.bf16.msra.mxu0 0
    %798 = vmatprep.subr.bf16.mxu0 0
    %799 = vmatpush1.bf16.msra.mxu0 0
    %800 = vmatprep.subr.bf16.mxu0 0
    %801 = vmatpush1.bf16.msra.mxu0 0
    %802 = vmatprep.subr.bf16.mxu0 0
    %803 = vmatpush1.bf16.msra.mxu0 0
    %804 = vmatprep.subr.bf16.mxu0 0
    %805 = vmatpush1.bf16.msra.mxu0 0
    %806 = vmatprep.subr.bf16.mxu0 0
    %807 = vmatpush1.bf16.msra.mxu0 0
    %808 = vmatprep.subr.bf16.mxu0 0
    %809 = vmatpush1.bf16.msra.mxu0 0
    %810 = vmatprep.subr.bf16.mxu0 0
    %811 = vmatpush1.bf16.msra.mxu0 0
    %812 = vmatprep.subr.bf16.mxu0 0
    %813 = vmatpush1.bf16.msra.mxu0 0
    %814 = vmatprep.subr.bf16.mxu0 0
    %815 = vmatpush1.bf16.msra.mxu0 0
    %816 = vmatprep.subr.bf16.mxu0 0
    %817 = vmatpush1.bf16.msra.mxu0 0
    %818 = vmatprep.subr.bf16.mxu0 0
    %819 = vmatpush1.bf16.msra.mxu0 0
    %820 = vmatprep.mubr.bf16.mxu0 0
    %821 = vmatmul.mubr.bf16.gmra.mrb[0].mxu0 %v786
    %v822 = vpop.f32.mrb[0].mxu0
    %v823 = vadd.f32 0.0, %v822
    %v824 = vpop.f32.mrb[0].mxu0
    %v825 = vadd.f32 0.0, %v824
    %v826 = vpop.f32.mrb[0].mxu0
    %v827 = vpop.f32.mrb[0].mxu0
    %828 = vdwg.mxu0
    %v829 = vadd.f32 %v285, %v823
    %v830 = vtanh.pop %v829
    %v831 = vmul.f32 %v830, 0.5
    %v832 = vadd.f32 %v831, 0.5
    %v833 = vmul.f32 %v832, %v705
    %835 = vrot.lane.b32.xlu0 %v830, 64
    %v836 = vpop.permute.xlu0 %835
    %v838 = vmul.f32 %v832, %v836
    %840 = vrot.lane.b32.xlu0 %v838, 32
    %v841 = vpop.permute.xlu0 %840
    %v843 = vadd.f32 %v833, %v841
    %v844 = vtanh.pop %v843
    %846 = vrot.lane.b32.xlu0 %v844, 64
    %v847 = vpop.permute.xlu0 %846
    %v849 = vmul.f32 %v832, %v847
    %v850 = vadd.f32 %v316, %v825
    %v851 = vpack.c.bf16 %v780, %v780
    %853 = vrot.lane.b32.xlu0 %v851, 32
    %v854 = vpop.permute.xlu0 %853
    %v856 = vsel %vm362, %v854, 0
    %858 = vmatprep.subr.bf16.mxu0 0
    %859 = vmatpush1.bf16.msra.mxu0 %v437
    %860 = vmatprep.subr.bf16.mxu0 0
    %861 = vmatpush1.bf16.msra.mxu0 %v438
    %862 = vmatprep.subr.bf16.mxu0 0
    %863 = vmatpush1.bf16.msra.mxu0 0
    %864 = vmatprep.subr.bf16.mxu0 0
    %865 = vmatpush1.bf16.msra.mxu0 0
    %866 = vmatprep.subr.bf16.mxu0 0
    %867 = vmatpush1.bf16.msra.mxu0 0
    %868 = vmatprep.subr.bf16.mxu0 0
    %869 = vmatpush1.bf16.msra.mxu0 0
    %870 = vmatprep.subr.bf16.mxu0 0
    %871 = vmatpush1.bf16.msra.mxu0 0
    %872 = vmatprep.subr.bf16.mxu0 0
    %873 = vmatpush1.bf16.msra.mxu0 0
    %874 = vmatprep.subr.bf16.mxu0 0
    %875 = vmatpush1.bf16.msra.mxu0 0
    %876 = vmatprep.subr.bf16.mxu0 0
    %877 = vmatpush1.bf16.msra.mxu0 0
    %878 = vmatprep.subr.bf16.mxu0 0
    %879 = vmatpush1.bf16.msra.mxu0 0
    %880 = vmatprep.subr.bf16.mxu0 0
    %881 = vmatpush1.bf16.msra.mxu0 0
    %882 = vmatprep.subr.bf16.mxu0 0
    %883 = vmatpush1.bf16.msra.mxu0 0
    %884 = vmatprep.subr.bf16.mxu0 0
    %885 = vmatpush1.bf16.msra.mxu0 0
    %886 = vmatprep.subr.bf16.mxu0 0
    %887 = vmatpush1.bf16.msra.mxu0 0
    %888 = vmatprep.subr.bf16.mxu0 0
    %889 = vmatpush1.bf16.msra.mxu0 0
    %890 = vmatprep.mubr.bf16.mxu0 0
    %891 = vmatmul.mubr.bf16.gmra.mrb[0].mxu0 %v856
    %v892 = vpop.f32.mrb[0].mxu0
    %v893 = vadd.f32 0.0, %v892
    %v894 = vpop.f32.mrb[0].mxu0
    %v895 = vpop.f32.mrb[0].mxu0
    %v896 = vpop.f32.mrb[0].mxu0
    %897 = vdwg.mxu0
    %v898 = vadd.f32 %v850, %v893
    %v899 = vtanh.pop %v898
    %v900 = vmul.f32 %v899, 0.5
    %v901 = vadd.f32 %v900, 0.5
    %v902 = vmul.f32 %v901, %v774
    %904 = vrot.lane.b32.xlu0 %v899, 64
    %v905 = vpop.permute.xlu0 %904
    %v907 = vmul.f32 %v901, %v905
    %909 = vrot.lane.b32.xlu0 %v907, 32
    %v910 = vpop.permute.xlu0 %909
    %v912 = vadd.f32 %v902, %v910
    %v913 = vtanh.pop %v912
    %915 = vrot.lane.b32.xlu0 %v913, 64
    %v916 = vpop.permute.xlu0 %915
    %v918 = vmul.f32 %v901, %v916
    %v919 = vpack.c.bf16 %v849, %v849
    %921 = vrot.lane.b32.xlu0 %v919, 32
    %v922 = vpop.permute.xlu0 %921
    %v924 = vsel %vm362, %v922, 0
    %926 = vmatprep.subr.bf16.mxu0 %v355
    %927 = vmatpush1.bf16.msra.mxu0 %v354
    %928 = vmatprep.subr.bf16.mxu0 %v357
    %929 = vmatpush1.bf16.msra.mxu0 %v356
    %930 = vmatprep.subr.bf16.mxu0 0
    %931 = vmatpush1.bf16.msra.mxu0 0
    %932 = vmatprep.subr.bf16.mxu0 0
    %933 = vmatpush1.bf16.msra.mxu0 0
    %934 = vmatprep.subr.bf16.mxu0 0
    %935 = vmatpush1.bf16.msra.mxu0 0
    %936 = vmatprep.subr.bf16.mxu0 0
    %937 = vmatpush1.bf16.msra.mxu0 0
    %938 = vmatprep.subr.bf16.mxu0 0
    %939 = vmatpush1.bf16.msra.mxu0 0
    %940 = vmatprep.subr.bf16.mxu0 0
    %941 = vmatpush1.bf16.msra.mxu0 0
    %942 = vmatprep.subr.bf16.mxu0 0
    %943 = vmatpush1.bf16.msra.mxu0 0
    %944 = vmatprep.subr.bf16.mxu0 0
    %945 = vmatpush1.bf16.msra.mxu0 0
    %946 = vmatprep.subr.bf16.mxu0 0
    %947 = vmatpush1.bf16.msra.mxu0 0
    %948 = vmatprep.subr.bf16.mxu0 0
    %949 = vmatpush1.bf16.msra.mxu0 0
    %950 = vmatprep.subr.bf16.mxu0 0
    %951 = vmatpush1.bf16.msra.mxu0 0
    %952 = vmatprep.subr.bf16.mxu0 0
    %953 = vmatpush1.bf16.msra.mxu0 0
    %954 = vmatprep.subr.bf16.mxu0 0
    %955 = vmatpush1.bf16.msra.mxu0 0
    %956 = vmatprep.subr.bf16.mxu0 0
    %957 = vmatpush1.bf16.msra.mxu0 0
    %958 = vmatprep.mubr.bf16.mxu0 0
    %959 = vmatmul.mubr.bf16.gmra.mrb[0].mxu0 %v924
    %v960 = vpop.f32.mrb[0].mxu0
    %v961 = vadd.f32 0.0, %v960
    %v962 = vpop.f32.mrb[0].mxu0
    %v963 = vadd.f32 0.0, %v962
    %v964 = vpop.f32.mrb[0].mxu0
    %v965 = vpop.f32.mrb[0].mxu0
    %966 = vdwg.mxu0
    %v967 = vadd.f32 %v290, %v961
    %v968 = vtanh.pop %v967
    %v969 = vmul.f32 %v968, 0.5
    %v970 = vadd.f32 %v969, 0.5
    %v971 = vmul.f32 %v970, %v843
    %973 = vrot.lane.b32.xlu0 %v968, 64
    %v974 = vpop.permute.xlu0 %973
    %v976 = vmul.f32 %v970, %v974
    %978 = vrot.lane.b32.xlu0 %v976, 32
    %v979 = vpop.permute.xlu0 %978
    %v981 = vadd.f32 %v971, %v979
    %v982 = vtanh.pop %v981
    %984 = vrot.lane.b32.xlu0 %v982, 64
    %v985 = vpop.permute.xlu0 %984
    %v987 = vmul.f32 %v970, %v985
    %v988 = vadd.f32 %v316, %v963
    %v989 = vpack.c.bf16 %v918, %v918
    %991 = vrot.lane.b32.xlu0 %v989, 32
    %v992 = vpop.permute.xlu0 %991
    %v994 = vsel %vm362, %v992, 0
    %996 = vmatprep.subr.bf16.mxu0 0
    %997 = vmatpush1.bf16.msra.mxu0 %v437
    %998 = vmatprep.subr.bf16.mxu0 0
    %999 = vmatpush1.bf16.msra.mxu0 %v438
    %1000 = vmatprep.subr.bf16.mxu0 0
    %1001 = vmatpush1.bf16.msra.mxu0 0
    %1002 = vmatprep.subr.bf16.mxu0 0
    %1003 = vmatpush1.bf16.msra.mxu0 0
    %1004 = vmatprep.subr.bf16.mxu0 0
    %1005 = vmatpush1.bf16.msra.mxu0 0
    %1006 = vmatprep.subr.bf16.mxu0 0
    %1007 = vmatpush1.bf16.msra.mxu0 0
    %1008 = vmatprep.subr.bf16.mxu0 0
    %1009 = vmatpush1.bf16.msra.mxu0 0
    %1010 = vmatprep.subr.bf16.mxu0 0
    %1011 = vmatpush1.bf16.msra.mxu0 0
    %1012 = vmatprep.subr.bf16.mxu0 0
    %1013 = vmatpush1.bf16.msra.mxu0 0
    %1014 = vmatprep.subr.bf16.mxu0 0
    %1015 = vmatpush1.bf16.msra.mxu0 0
    %1016 = vmatprep.subr.bf16.mxu0 0
    %1017 = vmatpush1.bf16.msra.mxu0 0
    %1018 = vmatprep.subr.bf16.mxu0 0
    %1019 = vmatpush1.bf16.msra.mxu0 0
    %1020 = vmatprep.subr.bf16.mxu0 0
    %1021 = vmatpush1.bf16.msra.mxu0 0
    %1022 = vmatprep.subr.bf16.mxu0 0
    %1023 = vmatpush1.bf16.msra.mxu0 0
    %1024 = vmatprep.subr.bf16.mxu0 0
    %1025 = vmatpush1.bf16.msra.mxu0 0
    %1026 = vmatprep.subr.bf16.mxu0 0
    %1027 = vmatpush1.bf16.msra.mxu0 0
    %1028 = vmatprep.mubr.bf16.mxu0 0
    %1029 = vmatmul.mubr.bf16.gmra.mrb[0].mxu0 %v994
    %v1030 = vpop.f32.mrb[0].mxu0
    %v1031 = vadd.f32 0.0, %v1030
    %v1032 = vpop.f32.mrb[0].mxu0
    %v1033 = vpop.f32.mrb[0].mxu0
    %v1034 = vpop.f32.mrb[0].mxu0
    %1035 = vdwg.mxu0
    %v1036 = vadd.f32 %v988, %v1031
    %v1037 = vtanh.pop %v1036
    %v1038 = vmul.f32 %v1037, 0.5
    %v1039 = vadd.f32 %v1038, 0.5
    %v1040 = vmul.f32 %v1039, %v912
    %1042 = vrot.lane.b32.xlu0 %v1037, 64
    %v1043 = vpop.permute.xlu0 %1042
    %v1045 = vmul.f32 %v1039, %v1043
    %1047 = vrot.lane.b32.xlu0 %v1045, 32
    %v1048 = vpop.permute.xlu0 %1047
    %v1050 = vadd.f32 %v1040, %v1048
    %v1051 = vtanh.pop %v1050
    %1053 = vrot.lane.b32.xlu0 %v1051, 64
    %v1054 = vpop.permute.xlu0 %1053
    %v1056 = vmul.f32 %v1039, %v1054
    %v1057 = vpack.c.bf16 %v987, %v987
    %1059 = vrot.lane.b32.xlu0 %v1057, 32
    %v1060 = vpop.permute.xlu0 %1059
    %v1062 = vsel %vm362, %v1060, 0
    %1064 = vmatprep.subr.bf16.mxu0 %v355
    %1065 = vmatpush1.bf16.msra.mxu0 %v354
    %1066 = vmatprep.subr.bf16.mxu0 %v357
    %1067 = vmatpush1.bf16.msra.mxu0 %v356
    %1068 = vmatprep.subr.bf16.mxu0 0
    %1069 = vmatpush1.bf16.msra.mxu0 0
    %1070 = vmatprep.subr.bf16.mxu0 0
    %1071 = vmatpush1.bf16.msra.mxu0 0
    %1072 = vmatprep.subr.bf16.mxu0 0
    %1073 = vmatpush1.bf16.msra.mxu0 0
    %1074 = vmatprep.subr.bf16.mxu0 0
    %1075 = vmatpush1.bf16.msra.mxu0 0
    %1076 = vmatprep.subr.bf16.mxu0 0
    %1077 = vmatpush1.bf16.msra.mxu0 0
    %1078 = vmatprep.subr.bf16.mxu0 0
    %1079 = vmatpush1.bf16.msra.mxu0 0
    %1080 = vmatprep.subr.bf16.mxu0 0
    %1081 = vmatpush1.bf16.msra.mxu0 0
    %1082 = vmatprep.subr.bf16.mxu0 0
    %1083 = vmatpush1.bf16.msra.mxu0 0
    %1084 = vmatprep.subr.bf16.mxu0 0
    %1085 = vmatpush1.bf16.msra.mxu0 0
    %1086 = vmatprep.subr.bf16.mxu0 0
    %1087 = vmatpush1.bf16.msra.mxu0 0
    %1088 = vmatprep.subr.bf16.mxu0 0
    %1089 = vmatpush1.bf16.msra.mxu0 0
    %1090 = vmatprep.subr.bf16.mxu0 0
    %1091 = vmatpush1.bf16.msra.mxu0 0
    %1092 = vmatprep.subr.bf16.mxu0 0
    %1093 = vmatpush1.bf16.msra.mxu0 0
    %1094 = vmatprep.subr.bf16.mxu0 0
    %1095 = vmatpush1.bf16.msra.mxu0 0
    %1096 = vmatprep.mubr.bf16.mxu0 0
    %1097 = vmatmul.mubr.bf16.gmra.mrb[0].mxu0 %v1062
    %v1098 = vpop.f32.mrb[0].mxu0
    %v1099 = vadd.f32 0.0, %v1098
    %v1100 = vpop.f32.mrb[0].mxu0
    %v1101 = vadd.f32 0.0, %v1100
    %v1102 = vpop.f32.mrb[0].mxu0
    %v1103 = vpop.f32.mrb[0].mxu0
    %1104 = vdwg.mxu0
    %v1105 = vadd.f32 %v295, %v1099
    %v1106 = vtanh.pop %v1105
    %v1107 = vmul.f32 %v1106, 0.5
    %v1108 = vadd.f32 %v1107, 0.5
    %v1109 = vmul.f32 %v1108, %v981
    %1111 = vrot.lane.b32.xlu0 %v1106, 64
    %v1112 = vpop.permute.xlu0 %1111
    %v1114 = vmul.f32 %v1108, %v1112
    %1116 = vrot.lane.b32.xlu0 %v1114, 32
    %v1117 = vpop.permute.xlu0 %1116
    %v1119 = vadd.f32 %v1109, %v1117
    %v1120 = vtanh.pop %v1119
    %1122 = vrot.lane.b32.xlu0 %v1120, 64
    %v1123 = vpop.permute.xlu0 %1122
    %v1125 = vmul.f32 %v1108, %v1123
    %v1126 = vadd.f32 %v316, %v1101
    %v1127 = vpack.c.bf16 %v1056, %v1056
    %1129 = vrot.lane.b32.xlu0 %v1127, 32
    %v1130 = vpop.permute.xlu0 %1129
    %v1132 = vsel %vm362, %v1130, 0
    %1134 = vmatprep.subr.bf16.mxu0 0
    %1135 = vmatpush1.bf16.msra.mxu0 %v437
    %1136 = vmatprep.subr.bf16.mxu0 0
    %1137 = vmatpush1.bf16.msra.mxu0 %v438
    %1138 = vmatprep.subr.bf16.mxu0 0
    %1139 = vmatpush1.bf16.msra.mxu0 0
    %1140 = vmatprep.subr.bf16.mxu0 0
    %1141 = vmatpush1.bf16.msra.mxu0 0
    %1142 = vmatprep.subr.bf16.mxu0 0
    %1143 = vmatpush1.bf16.msra.mxu0 0
    %1144 = vmatprep.subr.bf16.mxu0 0
    %1145 = vmatpush1.bf16.msra.mxu0 0
    %1146 = vmatprep.subr.bf16.mxu0 0
    %1147 = vmatpush1.bf16.msra.mxu0 0
    %1148 = vmatprep.subr.bf16.mxu0 0
    %1149 = vmatpush1.bf16.msra.mxu0 0
    %1150 = vmatprep.subr.bf16.mxu0 0
    %1151 = vmatpush1.bf16.msra.mxu0 0
    %1152 = vmatprep.subr.bf16.mxu0 0
    %1153 = vmatpush1.bf16.msra.mxu0 0
    %1154 = vmatprep.subr.bf16.mxu0 0
    %1155 = vmatpush1.bf16.msra.mxu0 0
    %1156 = vmatprep.subr.bf16.mxu0 0
    %1157 = vmatpush1.bf16.msra.mxu0 0
    %1158 = vmatprep.subr.bf16.mxu0 0
    %1159 = vmatpush1.bf16.msra.mxu0 0
    %1160 = vmatprep.subr.bf16.mxu0 0
    %1161 = vmatpush1.bf16.msra.mxu0 0
    %1162 = vmatprep.subr.bf16.mxu0 0
    %1163 = vmatpush1.bf16.msra.mxu0 0
    %1164 = vmatprep.subr.bf16.mxu0 0
    %1165 = vmatpush1.bf16.msra.mxu0 0
    %1166 = vmatprep.mubr.bf16.mxu0 0
    %1167 = vmatmul.mubr.bf16.gmra.mrb[0].mxu0 %v1132
    %v1168 = vpop.f32.mrb[0].mxu0
    %v1169 = vadd.f32 0.0, %v1168
    %v1170 = vpop.f32.mrb[0].mxu0
    %v1171 = vpop.f32.mrb[0].mxu0
    %v1172 = vpop.f32.mrb[0].mxu0
    %1173 = vdwg.mxu0
    %v1174 = vadd.f32 %v1126, %v1169
    %v1175 = vtanh.pop %v1174
    %v1176 = vmul.f32 %v1175, 0.5
    %v1177 = vadd.f32 %v1176, 0.5
    %v1178 = vmul.f32 %v1177, %v1050
    %1180 = vrot.lane.b32.xlu0 %v1175, 64
    %v1181 = vpop.permute.xlu0 %1180
    %v1183 = vmul.f32 %v1177, %v1181
    %1185 = vrot.lane.b32.xlu0 %v1183, 32
    %v1186 = vpop.permute.xlu0 %1185
    %v1188 = vadd.f32 %v1178, %v1186
    %v1189 = vtanh.pop %v1188
    %1191 = vrot.lane.b32.xlu0 %v1189, 64
    %v1192 = vpop.permute.xlu0 %1191
    %v1194 = vmul.f32 %v1177, %v1192
    %v1195 = vpack.c.bf16 %v1125, %v1125
    %1197 = vrot.lane.b32.xlu0 %v1195, 32
    %v1198 = vpop.permute.xlu0 %1197
    %v1200 = vsel %vm362, %v1198, 0
    %1202 = vmatprep.subr.bf16.mxu0 %v355
    %1203 = vmatpush1.bf16.msra.mxu0 %v354
    %1204 = vmatprep.subr.bf16.mxu0 %v357
    %1205 = vmatpush1.bf16.msra.mxu0 %v356
    %1206 = vmatprep.subr.bf16.mxu0 0
    %1207 = vmatpush1.bf16.msra.mxu0 0
    %1208 = vmatprep.subr.bf16.mxu0 0
    %1209 = vmatpush1.bf16.msra.mxu0 0
    %1210 = vmatprep.subr.bf16.mxu0 0
    %1211 = vmatpush1.bf16.msra.mxu0 0
    %1212 = vmatprep.subr.bf16.mxu0 0
    %1213 = vmatpush1.bf16.msra.mxu0 0
    %1214 = vmatprep.subr.bf16.mxu0 0
    %1215 = vmatpush1.bf16.msra.mxu0 0
    %1216 = vmatprep.subr.bf16.mxu0 0
    %1217 = vmatpush1.bf16.msra.mxu0 0
    %1218 = vmatprep.subr.bf16.mxu0 0
    %1219 = vmatpush1.bf16.msra.mxu0 0
    %1220 = vmatprep.subr.bf16.mxu0 0
    %1221 = vmatpush1.bf16.msra.mxu0 0
    %1222 = vmatprep.subr.bf16.mxu0 0
    %1223 = vmatpush1.bf16.msra.mxu0 0
    %1224 = vmatprep.subr.bf16.mxu0 0
    %1225 = vmatpush1.bf16.msra.mxu0 0
    %1226 = vmatprep.subr.bf16.mxu0 0
    %1227 = vmatpush1.bf16.msra.mxu0 0
    %1228 = vmatprep.subr.bf16.mxu0 0
    %1229 = vmatpush1.bf16.msra.mxu0 0
    %1230 = vmatprep.subr.bf16.mxu0 0
    %1231 = vmatpush1.bf16.msra.mxu0 0
    %1232 = vmatprep.subr.bf16.mxu0 0
    %1233 = vmatpush1.bf16.msra.mxu0 0
    %1234 = vmatprep.mubr.bf16.mxu0 0
    %1235 = vmatmul.mubr.bf16.gmra.mrb[0].mxu0 %v1200
    %v1236 = vpop.f32.mrb[0].mxu0
    %v1237 = vadd.f32 0.0, %v1236
    %v1238 = vpop.f32.mrb[0].mxu0
    %v1239 = vadd.f32 0.0, %v1238
    %v1240 = vpop.f32.mrb[0].mxu0
    %v1241 = vpop.f32.mrb[0].mxu0
    %1242 = vdwg.mxu0
    %v1243 = vadd.f32 %v300, %v1237
    %v1244 = vtanh.pop %v1243
    %v1245 = vmul.f32 %v1244, 0.5
    %v1246 = vadd.f32 %v1245, 0.5
    %v1247 = vmul.f32 %v1246, %v1119
    %1249 = vrot.lane.b32.xlu0 %v1244, 64
    %v1250 = vpop.permute.xlu0 %1249
    %v1252 = vmul.f32 %v1246, %v1250
    %1254 = vrot.lane.b32.xlu0 %v1252, 32
    %v1255 = vpop.permute.xlu0 %1254
    %v1257 = vadd.f32 %v1247, %v1255
    %v1258 = vtanh.pop %v1257
    %1260 = vrot.lane.b32.xlu0 %v1258, 64
    %v1261 = vpop.permute.xlu0 %1260
    %v1263 = vmul.f32 %v1246, %v1261
    %v1264 = vadd.f32 %v316, %v1239
    %v1265 = vpack.c.bf16 %v1194, %v1194
    %1267 = vrot.lane.b32.xlu0 %v1265, 32
    %v1268 = vpop.permute.xlu0 %1267
    %v1270 = vsel %vm362, %v1268, 0
    %1272 = vmatprep.subr.bf16.mxu0 0
    %1273 = vmatpush1.bf16.msra.mxu0 %v437
    %1274 = vmatprep.subr.bf16.mxu0 0
    %1275 = vmatpush1.bf16.msra.mxu0 %v438
    %1276 = vmatprep.subr.bf16.mxu0 0
    %1277 = vmatpush1.bf16.msra.mxu0 0
    %1278 = vmatprep.subr.bf16.mxu0 0
    %1279 = vmatpush1.bf16.msra.mxu0 0
    %1280 = vmatprep.subr.bf16.mxu0 0
    %1281 = vmatpush1.bf16.msra.mxu0 0
    %1282 = vmatprep.subr.bf16.mxu0 0
    %1283 = vmatpush1.bf16.msra.mxu0 0
    %1284 = vmatprep.subr.bf16.mxu0 0
    %1285 = vmatpush1.bf16.msra.mxu0 0
    %1286 = vmatprep.subr.bf16.mxu0 0
    %1287 = vmatpush1.bf16.msra.mxu0 0
    %1288 = vmatprep.subr.bf16.mxu0 0
    %1289 = vmatpush1.bf16.msra.mxu0 0
    %1290 = vmatprep.subr.bf16.mxu0 0
    %1291 = vmatpush1.bf16.msra.mxu0 0
    %1292 = vmatprep.subr.bf16.mxu0 0
    %1293 = vmatpush1.bf16.msra.mxu0 0
    %1294 = vmatprep.subr.bf16.mxu0 0
    %1295 = vmatpush1.bf16.msra.mxu0 0
    %1296 = vmatprep.subr.bf16.mxu0 0
    %1297 = vmatpush1.bf16.msra.mxu0 0
    %1298 = vmatprep.subr.bf16.mxu0 0
    %1299 = vmatpush1.bf16.msra.mxu0 0
    %1300 = vmatprep.subr.bf16.mxu0 0
    %1301 = vmatpush1.bf16.msra.mxu0 0
    %1302 = vmatprep.subr.bf16.mxu0 0
    %1303 = vmatpush1.bf16.msra.mxu0 0
    %1304 = vmatprep.mubr.bf16.mxu0 0
    %1305 = vmatmul.mubr.bf16.gmra.mrb[0].mxu0 %v1270
    %v1306 = vpop.f32.mrb[0].mxu0
    %v1307 = vadd.f32 0.0, %v1306
    %v1308 = vpop.f32.mrb[0].mxu0
    %v1309 = vpop.f32.mrb[0].mxu0
    %v1310 = vpop.f32.mrb[0].mxu0
    %1311 = vdwg.mxu0
    %v1312 = vadd.f32 %v1264, %v1307
    %v1313 = vtanh.pop %v1312
    %v1314 = vmul.f32 %v1313, 0.5
    %v1315 = vadd.f32 %v1314, 0.5
    %v1316 = vmul.f32 %v1315, %v1188
    %1318 = vrot.lane.b32.xlu0 %v1313, 64
    %v1319 = vpop.permute.xlu0 %1318
    %v1321 = vmul.f32 %v1315, %v1319
    %1323 = vrot.lane.b32.xlu0 %v1321, 32
    %v1324 = vpop.permute.xlu0 %1323
    %v1326 = vadd.f32 %v1316, %v1324
    %v1327 = vtanh.pop %v1326
    %1329 = vrot.lane.b32.xlu0 %v1327, 64
    %v1330 = vpop.permute.xlu0 %1329
    %v1332 = vmul.f32 %v1315, %v1330
    %v1333 = vpack.c.bf16 %v1263, %v1263
    %1335 = vrot.lane.b32.xlu0 %v1333, 32
    %v1336 = vpop.permute.xlu0 %1335
    %v1338 = vsel %vm362, %v1336, 0
    %1340 = vmatprep.subr.bf16.mxu0 %v355
    %1341 = vmatpush1.bf16.msra.mxu0 %v354
    %1342 = vmatprep.subr.bf16.mxu0 %v357
    %1343 = vmatpush1.bf16.msra.mxu0 %v356
    %1344 = vmatprep.subr.bf16.mxu0 0
    %1345 = vmatpush1.bf16.msra.mxu0 0
    %1346 = vmatprep.subr.bf16.mxu0 0
    %1347 = vmatpush1.bf16.msra.mxu0 0
    %1348 = vmatprep.subr.bf16.mxu0 0
    %1349 = vmatpush1.bf16.msra.mxu0 0
    %1350 = vmatprep.subr.bf16.mxu0 0
    %1351 = vmatpush1.bf16.msra.mxu0 0
    %1352 = vmatprep.subr.bf16.mxu0 0
    %1353 = vmatpush1.bf16.msra.mxu0 0
    %1354 = vmatprep.subr.bf16.mxu0 0
    %1355 = vmatpush1.bf16.msra.mxu0 0
    %1356 = vmatprep.subr.bf16.mxu0 0
    %1357 = vmatpush1.bf16.msra.mxu0 0
    %1358 = vmatprep.subr.bf16.mxu0 0
    %1359 = vmatpush1.bf16.msra.mxu0 0
    %1360 = vmatprep.subr.bf16.mxu0 0
    %1361 = vmatpush1.bf16.msra.mxu0 0
    %1362 = vmatprep.subr.bf16.mxu0 0
    %1363 = vmatpush1.bf16.msra.mxu0 0
    %1364 = vmatprep.subr.bf16.mxu0 0
    %1365 = vmatpush1.bf16.msra.mxu0 0
    %1366 = vmatprep.subr.bf16.mxu0 0
    %1367 = vmatpush1.bf16.msra.mxu0 0
    %1368 = vmatprep.subr.bf16.mxu0 0
    %1369 = vmatpush1.bf16.msra.mxu0 0
    %1370 = vmatprep.subr.bf16.mxu0 0
    %1371 = vmatpush1.bf16.msra.mxu0 0
    %1372 = vmatprep.mubr.bf16.mxu0 0
    %1373 = vmatmul.mubr.bf16.gmra.mrb[0].mxu0 %v1338
    %v1374 = vpop.f32.mrb[0].mxu0
    %v1375 = vpop.f32.mrb[0].mxu0
    %v1376 = vadd.f32 0.0, %v1375
    %v1377 = vpop.f32.mrb[0].mxu0
    %v1378 = vpop.f32.mrb[0].mxu0
    %1379 = vdwg.mxu0
    %v1380 = vadd.f32 %v316, %v1376
    %v1381 = vpack.c.bf16 %v1332, %v1332
    %1383 = vrot.lane.b32.xlu0 %v1381, 32
    %v1384 = vpop.permute.xlu0 %1383
    %v1386 = vsel %vm362, %v1384, 0
    %1388 = vmatprep.subr.bf16.mxu0 0
    %1389 = vmatpush1.bf16.msra.mxu0 %v437
    %1390 = vmatprep.subr.bf16.mxu0 0
    %1391 = vmatpush1.bf16.msra.mxu0 %v438
    %1392 = vmatprep.subr.bf16.mxu0 0
    %1393 = vmatpush1.bf16.msra.mxu0 0
    %1394 = vmatprep.subr.bf16.mxu0 0
    %1395 = vmatpush1.bf16.msra.mxu0 0
    %1396 = vmatprep.subr.bf16.mxu0 0
    %1397 = vmatpush1.bf16.msra.mxu0 0
    %1398 = vmatprep.subr.bf16.mxu0 0
    %1399 = vmatpush1.bf16.msra.mxu0 0
    %1400 = vmatprep.subr.bf16.mxu0 0
    %1401 = vmatpush1.bf16.msra.mxu0 0
    %1402 = vmatprep.subr.bf16.mxu0 0
    %1403 = vmatpush1.bf16.msra.mxu0 0
    %1404 = vmatprep.subr.bf16.mxu0 0
    %1405 = vmatpush1.bf16.msra.mxu0 0
    %1406 = vmatprep.subr.bf16.mxu0 0
    %1407 = vmatpush1.bf16.msra.mxu0 0
    %1408 = vmatprep.subr.bf16.mxu0 0
    %1409 = vmatpush1.bf16.msra.mxu0 0
    %1410 = vmatprep.subr.bf16.mxu0 0
    %1411 = vmatpush1.bf16.msra.mxu0 0
    %1412 = vmatprep.subr.bf16.mxu0 0
    %1413 = vmatpush1.bf16.msra.mxu0 0
    %1414 = vmatprep.subr.bf16.mxu0 0
    %1415 = vmatpush1.bf16.msra.mxu0 0
    %1416 = vmatprep.subr.bf16.mxu0 0
    %1417 = vmatpush1.bf16.msra.mxu0 0
    %1418 = vmatprep.subr.bf16.mxu0 0
    %1419 = vmatpush1.bf16.msra.mxu0 0
    %1420 = vmatprep.mubr.bf16.mxu0 0
    %1421 = vmatmul.mubr.bf16.gmra.mrb[0].mxu0 %v1386
    %v1422 = vpop.f32.mrb[0].mxu0
    %v1423 = vadd.f32 0.0, %v1422
    %v1424 = vpop.f32.mrb[0].mxu0
    %v1425 = vpop.f32.mrb[0].mxu0
    %v1426 = vpop.f32.mrb[0].mxu0
    %1427 = vdwg.mxu0
    %v1428 = vadd.f32 %v1380, %v1423
    %v1429 = vtanh.pop %v1428
    %v1430 = vmul.f32 %v1429, 0.5
    %v1431 = vadd.f32 %v1430, 0.5
    %v1432 = vmul.f32 %v1431, %v1326
    %1434 = vrot.lane.b32.xlu0 %v1429, 64
    %v1435 = vpop.permute.xlu0 %1434
    %v1437 = vmul.f32 %v1431, %v1435
    %1439 = vrot.lane.b32.xlu0 %v1437, 32
    %v1440 = vpop.permute.xlu0 %1439
    %v1442 = vadd.f32 %v1432, %v1440
    %v1443 = vtanh.pop %v1442
    %1445 = vrot.lane.b32.xlu0 %v1443, 64
    %v1446 = vpop.permute.xlu0 %1445
    %v1448 = vmul.f32 %v1431, %v1446
    %v1449 = vld [vmem:[%s6] sm:$0xff]
    %v1450 = vld [vmem:[%s6 + $0x8] sm:$0xff]
    %v1451 = vld [vmem:[%s6 + $0x10] sm:$0xff]
    %v1452 = vld [vmem:[%s6 + $0x18] sm:$0xff]
    %v1453 = vld [vmem:[#allocation10] sm:$0x1]
    %v1455 = vlaneseq
    %v1456 = vshrl.u32 %v1455, 7
    %v1457 = vsub.s32 0, %v1456
    %v1458 = vrot.slane %v1453, %v1457
    %1468 = vrot.lane.b32.xlu0 %v504, 32
    %v1469 = vpop.permute.xlu0 %1468
    %1470 = vrot.lane.b32.xlu0 %v642, 32
    %v1471 = vpop.permute.xlu0 %1470
    %1472 = vrot.lane.b32.xlu0 %v780, 32
    %v1473 = vpop.permute.xlu0 %1472
    %1474 = vrot.lane.b32.xlu0 %v918, 32
    %v1475 = vpop.permute.xlu0 %1474
    %1476 = vrot.lane.b32.xlu0 %v1056, 32
    %v1477 = vpop.permute.xlu0 %1476
    %1478 = vrot.lane.b32.xlu0 %v1194, 32
    %v1479 = vpop.permute.xlu0 %1478
    %1480 = vrot.lane.b32.xlu0 %v1332, 32
    %v1481 = vpop.permute.xlu0 %1480
    %1482 = vrot.lane.b32.xlu0 %v1448, 32
    %v1483 = vpop.permute.xlu0 %1482
    %v1484 = vsel %vm362, %v1469, 0
    %v1486 = vsel %vm362, %v1471, 0
    %v1488 = vsel %vm362, %v1473, 0
    %v1490 = vsel %vm362, %v1475, 0
    %v1492 = vsel %vm362, %v1477, 0
    %v1494 = vsel %vm362, %v1479, 0
    %v1496 = vsel %vm362, %v1481, 0
    %v1498 = vsel %vm362, %v1483, 0
    %1500 = vmatprep.subr.mxu0 0.0
    %1501 = vmatpush1.msra.mxu0 %v1449
    %1502 = vmatprep.subr.mxu0 0.0
    %1503 = vmatpush1.msra.mxu0 %v1450
    %1504 = vmatprep.subr.mxu0 0.0
    %1505 = vmatpush1.msra.mxu0 %v1451
    %1506 = vmatprep.subr.mxu0 0.0
    %1507 = vmatpush1.msra.mxu0 %v1452
    %1508 = vmatprep.subr.mxu0 0.0
    %1509 = vmatpush1.msra.mxu0 0.0
    %1510 = vmatprep.subr.mxu0 0.0
    %1511 = vmatpush1.msra.mxu0 0.0
    %1512 = vmatprep.subr.mxu0 0.0
    %1513 = vmatpush1.msra.mxu0 0.0
    %1514 = vmatprep.subr.mxu0 0.0
    %1515 = vmatpush1.msra.mxu0 0.0
    %1516 = vmatprep.subr.mxu0 0.0
    %1517 = vmatpush1.msra.mxu0 0.0
    %1518 = vmatprep.subr.mxu0 0.0
    %1519 = vmatpush1.msra.mxu0 0.0
    %1520 = vmatprep.subr.mxu0 0.0
    %1521 = vmatpush1.msra.mxu0 0.0
    %1522 = vmatprep.subr.mxu0 0.0
    %1523 = vmatpush1.msra.mxu0 0.0
    %1524 = vmatprep.subr.mxu0 0.0
    %1525 = vmatpush1.msra.mxu0 0.0
    %1526 = vmatprep.subr.mxu0 0.0
    %1527 = vmatpush1.msra.mxu0 0.0
    %1528 = vmatprep.subr.mxu0 0.0
    %1529 = vmatpush1.msra.mxu0 0.0
    %1530 = vmatprep.subr.mxu0 0.0
    %1531 = vmatpush1.msra.mxu0 0.0
    %1532 = vmatprep.subr.mxu0 0.0
    %1533 = vmatpush1.msra.mxu0 0.0
    %1534 = vmatprep.subr.mxu0 0.0
    %1535 = vmatpush1.msra.mxu0 0.0
    %1536 = vmatprep.subr.mxu0 0.0
    %1537 = vmatpush1.msra.mxu0 0.0
    %1538 = vmatprep.subr.mxu0 0.0
    %1539 = vmatpush1.msra.mxu0 0.0
    %1540 = vmatprep.subr.mxu0 0.0
    %1541 = vmatpush1.msra.mxu0 0.0
    %1542 = vmatprep.subr.mxu0 0.0
    %1543 = vmatpush1.msra.mxu0 0.0
    %1544 = vmatprep.subr.mxu0 0.0
    %1545 = vmatpush1.msra.mxu0 0.0
    %1546 = vmatprep.subr.mxu0 0.0
    %1547 = vmatpush1.msra.mxu0 0.0
    %1548 = vmatprep.subr.mxu0 0.0
    %1549 = vmatpush1.msra.mxu0 0.0
    %1550 = vmatprep.subr.mxu0 0.0
    %1551 = vmatpush1.msra.mxu0 0.0
    %1552 = vmatprep.subr.mxu0 0.0
    %1553 = vmatpush1.msra.mxu0 0.0
    %1554 = vmatprep.subr.mxu0 0.0
    %1555 = vmatpush1.msra.mxu0 0.0
    %1556 = vmatprep.subr.mxu0 0.0
    %1557 = vmatpush1.msra.mxu0 0.0
    %1558 = vmatprep.subr.mxu0 0.0
    %1559 = vmatpush1.msra.mxu0 0.0
    %1560 = vmatprep.subr.mxu0 0.0
    %1561 = vmatpush1.msra.mxu0 0.0
    %1562 = vmatprep.subr.mxu0 0.0
    %1563 = vmatpush1.msra.mxu0 0.0
    %1564 = vmatprep.mubr.f32.mxu0 0.0
    %1565 = vmatmul.mubr.f32.gmra.mrb[0].mxu0 %v1484
    %v1566 = vpop.f32.mrb[0].mxu0
    %v1567 = vadd.f32 %v1458, %v1566
    %v1568 = vpop.f32.mrb[0].mxu0
    %1569 = vmatprep.mubr.f32.mxu0 0.0
    %1570 = vmatmul.mubr.f32.gmra.mrb[0].mxu0 %v1486
    %v1571 = vpop.f32.mrb[0].mxu0
    %v1572 = vadd.f32 %v1458, %v1571
    %v1573 = vpop.f32.mrb[0].mxu0
    %1574 = vmatprep.mubr.f32.mxu0 0.0
    %1575 = vmatmul.mubr.f32.gmra.mrb[0].mxu0 %v1488
    %v1576 = vpop.f32.mrb[0].mxu0
    %v1577 = vadd.f32 %v1458, %v1576
    %v1578 = vpop.f32.mrb[0].mxu0
    %1579 = vmatprep.mubr.f32.mxu0 0.0
    %1580 = vmatmul.mubr.f32.gmra.mrb[0].mxu0 %v1490
    %v1581 = vpop.f32.mrb[0].mxu0
    %v1582 = vadd.f32 %v1458, %v1581
    %v1583 = vpop.f32.mrb[0].mxu0
    %1584 = vmatprep.mubr.f32.mxu0 0.0
    %1585 = vmatmul.mubr.f32.gmra.mrb[0].mxu0 %v1492
    %v1586 = vpop.f32.mrb[0].mxu0
    %v1587 = vadd.f32 %v1458, %v1586
    %v1588 = vpop.f32.mrb[0].mxu0
    %1589 = vmatprep.mubr.f32.mxu0 0.0
    %1590 = vmatmul.mubr.f32.gmra.mrb[0].mxu0 %v1494
    %v1591 = vpop.f32.mrb[0].mxu0
    %v1592 = vadd.f32 %v1458, %v1591
    %v1593 = vpop.f32.mrb[0].mxu0
    %1594 = vmatprep.mubr.f32.mxu0 0.0
    %1595 = vmatmul.mubr.f32.gmra.mrb[0].mxu0 %v1496
    %v1596 = vpop.f32.mrb[0].mxu0
    %v1597 = vadd.f32 %v1458, %v1596
    %v1598 = vpop.f32.mrb[0].mxu0
    %1599 = vmatprep.mubr.f32.mxu0 0.0
    %1600 = vmatmul.mubr.f32.gmra.mrb[0].mxu0 %v1498
    %v1601 = vpop.f32.mrb[0].mxu0
    %v1602 = vadd.f32 %v1458, %v1601
    %v1603 = vpop.f32.mrb[0].mxu0
    %1604 = vdwg.mxu0
    %1613 = vrot.lane.b32.xlu0 %v1567, 96
    %v1614 = vpop.permute.xlu0 %1613
    %1615 = vrot.lane.b32.xlu0 %v1572, 96
    %v1616 = vpop.permute.xlu0 %1615
    %1617 = vrot.lane.b32.xlu0 %v1577, 96
    %v1618 = vpop.permute.xlu0 %1617
    %1619 = vrot.lane.b32.xlu0 %v1582, 96
    %v1620 = vpop.permute.xlu0 %1619
    %1621 = vrot.lane.b32.xlu0 %v1587, 96
    %v1622 = vpop.permute.xlu0 %1621
    %1623 = vrot.lane.b32.xlu0 %v1592, 96
    %v1624 = vpop.permute.xlu0 %1623
    %1625 = vrot.lane.b32.xlu0 %v1597, 96
    %v1626 = vpop.permute.xlu0 %1625
    %1627 = vrot.lane.b32.xlu0 %v1602, 96
    %v1628 = vpop.permute.xlu0 %1627
    %v1637 = vmul.f32 %v1602, %v1614
    %v1638 = vmul.f32 %v1602, %v1616
    %v1639 = vmul.f32 %v1602, %v1618
    %v1640 = vmul.f32 %v1602, %v1620
    %v1641 = vmul.f32 %v1602, %v1622
    %v1642 = vmul.f32 %v1602, %v1624
    %v1643 = vmul.f32 %v1602, %v1626
    %v1644 = vmul.f32 %v1602, %v1628
    %v1645 = vld [vmem:[%s10] sm:$0xff]
    %v1646 = vld [vmem:[%s10 + $0x8] sm:$0xff]
    %v1647 = vld [vmem:[%s10 + $0x10] sm:$0xff]
    %v1648 = vld [vmem:[%s10 + $0x18] sm:$0xff]
    %v1650 = vsel %vm362, %v1637, 0
    %v1653 = vsel %vm362, %v1638, 0
    %v1656 = vsel %vm362, %v1639, 0
    %v1659 = vsel %vm362, %v1640, 0
    %v1662 = vsel %vm362, %v1641, 0
    %v1665 = vsel %vm362, %v1642, 0
    %v1668 = vsel %vm362, %v1643, 0
    %v1671 = vsel %vm362, %v1644, 0
    %1673 = vmatprep.subr.mxu0 0.0
    %1674 = vmatpush1.msra.mxu0 %v1645
    %1675 = vmatprep.subr.mxu0 0.0
    %1676 = vmatpush1.msra.mxu0 %v1646
    %1677 = vmatprep.subr.mxu0 0.0
    %1678 = vmatpush1.msra.mxu0 %v1647
    %1679 = vmatprep.subr.mxu0 0.0
    %1680 = vmatpush1.msra.mxu0 %v1648
    %1681 = vmatprep.subr.mxu0 0.0
    %1682 = vmatpush1.msra.mxu0 0.0
    %1683 = vmatprep.subr.mxu0 0.0
    %1684 = vmatpush1.msra.mxu0 0.0
    %1685 = vmatprep.subr.mxu0 0.0
    %1686 = vmatpush1.msra.mxu0 0.0
    %1687 = vmatprep.subr.mxu0 0.0
    %1688 = vmatpush1.msra.mxu0 0.0
    %1689 = vmatprep.subr.mxu0 0.0
    %1690 = vmatpush1.msra.mxu0 0.0
    %1691 = vmatprep.subr.mxu0 0.0
    %1692 = vmatpush1.msra.mxu0 0.0
    %1693 = vmatprep.subr.mxu0 0.0
    %1694 = vmatpush1.msra.mxu0 0.0
    %1695 = vmatprep.subr.mxu0 0.0
    %1696 = vmatpush1.msra.mxu0 0.0
    %1697 = vmatprep.subr.mxu0 0.0
    %1698 = vmatpush1.msra.mxu0 0.0
    %1699 = vmatprep.subr.mxu0 0.0
    %1700 = vmatpush1.msra.mxu0 0.0
    %1701 = vmatprep.subr.mxu0 0.0
    %1702 = vmatpush1.msra.mxu0 0.0
    %1703 = vmatprep.subr.mxu0 0.0
    %1704 = vmatpush1.msra.mxu0 0.0
    %1705 = vmatprep.subr.mxu0 0.0
    %1706 = vmatpush1.msra.mxu0 0.0
    %1707 = vmatprep.subr.mxu0 0.0
    %1708 = vmatpush1.msra.mxu0 0.0
    %1709 = vmatprep.subr.mxu0 0.0
    %1710 = vmatpush1.msra.mxu0 0.0
    %1711 = vmatprep.subr.mxu0 0.0
    %1712 = vmatpush1.msra.mxu0 0.0
    %1713 = vmatprep.subr.mxu0 0.0
    %1714 = vmatpush1.msra.mxu0 0.0
    %1715 = vmatprep.subr.mxu0 0.0
    %1716 = vmatpush1.msra.mxu0 0.0
    %1717 = vmatprep.subr.mxu0 0.0
    %1718 = vmatpush1.msra.mxu0 0.0
    %1719 = vmatprep.subr.mxu0 0.0
    %1720 = vmatpush1.msra.mxu0 0.0
    %1721 = vmatprep.subr.mxu0 0.0
    %1722 = vmatpush1.msra.mxu0 0.0
    %1723 = vmatprep.subr.mxu0 0.0
    %1724 = vmatpush1.msra.mxu0 0.0
    %1725 = vmatprep.subr.mxu0 0.0
    %1726 = vmatpush1.msra.mxu0 0.0
    %1727 = vmatprep.subr.mxu0 0.0
    %1728 = vmatpush1.msra.mxu0 0.0
    %1729 = vmatprep.subr.mxu0 0.0
    %1730 = vmatpush1.msra.mxu0 0.0
    %1731 = vmatprep.subr.mxu0 0.0
    %1732 = vmatpush1.msra.mxu0 0.0
    %1733 = vmatprep.subr.mxu0 0.0
    %1734 = vmatpush1.msra.mxu0 0.0
    %1735 = vmatprep.subr.mxu0 0.0
    %1736 = vmatpush1.msra.mxu0 0.0
    %1737 = vmatprep.mubr.f32.mxu0 0.0
    %1738 = vmatmul.mubr.f32.gmra.mrb[0].mxu0 %v1650
    %v1739 = vpop.f32.mrb[0].mxu0
    %v1740 = vadd.f32 0.0, %v1739
    %v1741 = vpop.f32.mrb[0].mxu0
    %1742 = vmatprep.mubr.f32.mxu0 0.0
    %1743 = vmatmul.mubr.f32.gmra.mrb[0].mxu0 %v1653
    %v1744 = vpop.f32.mrb[0].mxu0
    %v1745 = vadd.f32 0.0, %v1744
    %v1746 = vpop.f32.mrb[0].mxu0
    %1747 = vmatprep.mubr.f32.mxu0 0.0
    %1748 = vmatmul.mubr.f32.gmra.mrb[0].mxu0 %v1656
    %v1749 = vpop.f32.mrb[0].mxu0
    %v1750 = vadd.f32 0.0, %v1749
    %v1751 = vpop.f32.mrb[0].mxu0
    %1752 = vmatprep.mubr.f32.mxu0 0.0
    %1753 = vmatmul.mubr.f32.gmra.mrb[0].mxu0 %v1659
    %v1754 = vpop.f32.mrb[0].mxu0
    %v1755 = vadd.f32 0.0, %v1754
    %v1756 = vpop.f32.mrb[0].mxu0
    %1757 = vmatprep.mubr.f32.mxu0 0.0
    %1758 = vmatmul.mubr.f32.gmra.mrb[0].mxu0 %v1662
    %v1759 = vpop.f32.mrb[0].mxu0
    %v1760 = vadd.f32 0.0, %v1759
    %v1761 = vpop.f32.mrb[0].mxu0
    %1762 = vmatprep.mubr.f32.mxu0 0.0
    %1763 = vmatmul.mubr.f32.gmra.mrb[0].mxu0 %v1665
    %v1764 = vpop.f32.mrb[0].mxu0
    %v1765 = vadd.f32 0.0, %v1764
    %v1766 = vpop.f32.mrb[0].mxu0
    %1767 = vmatprep.mubr.f32.mxu0 0.0
    %1768 = vmatmul.mubr.f32.gmra.mrb[0].mxu0 %v1668
    %v1769 = vpop.f32.mrb[0].mxu0
    %v1770 = vadd.f32 0.0, %v1769
    %v1771 = vpop.f32.mrb[0].mxu0
    %1772 = vmatprep.mubr.f32.mxu0 0.0
    %1773 = vmatmul.mubr.f32.gmra.mrb[0].mxu0 %v1671
    %v1774 = vpop.f32.mrb[0].mxu0
    %v1775 = vadd.f32 0.0, %v1774
    %v1776 = vpop.f32.mrb[0].mxu0
    %1777 = vdwg.mxu0
    %v1778 = vmul.f32 %v1740, 0.35355338
    %v1779 = vmul.f32 %v1745, 0.35355338
    %v1780 = vmul.f32 %v1750, 0.35355338
    %v1781 = vmul.f32 %v1755, 0.35355338
    %v1782 = vmul.f32 %v1760, 0.35355338
    %v1783 = vmul.f32 %v1765, 0.35355338
    %v1784 = vmul.f32 %v1770, 0.35355338
    %v1785 = vmul.f32 %v1775, 0.35355338
    %vm1786 = vcmask 31744
    %v1787 = vsel %vm1786, %v1778, -inf
    %v1788 = vsel %vm1786, %v1779, -inf
    %v1789 = vsel %vm1786, %v1780, -inf
    %v1790 = vsel %vm1786, %v1781, -inf
    %v1791 = vsel %vm1786, %v1782, -inf
    %v1792 = vmax.f32 %v1787, %v1791
    %v1793 = vsel %vm1786, %v1783, -inf
    %v1794 = vmax.f32 %v1788, %v1793
    %v1795 = vsel %vm1786, %v1784, -inf
    %v1796 = vmax.f32 %v1789, %v1795
    %v1797 = vsel %vm1786, %v1785, -inf
    %v1798 = vmax.f32 %v1790, %v1797
    %v1799 = vmax.f32 %v1792, %v1794
    %v1800 = vmax.f32 %v1796, %v1798
    %v1801 = vmax.f32 %v1799, %v1800
    %v1802 = vsub.f32 %v1778, %v1801
    %v1803 = vsub.f32 %v1779, %v1801
    %v1804 = vsub.f32 %v1780, %v1801
    %v1805 = vsub.f32 %v1781, %v1801
    %v1806 = vsub.f32 %v1782, %v1801
    %v1807 = vsub.f32 %v1783, %v1801
    %v1808 = vsub.f32 %v1784, %v1801
    %v1809 = vsub.f32 %v1785, %v1801
    %v1810 = vmul.f32 %v1802, 1.442695
    %v1811 = vpow.pop %v1810
    %v1812 = vmul.f32 %v1803, 1.442695
    %v1813 = vpow.pop %v1812
    %v1814 = vmul.f32 %v1804, 1.442695
    %v1815 = vpow.pop %v1814
    %v1816 = vmul.f32 %v1805, 1.442695
    %v1817 = vpow.pop %v1816
    %v1818 = vmul.f32 %v1806, 1.442695
    %v1819 = vpow.pop %v1818
    %v1820 = vmul.f32 %v1807, 1.442695
    %v1821 = vpow.pop %v1820
    %v1822 = vmul.f32 %v1808, 1.442695
    %v1823 = vpow.pop %v1822
    %v1824 = vmul.f32 %v1809, 1.442695
    %v1825 = vpow.pop %v1824
    %v1826 = vsel %vm1786, %v1811, 0.0
    %v1827 = vsel %vm1786, %v1813, 0.0
    %v1828 = vadd.f32 %v1826, %v1827
    %v1829 = vsel %vm1786, %v1815, 0.0
    %v1830 = vadd.f32 %v1828, %v1829
    %v1831 = vsel %vm1786, %v1817, 0.0
    %v1832 = vadd.f32 %v1830, %v1831
    %v1833 = vsel %vm1786, %v1819, 0.0
    %v1834 = vadd.f32 %v1832, %v1833
    %v1835 = vsel %vm1786, %v1821, 0.0
    %v1836 = vadd.f32 %v1834, %v1835
    %v1837 = vsel %vm1786, %v1823, 0.0
    %v1838 = vadd.f32 %v1836, %v1837
    %v1839 = vsel %vm1786, %v1825, 0.0
    %v1840 = vadd.f32 %v1838, %v1839
    %v1841 = vrcp.pop %v1840
    %v1842 = vmul.f32 %v1811, %v1841
    %v1843 = vmul.f32 %v1813, %v1841
    %v1844 = vmul.f32 %v1815, %v1841
    %v1845 = vmul.f32 %v1817, %v1841
    %v1846 = vmul.f32 %v1819, %v1841
    %v1847 = vmul.f32 %v1821, %v1841
    %v1848 = vmul.f32 %v1823, %v1841
    %v1849 = vmul.f32 %v1825, %v1841
    %v1850 = vld [vmem:[#allocation14] sm:$0xf]
    %v1852 = vsel %vm1786, %v1842, 0
    %v1855 = vsel %vm1786, %v1843, 0
    %v1858 = vsel %vm1786, %v1844, 0
    %v1861 = vsel %vm1786, %v1845, 0
    %v1864 = vsel %vm1786, %v1846, 0
    %v1867 = vsel %vm1786, %v1847, 0
    %v1870 = vsel %vm1786, %v1848, 0
    %v1873 = vsel %vm1786, %v1849, 0
    %vm1875 = vcmask 1043456
    %v1877 = vsel %vm1875, %v1850, 0
    %1879 = vmatprep.subr.mxu0 0.0
    %1880 = vmatpush1.msra.mxu0 %v1877
    %1881 = vmatprep.subr.mxu0 0.0
    %1882 = vmatpush1.msra.mxu0 0.0
    %1883 = vmatprep.subr.mxu0 0.0
    %1884 = vmatpush1.msra.mxu0 0.0
    %1885 = vmatprep.subr.mxu0 0.0
    %1886 = vmatpush1.msra.mxu0 0.0
    %1887 = vmatprep.subr.mxu0 0.0
    %1888 = vmatpush1.msra.mxu0 0.0
    %1889 = vmatprep.subr.mxu0 0.0
    %1890 = vmatpush1.msra.mxu0 0.0
    %1891 = vmatprep.subr.mxu0 0.0
    %1892 = vmatpush1.msra.mxu0 0.0
    %1893 = vmatprep.subr.mxu0 0.0
    %1894 = vmatpush1.msra.mxu0 0.0
    %1895 = vmatprep.subr.mxu0 0.0
    %1896 = vmatpush1.msra.mxu0 0.0
    %1897 = vmatprep.subr.mxu0 0.0
    %1898 = vmatpush1.msra.mxu0 0.0
    %1899 = vmatprep.subr.mxu0 0.0
    %1900 = vmatpush1.msra.mxu0 0.0
    %1901 = vmatprep.subr.mxu0 0.0
    %1902 = vmatpush1.msra.mxu0 0.0
    %1903 = vmatprep.subr.mxu0 0.0
    %1904 = vmatpush1.msra.mxu0 0.0
    %1905 = vmatprep.subr.mxu0 0.0
    %1906 = vmatpush1.msra.mxu0 0.0
    %1907 = vmatprep.subr.mxu0 0.0
    %1908 = vmatpush1.msra.mxu0 0.0
    %1909 = vmatprep.subr.mxu0 0.0
    %1910 = vmatpush1.msra.mxu0 0.0
    %1911 = vmatprep.subr.mxu0 0.0
    %1912 = vmatpush1.msra.mxu0 0.0
    %1913 = vmatprep.subr.mxu0 0.0
    %1914 = vmatpush1.msra.mxu0 0.0
    %1915 = vmatprep.subr.mxu0 0.0
    %1916 = vmatpush1.msra.mxu0 0.0
    %1917 = vmatprep.subr.mxu0 0.0
    %1918 = vmatpush1.msra.mxu0 0.0
    %1919 = vmatprep.subr.mxu0 0.0
    %1920 = vmatpush1.msra.mxu0 0.0
    %1921 = vmatprep.subr.mxu0 0.0
    %1922 = vmatpush1.msra.mxu0 0.0
    %1923 = vmatprep.subr.mxu0 0.0
    %1924 = vmatpush1.msra.mxu0 0.0
    %1925 = vmatprep.subr.mxu0 0.0
    %1926 = vmatpush1.msra.mxu0 0.0
    %1927 = vmatprep.subr.mxu0 0.0
    %1928 = vmatpush1.msra.mxu0 0.0
    %1929 = vmatprep.subr.mxu0 0.0
    %1930 = vmatpush1.msra.mxu0 0.0
    %1931 = vmatprep.subr.mxu0 0.0
    %1932 = vmatpush1.msra.mxu0 0.0
    %1933 = vmatprep.subr.mxu0 0.0
    %1934 = vmatpush1.msra.mxu0 0.0
    %1935 = vmatprep.subr.mxu0 0.0
    %1936 = vmatpush1.msra.mxu0 0.0
    %1937 = vmatprep.subr.mxu0 0.0
    %1938 = vmatpush1.msra.mxu0 0.0
    %1939 = vmatprep.subr.mxu0 0.0
    %1940 = vmatpush1.msra.mxu0 0.0
    %1941 = vmatprep.subr.mxu0 0.0
    %1942 = vmatpush1.msra.mxu0 0.0
    %1943 = vmatprep.mubr.f32.mxu0 0.0
    %1944 = vmatmul.mubr.f32.gmra.mrb[0].mxu0 %v1852
    %v1945 = vpop.f32.mrb[0].mxu0
    %v1946 = vadd.f32 0.0, %v1945
    %v1947 = vpop.f32.mrb[0].mxu0
    %1948 = vmatprep.mubr.f32.mxu0 0.0
    %1949 = vmatmul.mubr.f32.gmra.mrb[0].mxu0 %v1855
    %v1950 = vpop.f32.mrb[0].mxu0
    %v1951 = vadd.f32 0.0, %v1950
    %v1952 = vpop.f32.mrb[0].mxu0
    %1953 = vmatprep.mubr.f32.mxu0 0.0
    %1954 = vmatmul.mubr.f32.gmra.mrb[0].mxu0 %v1858
    %v1955 = vpop.f32.mrb[0].mxu0
    %v1956 = vadd.f32 0.0, %v1955
    %v1957 = vpop.f32.mrb[0].mxu0
    %1958 = vmatprep.mubr.f32.mxu0 0.0
    %1959 = vmatmul.mubr.f32.gmra.mrb[0].mxu0 %v1861
    %v1960 = vpop.f32.mrb[0].mxu0
    %v1961 = vadd.f32 0.0, %v1960
    %v1962 = vpop.f32.mrb[0].mxu0
    %1963 = vmatprep.mubr.f32.mxu0 0.0
    %1964 = vmatmul.mubr.f32.gmra.mrb[0].mxu0 %v1864
    %v1965 = vpop.f32.mrb[0].mxu0
    %v1966 = vadd.f32 0.0, %v1965
    %v1967 = vpop.f32.mrb[0].mxu0
    %1968 = vmatprep.mubr.f32.mxu0 0.0
    %1969 = vmatmul.mubr.f32.gmra.mrb[0].mxu0 %v1867
    %v1970 = vpop.f32.mrb[0].mxu0
    %v1971 = vadd.f32 0.0, %v1970
    %v1972 = vpop.f32.mrb[0].mxu0
    %1973 = vmatprep.mubr.f32.mxu0 0.0
    %1974 = vmatmul.mubr.f32.gmra.mrb[0].mxu0 %v1870
    %v1975 = vpop.f32.mrb[0].mxu0
    %v1976 = vadd.f32 0.0, %v1975
    %v1977 = vpop.f32.mrb[0].mxu0
    %1978 = vmatprep.mubr.f32.mxu0 0.0
    %1979 = vmatmul.mubr.f32.gmra.mrb[0].mxu0 %v1873
    %v1980 = vpop.f32.mrb[0].mxu0
    %v1981 = vadd.f32 0.0, %v1980
    %v1982 = vpop.f32.mrb[0].mxu0
    %1983 = vdwg.mxu0
    %1984 = vrot.lane.b32.xlu0 %v1567, 64
    %v1985 = vpop.permute.xlu0 %1984
    %1986 = vrot.lane.b32.xlu0 %v1572, 64
    %v1987 = vpop.permute.xlu0 %1986
    %1988 = vrot.lane.b32.xlu0 %v1577, 64
    %v1989 = vpop.permute.xlu0 %1988
    %1990 = vrot.lane.b32.xlu0 %v1582, 64
    %v1991 = vpop.permute.xlu0 %1990
    %1992 = vrot.lane.b32.xlu0 %v1587, 64
    %v1993 = vpop.permute.xlu0 %1992
    %1994 = vrot.lane.b32.xlu0 %v1592, 64
    %v1995 = vpop.permute.xlu0 %1994
    %1996 = vrot.lane.b32.xlu0 %v1597, 64
    %v1997 = vpop.permute.xlu0 %1996
    %1998 = vrot.lane.b32.xlu0 %v1602, 64
    %v1999 = vpop.permute.xlu0 %1998
    %v2008 = vmul.f32 %v1946, %v1985
    %v2009 = vmul.f32 %v1951, %v1987
    %v2010 = vmul.f32 %v1956, %v1989
    %v2011 = vmul.f32 %v1961, %v1991
    %v2012 = vmul.f32 %v1966, %v1993
    %v2013 = vmul.f32 %v1971, %v1995
    %v2014 = vmul.f32 %v1976, %v1997
    %v2015 = vmul.f32 %v1981, %v1999
    %v2016 = vsel %vm362, %v2008, 0.0
    %v2017 = vsel %vm362, %v2009, 0.0
    %v2018 = vadd.f32 %v2016, %v2017
    %v2019 = vsel %vm362, %v2010, 0.0
    %v2020 = vadd.f32 %v2018, %v2019
    %v2021 = vsel %vm362, %v2011, 0.0
    %v2022 = vadd.f32 %v2020, %v2021
    %v2023 = vsel %vm362, %v2012, 0.0
    %v2024 = vadd.f32 %v2022, %v2023
    %v2025 = vsel %vm362, %v2013, 0.0
    %v2026 = vadd.f32 %v2024, %v2025
    %v2027 = vsel %vm362, %v2014, 0.0
    %v2028 = vadd.f32 %v2026, %v2027
    %v2029 = vsel %vm362, %v2015, 0.0
    %v2030 = vadd.f32 %v2028, %v2029
    %v2031 = vld [vmem:[#allocation11] sm:$0xff]
    %v2032 = vld [vmem:[#allocation11 + $0x8] sm:$0xff]
    %v2033 = vld [vmem:[#allocation11 + $0x10] sm:$0xff]
    %v2034 = vld [vmem:[#allocation11 + $0x18] sm:$0xff]
    %v2035 = vld [vmem:[#allocation13] sm:$0x1]
    %v2037 = vlaneseq
    %v2038 = vshrl.u32 %v2037, 7
    %v2039 = vsub.s32 0, %v2038
    %v2040 = vrot.slane %v2035, %v2039
    %v2043 = vsel %vm362, %v2030, 0
    %2045 = vmatprep.subr.mxu0 0.0
    %2046 = vmatpush1.msra.mxu0 %v2031
    %2047 = vmatprep.subr.mxu0 0.0
    %2048 = vmatpush1.msra.mxu0 %v2032
    %2049 = vmatprep.subr.mxu0 0.0
    %2050 = vmatpush1.msra.mxu0 %v2033
    %2051 = vmatprep.subr.mxu0 0.0
    %2052 = vmatpush1.msra.mxu0 %v2034
    %2053 = vmatprep.subr.mxu0 0.0
    %2054 = vmatpush1.msra.mxu0 0.0
    %2055 = vmatprep.subr.mxu0 0.0
    %2056 = vmatpush1.msra.mxu0 0.0
    %2057 = vmatprep.subr.mxu0 0.0
    %2058 = vmatpush1.msra.mxu0 0.0
    %2059 = vmatprep.subr.mxu0 0.0
    %2060 = vmatpush1.msra.mxu0 0.0
    %2061 = vmatprep.subr.mxu0 0.0
    %2062 = vmatpush1.msra.mxu0 0.0
    %2063 = vmatprep.subr.mxu0 0.0
    %2064 = vmatpush1.msra.mxu0 0.0
    %2065 = vmatprep.subr.mxu0 0.0
    %2066 = vmatpush1.msra.mxu0 0.0
    %2067 = vmatprep.subr.mxu0 0.0
    %2068 = vmatpush1.msra.mxu0 0.0
    %2069 = vmatprep.subr.mxu0 0.0
    %2070 = vmatpush1.msra.mxu0 0.0
    %2071 = vmatprep.subr.mxu0 0.0
    %2072 = vmatpush1.msra.mxu0 0.0
    %2073 = vmatprep.subr.mxu0 0.0
    %2074 = vmatpush1.msra.mxu0 0.0
    %2075 = vmatprep.subr.mxu0 0.0
    %2076 = vmatpush1.msra.mxu0 0.0
    %2077 = vmatprep.subr.mxu0 0.0
    %2078 = vmatpush1.msra.mxu0 0.0
    %2079 = vmatprep.subr.mxu0 0.0
    %2080 = vmatpush1.msra.mxu0 0.0
    %2081 = vmatprep.subr.mxu0 0.0
    %2082 = vmatpush1.msra.mxu0 0.0
    %2083 = vmatprep.subr.mxu0 0.0
    %2084 = vmatpush1.msra.mxu0 0.0
    %2085 = vmatprep.subr.mxu0 0.0
    %2086 = vmatpush1.msra.mxu0 0.0
    %2087 = vmatprep.subr.mxu0 0.0
    %2088 = vmatpush1.msra.mxu0 0.0
    %2089 = vmatprep.subr.mxu0 0.0
    %2090 = vmatpush1.msra.mxu0 0.0
    %2091 = vmatprep.subr.mxu0 0.0
    %2092 = vmatpush1.msra.mxu0 0.0
    %2093 = vmatprep.subr.mxu0 0.0
    %2094 = vmatpush1.msra.mxu0 0.0
    %2095 = vmatprep.subr.mxu0 0.0
    %2096 = vmatpush1.msra.mxu0 0.0
    %2097 = vmatprep.subr.mxu0 0.0
    %2098 = vmatpush1.msra.mxu0 0.0
    %2099 = vmatprep.subr.mxu0 0.0
    %2100 = vmatpush1.msra.mxu0 0.0
    %2101 = vmatprep.subr.mxu0 0.0
    %2102 = vmatpush1.msra.mxu0 0.0
    %2103 = vmatprep.subr.mxu0 0.0
    %2104 = vmatpush1.msra.mxu0 0.0
    %2105 = vmatprep.subr.mxu0 0.0
    %2106 = vmatpush1.msra.mxu0 0.0
    %2107 = vmatprep.subr.mxu0 0.0
    %2108 = vmatpush1.msra.mxu0 0.0
    %2109 = vmatprep.mubr.f32.mxu0 0.0
    %2110 = vmatmul.mubr.f32.gmra.mrb[0].mxu0 %v2043
    %v2111 = vpop.f32.mrb[0].mxu0
    %v2112 = vadd.f32 %v2040, %v2111
    %v2113 = vpop.f32.mrb[0].mxu0
    %2114 = vdwg.mxu0
    %v2115 = vld [vmem:[%s12] sm:$0xff]
    %v2116 = vld [vmem:[%s12 + $0x8] sm:$0xff]
    %v2117 = vld [vmem:[%s12 + $0x10] sm:$0xff]
    %v2118 = vld [vmem:[%s12 + $0x18] sm:$0xff]
    %v2119 = vld [vmem:[%s13] sm:$0x1]
    %v2121 = vlaneseq
    %v2122 = vshrl.u32 %v2121, 7
    %v2123 = vsub.s32 0, %v2122
    %v2124 = vrot.slane %v2119, %v2123
    %v2127 = vsel %vm362, %v2112, 0
    %2129 = vmatprep.subr.mxu0 0.0
    %2130 = vmatpush1.msra.mxu0 %v2115
    %2131 = vmatprep.subr.mxu0 0.0
    %2132 = vmatpush1.msra.mxu0 %v2116
    %2133 = vmatprep.subr.mxu0 0.0
    %2134 = vmatpush1.msra.mxu0 %v2117
    %2135 = vmatprep.subr.mxu0 0.0
    %2136 = vmatpush1.msra.mxu0 %v2118
    %2137 = vmatprep.subr.mxu0 0.0
    %2138 = vmatpush1.msra.mxu0 0.0
    %2139 = vmatprep.subr.mxu0 0.0
    %2140 = vmatpush1.msra.mxu0 0.0
    %2141 = vmatprep.subr.mxu0 0.0
    %2142 = vmatpush1.msra.mxu0 0.0
    %2143 = vmatprep.subr.mxu0 0.0
    %2144 = vmatpush1.msra.mxu0 0.0
    %2145 = vmatprep.subr.mxu0 0.0
    %2146 = vmatpush1.msra.mxu0 0.0
    %2147 = vmatprep.subr.mxu0 0.0
    %2148 = vmatpush1.msra.mxu0 0.0
    %2149 = vmatprep.subr.mxu0 0.0
    %2150 = vmatpush1.msra.mxu0 0.0
    %2151 = vmatprep.subr.mxu0 0.0
    %2152 = vmatpush1.msra.mxu0 0.0
    %2153 = vmatprep.subr.mxu0 0.0
    %2154 = vmatpush1.msra.mxu0 0.0
    %2155 = vmatprep.subr.mxu0 0.0
    %2156 = vmatpush1.msra.mxu0 0.0
    %2157 = vmatprep.subr.mxu0 0.0
    %2158 = vmatpush1.msra.mxu0 0.0
    %2159 = vmatprep.subr.mxu0 0.0
    %2160 = vmatpush1.msra.mxu0 0.0
    %2161 = vmatprep.subr.mxu0 0.0
    %2162 = vmatpush1.msra.mxu0 0.0
    %2163 = vmatprep.subr.mxu0 0.0
    %2164 = vmatpush1.msra.mxu0 0.0
    %2165 = vmatprep.subr.mxu0 0.0
    %2166 = vmatpush1.msra.mxu0 0.0
    %2167 = vmatprep.subr.mxu0 0.0
    %2168 = vmatpush1.msra.mxu0 0.0
    %2169 = vmatprep.subr.mxu0 0.0
    %2170 = vmatpush1.msra.mxu0 0.0
    %2171 = vmatprep.subr.mxu0 0.0
    %2172 = vmatpush1.msra.mxu0 0.0
    %2173 = vmatprep.subr.mxu0 0.0
    %2174 = vmatpush1.msra.mxu0 0.0
    %2175 = vmatprep.subr.mxu0 0.0
    %2176 = vmatpush1.msra.mxu0 0.0
    %2177 = vmatprep.subr.mxu0 0.0
    %2178 = vmatpush1.msra.mxu0 0.0
    %2179 = vmatprep.subr.mxu0 0.0
    %2180 = vmatpush1.msra.mxu0 0.0
    %2181 = vmatprep.subr.mxu0 0.0
    %2182 = vmatpush1.msra.mxu0 0.0
    %2183 = vmatprep.subr.mxu0 0.0
    %2184 = vmatpush1.msra.mxu0 0.0
    %2185 = vmatprep.subr.mxu0 0.0
    %2186 = vmatpush1.msra.mxu0 0.0
    %2187 = vmatprep.subr.mxu0 0.0
    %2188 = vmatpush1.msra.mxu0 0.0
    %2189 = vmatprep.subr.mxu0 0.0
    %2190 = vmatpush1.msra.mxu0 0.0
    %2191 = vmatprep.subr.mxu0 0.0
    %2192 = vmatpush1.msra.mxu0 0.0
    %2193 = vmatprep.mubr.f32.mxu0 0.0
    %2194 = vmatmul.mubr.f32.gmra.mrb[0].mxu0 %v2127
    %v2195 = vpop.f32.mrb[0].mxu0
    %v2196 = vadd.f32 %v2124, %v2195
    %v2197 = vpop.f32.mrb[0].mxu0
    %2198 = vdwg.mxu0
    %v2199 = vmax.f32 %v2196, 0.0
    %v2200 = vld [vmem:[%s14] sm:$0xff]
    %v2201 = vld [vmem:[%s14 + $0x8] sm:$0xff]
    %v2202 = vld [vmem:[%s15] sm:$0x1]
    %v2204 = vlaneseq
    %v2205 = vshrl.u32 %v2204, 7
    %v2206 = vsub.s32 0, %v2205
    %v2207 = vrot.slane %v2202, %v2206
    %v2210 = vsel %vm173, %v2199, 0
    %2212 = vmatprep.subr.mxu0 0.0
    %2213 = vmatpush1.msra.mxu0 %v2200
    %2214 = vmatprep.subr.mxu0 0.0
    %2215 = vmatpush1.msra.mxu0 %v2201
    %2216 = vmatprep.subr.mxu0 0.0
    %2217 = vmatpush1.msra.mxu0 0.0
    %2218 = vmatprep.subr.mxu0 0.0
    %2219 = vmatpush1.msra.mxu0 0.0
    %2220 = vmatprep.subr.mxu0 0.0
    %2221 = vmatpush1.msra.mxu0 0.0
    %2222 = vmatprep.subr.mxu0 0.0
    %2223 = vmatpush1.msra.mxu0 0.0
    %2224 = vmatprep.subr.mxu0 0.0
    %2225 = vmatpush1.msra.mxu0 0.0
    %2226 = vmatprep.subr.mxu0 0.0
    %2227 = vmatpush1.msra.mxu0 0.0
    %2228 = vmatprep.subr.mxu0 0.0
    %2229 = vmatpush1.msra.mxu0 0.0
    %2230 = vmatprep.subr.mxu0 0.0
    %2231 = vmatpush1.msra.mxu0 0.0
    %2232 = vmatprep.subr.mxu0 0.0
    %2233 = vmatpush1.msra.mxu0 0.0
    %2234 = vmatprep.subr.mxu0 0.0
    %2235 = vmatpush1.msra.mxu0 0.0
    %2236 = vmatprep.subr.mxu0 0.0
    %2237 = vmatpush1.msra.mxu0 0.0
    %2238 = vmatprep.subr.mxu0 0.0
    %2239 = vmatpush1.msra.mxu0 0.0
    %2240 = vmatprep.subr.mxu0 0.0
    %2241 = vmatpush1.msra.mxu0 0.0
    %2242 = vmatprep.subr.mxu0 0.0
    %2243 = vmatpush1.msra.mxu0 0.0
    %2244 = vmatprep.subr.mxu0 0.0
    %2245 = vmatpush1.msra.mxu0 0.0
    %2246 = vmatprep.subr.mxu0 0.0
    %2247 = vmatpush1.msra.mxu0 0.0
    %2248 = vmatprep.subr.mxu0 0.0
    %2249 = vmatpush1.msra.mxu0 0.0
    %2250 = vmatprep.subr.mxu0 0.0
    %2251 = vmatpush1.msra.mxu0 0.0
    %2252 = vmatprep.subr.mxu0 0.0
    %2253 = vmatpush1.msra.mxu0 0.0
    %2254 = vmatprep.subr.mxu0 0.0
    %2255 = vmatpush1.msra.mxu0 0.0
    %2256 = vmatprep.subr.mxu0 0.0
    %2257 = vmatpush1.msra.mxu0 0.0
    %2258 = vmatprep.subr.mxu0 0.0
    %2259 = vmatpush1.msra.mxu0 0.0
    %2260 = vmatprep.subr.mxu0 0.0
    %2261 = vmatpush1.msra.mxu0 0.0
    %2262 = vmatprep.subr.mxu0 0.0
    %2263 = vmatpush1.msra.mxu0 0.0
    %2264 = vmatprep.subr.mxu0 0.0
    %2265 = vmatpush1.msra.mxu0 0.0
    %2266 = vmatprep.subr.mxu0 0.0
    %2267 = vmatpush1.msra.mxu0 0.0
    %2268 = vmatprep.subr.mxu0 0.0
    %2269 = vmatpush1.msra.mxu0 0.0
    %2270 = vmatprep.subr.mxu0 0.0
    %2271 = vmatpush1.msra.mxu0 0.0
    %2272 = vmatprep.subr.mxu0 0.0
    %2273 = vmatpush1.msra.mxu0 0.0
    %2274 = vmatprep.subr.mxu0 0.0
    %2275 = vmatpush1.msra.mxu0 0.0
    %2276 = vmatprep.mubr.f32.mxu0 0.0
    %2277 = vmatmul.mubr.f32.gmra.mrb[0].mxu0 %v2210
    %v2278 = vpop.f32.mrb[0].mxu0
    %v2279 = vadd.f32 %v2207, %v2278
    %v2280 = vpop.f32.mrb[0].mxu0
    %2281 = vdwg.mxu0
    %2282 = vst [vmem:[#allocation16] sm:$0xff] %v2279
    // Predicated region
    $region98: #{tpu_custom_call.1} parent=1 // pred_check
      _
    $region99: #{tpu_custom_call.1} parent=1 // pred_check_branch
      %2284 = sbr.rel (0) target = $region101
    $region100: #{tpu_custom_call.1} parent=1 // pred_region
      %s2286 = ssub.s32 128, 128
      %2287 = vsyncadd [#allocation4], %s2286
      %s2289 = sshll.u32 [#allocation16], 4
      %s2290 = int_to_ptr.vmem [resolvable:$true] %s2289
      %2292 = dma.vmem_to_hbm [thread:$0]  %s2290, 128, %s16, [#allocation4]
    $region101: #{tpu_custom_call.1} parent=1 // pred_fallthru
      _
    // Predicated region
    $region102: #{tpu_custom_call.1} parent=1 // pred_check
      _
    $region103: #{tpu_custom_call.1} parent=1 // pred_check_branch
      %2294 = sbr.rel (0) target = $region105
    $region104: #{tpu_custom_call.1} parent=1 // pred_region
      %2295 = dma.done [#allocation4], 128
    $region105: #{tpu_custom_call.1} parent=1 // pred_fallthru
      _
    %2296 = vsyncpa [#allocation3], 1
    %2297 = vsyncpa [#allocation6], 1
    %2298 = vsyncpa [#allocation9], 1
    %2299 = vsyncpa [#allocation12], 1
    %2300 = vsyncpa [#allocation15], 1
    %2301 = vsyncpa [#allocation4], 1

</llo_original>
